<compile_context>
chip_gen: v7x
topology: tpu7x:2x2x1
jax: 0.10.0
libtpu: 0.0.40
codegen_flags: <defaults>
</compile_context>

<pallas_src>
import functools

import jax
import jax.numpy as jnp
from jax.experimental import pallas as pl
from jax.experimental.pallas import tpu as pltpu

EPS = 1e-5


def _round_up(x, m):
    return (x + m - 1) // m * m


def _vmem_limit_bytes():
    """~75% of physical VMEM, capped at 112 MiB (v5e/v6e), floored at 32 MiB."""
    cap = 64 << 20
    try:
        cap = int(getattr(pltpu.get_tpu_info(), "vmem_capacity_bytes", cap))
    except Exception:
        pass
    return max(32 << 20, min((cap * 3) // 4, 112 << 20))


# ----------------------------------------------------------------------------
# conv1 pass 1: im2col matmul tile -> bf16 conv output + BN batch stats.
#   stats rows: 0 = sum(y), 1 = sum(y*y).  Zero-padded M rows give y == 0
#   (no bias) so they add nothing to the sums.
# ----------------------------------------------------------------------------
def _matmul_stats_kernel(p_ref, w_ref, y_ref, stats_ref):
    @pl.when(pl.program_id(0) == 0)
    def _init():
        stats_ref[...] = jnp.zeros_like(stats_ref)

    y = jnp.dot(p_ref[...], w_ref[...], preferred_element_type=jnp.float32)
    y_ref[...] = y.astype(y_ref.dtype)

    cpad = y.shape[1]
    upd = jnp.concatenate(
        [jnp.sum(y, axis=0, keepdims=True),
         jnp.sum(y * y, axis=0, keepdims=True),
         jnp.zeros((6, cpad), jnp.float32)], axis=0)
    stats_ref[...] += upd                       # single unmasked (8, Cpad) RMW


def _conv1_pass1(patches, w_mat, *, tile_m, vmem_limit):
    Mp, K = patches.shape
    Cpad = w_mat.shape[1]
    return pl.pallas_call(
        _matmul_stats_kernel,
        grid=(Mp // tile_m,),
        in_specs=[pl.BlockSpec((tile_m, K), lambda i: (i, 0)),
                  pl.BlockSpec((K, Cpad), lambda i: (0, 0))],
        out_specs=(pl.BlockSpec((tile_m, Cpad), lambda i: (i, 0)),
                   pl.BlockSpec((8, Cpad), lambda i: (0, 0))),
        out_shape=(jax.ShapeDtypeStruct((Mp, Cpad), jnp.bfloat16),   # bf16 y
                   jax.ShapeDtypeStruct((8, Cpad), jnp.float32)),
        compiler_params=pltpu.CompilerParams(
            dimension_semantics=("arbitrary",),      # resident stats block
            vmem_limit_bytes=vmem_limit),
    )(patches, w_mat)


# ----------------------------------------------------------------------------
# conv1 pass 2: y * scale + shift, ReLU.  scale/shift precomputed in JAX.
#   ss rows: 0 = scale, 1 = shift.
# ----------------------------------------------------------------------------
def _scale_relu_kernel(y_ref, ss_ref, o_ref):
    y = y_ref[...].astype(jnp.float32)
    o = jnp.maximum(y * ss_ref[0:1, :] + ss_ref[1:2, :], 0.0)
    o_ref[...] = o.astype(o_ref.dtype)


def _conv1_pass2(y, ss, *, tile_m, vmem_limit):
    Mp, Cpad = y.shape
    return pl.pallas_call(
        _scale_relu_kernel,
        grid=(Mp // tile_m,),
        in_specs=[pl.BlockSpec((tile_m, Cpad), lambda i: (i, 0)),
                  pl.BlockSpec((8, Cpad), lambda i: (0, 0))],
        out_specs=pl.BlockSpec((tile_m, Cpad), lambda i: (i, 0)),
        out_shape=jax.ShapeDtypeStruct((Mp, Cpad), jnp.bfloat16),
        compiler_params=pltpu.CompilerParams(
            dimension_semantics=("parallel",),
            vmem_limit_bytes=vmem_limit),
    )(y, ss)


# ----------------------------------------------------------------------------
# conv2 pass 1 (implicit GEMM, stride 1): one image per grid step.
#   The spatially padded (Hp, Wp, Cpad) activation lives in VMEM; 9 shifted
#   windows are matmul'd against the per-tap (Cpad, Cpad) weights and
#   accumulated in f32.  The 1x1 shortcut matmul is also done here so its BN
#   batch stats can be accumulated.
#   stats rows: 0 = sum(y), 1 = sum(y*y), 2 = sum(e), 3 = sum(e*e).
# ----------------------------------------------------------------------------
def _make_conv2_stats_kernel(H1, W1, cin_pad, cpad):
    def kernel(xp_ref, w_ref, xs_ref, we_ref, y_ref, stats_ref):
        @pl.when(pl.program_id(0) == 0)
        def _init():
            stats_ref[...] = jnp.zeros_like(stats_ref)

        xp = xp_ref[0]                                   # (H1+2, W1+2, cin_pad) bf16
        acc = jnp.zeros((H1 * W1, cpad), jnp.float32)
        for ky in range(3):
            for kx in range(3):
                win = xp[ky:ky + H1, kx:kx + W1, :]      # static window slice
                a = win.reshape(H1 * W1, cin_pad)
                acc = acc + jnp.dot(a, w_ref[ky * 3 + kx],
                                    preferred_element_type=jnp.float32)
        y_ref[0] = acc.astype(y_ref.dtype)

        e = jnp.dot(xs_ref[0], we_ref[...], preferred_element_type=jnp.float32)

        upd = jnp.concatenate(
            [jnp.sum(acc, axis=0, keepdims=True),
             jnp.sum(acc * acc, axis=0, keepdims=True),
             jnp.sum(e, axis=0, keepdims=True),
             jnp.sum(e * e, axis=0, keepdims=True),
             jnp.zeros((4, cpad), jnp.float32)], axis=0)
        stats_ref[...] += upd                            # single unmasked RMW

    return kernel


def _conv2_pass1(xp2, w2, xs, we, *, H1, W1, vmem_limit):
    N, Hp, Wp, CinP = xp2.shape
    Cpad = w2.shape[2]
    Kin = xs.shape[2]
    M = H1 * W1
    kernel = _make_conv2_stats_kernel(H1, W1, CinP, Cpad)
    return pl.pallas_call(
        kernel,
        grid=(N,),
        in_specs=[pl.BlockSpec((1, Hp, Wp, CinP), lambda n: (n, 0, 0, 0)),
                  pl.BlockSpec((9, CinP, Cpad), lambda n: (0, 0, 0)),
                  pl.BlockSpec((1, M, Kin), lambda n: (n, 0, 0)),
                  pl.BlockSpec((Kin, Cpad), lambda n: (0, 0))],
        out_specs=(pl.BlockSpec((1, M, Cpad), lambda n: (n, 0, 0)),
                   pl.BlockSpec((8, Cpad), lambda n: (0, 0))),
        out_shape=(jax.ShapeDtypeStruct((N, M, Cpad), jnp.bfloat16),   # bf16 y
                   jax.ShapeDtypeStruct((8, Cpad), jnp.float32)),
        compiler_params=pltpu.CompilerParams(
            dimension_semantics=("arbitrary",),
            vmem_limit_bytes=vmem_limit),
    )(xp2, w2, xs, we)


# ----------------------------------------------------------------------------
# conv2 pass 2: y*scale+shift  +  (xs @ we)*scale_e+shift_e,  ReLU.
#   ss rows: 0 = scale2, 1 = shift2, 2 = scale_e, 3 = shift_e.
#   The tiny 1x1 shortcut matmul is recomputed here (MXU slack) instead of
#   round-tripping its (M, Cpad) result through HBM.
# ----------------------------------------------------------------------------
def _conv2_finalize_kernel(y_ref, ss_ref, xs_ref, we_ref, o_ref):
    y = y_ref[0].astype(jnp.float32)
    e = jnp.dot(xs_ref[0], we_ref[...], preferred_element_type=jnp.float32)
    out = (y * ss_ref[0:1, :] + ss_ref[1:2, :]
           + e * ss_ref[2:3, :] + ss_ref[3:4, :])
    o_ref[0] = jnp.maximum(out, 0.0).astype(o_ref.dtype)


def _conv2_pass2(y2, ss2, xs, we, *, vmem_limit, out_dtype):
    N, M, Cpad = y2.shape
    Kin = xs.shape[2]
    return pl.pallas_call(
        _conv2_finalize_kernel,
        grid=(N,),
        in_specs=[pl.BlockSpec((1, M, Cpad), lambda n: (n, 0, 0)),
                  pl.BlockSpec((8, Cpad), lambda n: (0, 0)),
                  pl.BlockSpec((1, M, Kin), lambda n: (n, 0, 0)),
                  pl.BlockSpec((Kin, Cpad), lambda n: (0, 0))],
        out_specs=pl.BlockSpec((1, M, Cpad), lambda n: (n, 0, 0)),
        out_shape=jax.ShapeDtypeStruct((N, M, Cpad), out_dtype),
        compiler_params=pltpu.CompilerParams(
            dimension_semantics=("parallel",),
            vmem_limit_bytes=vmem_limit),
    )(y2, ss2, xs, we)


# ----------------------------------------------------------------------------
# Glue: im2col / weight reshaping (plain JAX, bf16 outputs for the MXU)
# ----------------------------------------------------------------------------
def _im2col_3x3(x_nhwc, stride):
    """3x3, padding=1 im2col.  Returns (N*Ho*Wo, 9*C) bf16."""
    N, H, W, C = x_nhwc.shape
    xp = jnp.pad(x_nhwc, ((0, 0), (1, 1), (1, 1), (0, 0)))
    Ho = (H - 1) // stride + 1
    Wo = (W - 1) // stride + 1
    cols = []
    for ky in range(3):
        for kx in range(3):
            sl = xp[:, ky:ky + stride * (Ho - 1) + 1:stride,
                       kx:kx + stride * (Wo - 1) + 1:stride, :]
            cols.append(sl)
    patches = jnp.concatenate(cols, axis=-1)             # [..., (ky,kx,cin)]
    return patches.reshape(N * Ho * Wo, 9 * C).astype(jnp.bfloat16)


def _w3x3_to_mat(w_oihw, cpad):
    """(Cout, Cin, 3, 3) -> (9*Cin, Cpad) bf16, Cout zero-padded to Cpad."""
    cout = w_oihw.shape[0]
    m = jnp.transpose(w_oihw, (2, 3, 1, 0)).reshape(-1, cout)
    m = jnp.pad(m, ((0, 0), (0, cpad - cout)))
    return m.astype(jnp.bfloat16)


def _w3x3_to_stack(w_oihw, cin_pad, cout_pad):
    """(Cout, Cin, 3, 3) -> (9, cin_pad, cout_pad) bf16 for implicit GEMM."""
    cout, cin = w_oihw.shape[0], w_oihw.shape[1]
    m = jnp.transpose(w_oihw, (2, 3, 1, 0)).reshape(9, cin, cout)
    m = jnp.pad(m, ((0, 0), (0, cin_pad - cin), (0, cout_pad - cout)))
    return m.astype(jnp.bfloat16)


def _w1x1_to_mat(w_oihw, cpad, kin):
    """(Cout, Cin, 1, 1) -> (kin, Cpad) bf16 (rows/cols zero-padded)."""
    cout, cin = w_oihw.shape[0], w_oihw.shape[1]
    m = w_oihw.reshape(cout, cin).T
    m = jnp.pad(m, ((0, kin - cin), (0, cpad - cout)))
    return m.astype(jnp.bfloat16)


def _pad_rows(a, rows):
    pad = rows - a.shape[0]
    return a if pad == 0 else jnp.pad(a, ((0, pad), (0, 0)))


def _bn_scale_shift(row_sum, row_sq, gamma, beta, m):
    """Training-mode BN folded into per-channel scale/shift (f32, tiny)."""
    # NOTE: variance via E[x^2]-E[x]^2 (clamped at 0); fine at these scales.
    inv_m = 1.0 / float(m)
    mean = row_sum * inv_m
    var = jnp.maximum(row_sq * inv_m - mean * mean, 0.0)
    scale = gamma * jax.lax.rsqrt(var + EPS)
    shift = beta - mean * scale
    return scale, shift


# ----------------------------------------------------------------------------
# RestNetDownBlock forward
# ----------------------------------------------------------------------------
def restnet_down_block(x_nchw, params, stride, *, tile_m=None):
    s0, s1 = stride
    # PyTorch's residual add requires conv2's output grid == the 1x1 shortcut
    # output grid, i.e. stride[1] == 1 (as in ResNet-18 down blocks).
    assert s1 == 1, "RestNetDownBlock requires stride[1] == 1"

    vmem_limit = _vmem_limit_bytes()
    if tile_m is None:
        tile_m = 1024 if vmem_limit >= (96 << 20) else 512   # v5e/v6e vs v7x

    x = jnp.transpose(x_nchw, (0, 2, 3, 1)).astype(jnp.float32)   # NHWC
    N, H, W, Cin = x.shape
    Cout = params["w1"].shape[0]
    Cpad = _round_up(Cout, 128)     # lane-dense channels
    Kin = _round_up(Cin, 128)       # lane-dense shortcut contraction dim
    H1 = (H - 1) // s0 + 1
    W1 = (W - 1) // s0 + 1
    M1 = N * H1 * W1
    M2 = M1                         # s1 == 1

    def padc(v):                    # zero-fill padded channels (scale -> 0)
        v = v.astype(jnp.float32)
        return v if Cpad == Cout else jnp.pad(v, (0, Cpad - Cout))

    w1 = _w3x3_to_mat(params["w1"], Cpad)           # (9*Cin,  Cpad)     bf16
    w2 = _w3x3_to_stack(params["w2"], Cpad, Cpad)   # (9, Cpad, Cpad)    bf16
    we = _w1x1_to_mat(params["we"], Cpad, Kin)      # (Kin, Cpad)        bf16
    # Conv biases b1/b2/be intentionally unused: a bias added before
    # training-mode BatchNorm is cancelled by the mean subtraction.

    # ----- conv1 (im2col matmul) -> bn1 stats ------------------------------
    p1 = _im2col_3x3(x, s0)
    tm1 = min(tile_m, _round_up(M1, 16))
    M1p = _round_up(M1, tm1)
    p1 = _pad_rows(p1, M1p)
    y1, st1 = _conv1_pass1(p1, w1, tile_m=tm1, vmem_limit=vmem_limit)

    # ----- bn1 scale/shift (plain JAX) + relu ------------------------------
    sc1, sh1 = _bn_scale_shift(st1[0], st1[1], padc(params["g1"]),
                               padc(params["bb1"]), M1)
    ss1 = jnp.concatenate([sc1[None], sh1[None],
                           jnp.zeros((6, Cpad), jnp.float32)], axis=0)
    o1 = _conv1_pass2(y1, ss1, tile_m=tm1, vmem_limit=vmem_limit)

    # ----- conv2 inputs: spatially padded o1 (channels kept at Cpad) -------
    o1 = o1[:M1].reshape(N, H1, W1, Cpad)                      # bf16
    xp2 = jnp.pad(o1, ((0, 0), (1, 1), (1, 1), (0, 0)))        # conv padding

    # ----- 1x1 shortcut input at conv2's output grid -----------------------
    xs = x[:, ::s0, ::s0, :].reshape(N, H1 * W1, Cin)
    if Kin != Cin:
        xs = jnp.pad(xs, ((0, 0), (0, 0), (0, Kin - Cin)))
    xs = xs.astype(jnp.bfloat16)

    # ----- conv2 implicit GEMM + bn2 / bn_e stats --------------------------
    y2, st2 = _conv2_pass1(xp2, w2, xs, we, H1=H1, W1=W1, vmem_limit=vmem_limit)

    sc2, sh2 = _bn_scale_shift(st2[0], st2[1], padc(params["g2"]),
                               padc(params["bb2"]), M2)
    sce, she = _bn_scale_shift(st2[2], st2[3], padc(params["ge"]),
                               padc(params["bbe"]), M2)
    ss2 = jnp.concatenate([sc2[None], sh2[None], sce[None], she[None],
                           jnp.zeros((4, Cpad), jnp.float32)], axis=0)

    # ----- bn2 + fused shortcut bn_e + residual + relu ----------------------
    out = _conv2_pass2(y2, ss2, xs, we, vmem_limit=vmem_limit,
                       out_dtype=jnp.float32)
    out = out.reshape(N, H1, W1, Cpad)[:, :, :, :Cout]
    return jnp.transpose(out, (0, 3, 1, 2))                    # back to NCHW


# ----------------------------------------------------------------------------
# Pure-JAX f32 reference (lax.conv, with conv biases) for correctness checking
# ----------------------------------------------------------------------------
def _conv_ref(x_nhwc, w_oihw, b, stride, pad):
    y = jax.lax.conv_general_dilated(
        x_nhwc, jnp.transpose(w_oihw, (2, 3, 1, 0)),
        window_strides=(stride, stride),
        padding=[(pad, pad), (pad, pad)],
        dimension_numbers=("NHWC", "HWIO", "NHWC"))
    return y + b


def _bn_ref(y, gamma, beta, eps=EPS):
    mean = jnp.mean(y, axis=(0, 1, 2), keepdims=True)
    var = jnp.mean((y - mean) ** 2, axis=(0, 1, 2), keepdims=True)
    return (y - mean) * jax.lax.rsqrt(var + eps) * gamma + beta


def restnet_down_block_ref(x_nchw, p, stride):
    x = jnp.transpose(x_nchw, (0, 2, 3, 1)).astype(jnp.float32)
    extra = _bn_ref(_conv_ref(x, p["we"], p["be"], stride[0], 0), p["ge"], p["bbe"])
    o = jax.nn.relu(_bn_ref(_conv_ref(x, p["w1"], p["b1"], stride[0], 1),
                            p["g1"], p["bb1"]))
    o = _bn_ref(_conv_ref(o, p["w2"], p["b2"], stride[1], 1), p["g2"], p["bb2"])
    return jnp.transpose(jax.nn.relu(extra + o), (0, 3, 1, 2))


# ----------------------------------------------------------------------------
if __name__ == "__main__":
    in_channels, out_channels = 4, 8
    stride = (2, 1)                      # typical ResNet down-block strides
    N, H, W = 2, 16, 16

    key = jax.random.PRNGKey(0)
    ks = jax.random.split(key, 10)
    params = {
        "w1": 0.1 * jax.random.normal(ks[0], (out_channels, in_channels, 3, 3), jnp.float32),
        "b1": 0.1 * jax.random.normal(ks[1], (out_channels,), jnp.float32),
        "g1": 1.0 + 0.1 * jax.random.normal(ks[2], (out_channels,), jnp.float32),
        "bb1": 0.1 * jax.random.normal(ks[3], (out_channels,), jnp.float32),
        "w2": 0.1 * jax.random.normal(ks[4], (out_channels, out_channels, 3, 3), jnp.float32),
        "b2": 0.1 * jax.random.normal(ks[5], (out_channels,), jnp.float32),
        "g2": 1.0 + 0.1 * jax.random.normal(ks[6], (out_channels,), jnp.float32),
        "bb2": 0.1 * jax.random.normal(ks[7], (out_channels,), jnp.float32),
        "we": 0.1 * jax.random.normal(ks[8], (out_channels, in_channels, 1, 1), jnp.float32),
        "be": 0.1 * jax.random.normal(ks[9], (out_channels,), jnp.float32),
        "ge": jnp.ones((out_channels,), jnp.float32),
        "bbe": jnp.zeros((out_channels,), jnp.float32),
    }

    x = jax.random.normal(jax.random.PRNGKey(42), (N, in_channels, H, W), jnp.float32)

    fwd = jax.jit(functools.partial(restnet_down_block, stride=stride))
    out = jax.block_until_ready(fwd(x, params))

    ref = jax.block_until_ready(restnet_down_block_ref(x, params, stride))
    assert out.shape == (N, out_channels, H // stride[0], W // stride[0]), out.shape
    # Kernel uses bf16 MXU operands and bf16 inter-pass intermediates (f32
    # accumulation / BN math); compare to the pure-f32 reference with a
    # bf16-appropriate tolerance.
    max_err = float(jnp.max(jnp.abs(out - ref)))
    assert jnp.allclose(out, ref, rtol=5e-2, atol=5e-2), max_err

    print("KERNEL_OK")
</pallas_src>

<mosaic_0001>
module attributes {stable_mosaic.version = 11 : i64} {
  func.func @_matmul_stats_kernel(%arg0: i32, %arg1: memref<128x36xbf16, #tpu.memory_space<vmem>>, %arg2: memref<36x128xbf16, #tpu.memory_space<vmem>>, %arg3: memref<128x128xbf16, #tpu.memory_space<vmem>>, %arg4: memref<8x128xf32, #tpu.memory_space<vmem>>) attributes {dimension_semantics = [#tpu.dimension_semantics<arbitrary>], iteration_bounds = array<i64: 1>, scalar_prefetch = 0 : i64, scratch_operands = 0 : i64, tpu.core_type = #tpu.core_type<tc>, window_params = [{transform_indices = @transform_0, window_bounds = array<i64: 128, 36>}, {pipeline_mode = #tpu.pipeline_mode<synchronous>, transform_indices = @transform_1, window_bounds = array<i64: 36, 128>}, {transform_indices = @transform_2, window_bounds = array<i64: 128, 128>}, {pipeline_mode = #tpu.pipeline_mode<synchronous>, transform_indices = @transform_3, window_bounds = array<i64: 8, 128>}]} {
    %c0_i32 = arith.constant 0 : i32
    %0 = arith.cmpi eq, %arg0, %c0_i32 : i32
    %1 = arith.extui %0 : i1 to i32
    %c0_i32_0 = arith.constant 0 : i32
    %2 = arith.cmpi ne, %1, %c0_i32_0 : i32
    scf.if %2 {
      %cst_13 = arith.constant 0.000000e+00 : f32
      %18 = vector.broadcast %cst_13 : f32 to vector<8x128xf32>
      %c0_14 = arith.constant 0 : index
      %c0_15 = arith.constant 0 : index
      %19 = vector.load %arg4[%c0_14, %c0_15] : memref<8x128xf32, #tpu.memory_space<vmem>>, vector<8x128xf32>
      tpu.vector_store %arg4[%c0_14, %c0_15], %18 {strides = array<i32>} : memref<8x128xf32, #tpu.memory_space<vmem>>, vector<8x128xf32>,
    } else {
    }
    %c0 = arith.constant 0 : index
    %c0_1 = arith.constant 0 : index
    %3 = vector.load %arg1[%c0, %c0_1] : memref<128x36xbf16, #tpu.memory_space<vmem>>, vector<128x36xbf16>
    %c0_2 = arith.constant 0 : index
    %c0_3 = arith.constant 0 : index
    %4 = vector.load %arg2[%c0_2, %c0_3] : memref<36x128xbf16, #tpu.memory_space<vmem>>, vector<36x128xbf16>
    %cst = arith.constant dense<0.000000e+00> : vector<128x128xf32>
    %5 = tpu.matmul %3, %4, %cst {dimension_numbers = #tpu.dot_dimension_numbers<[1], [0], [0], [1], [0, 0, 1, 1], [], []>} : vector<128x36xbf16>, vector<36x128xbf16>, vector<128x128xf32> -> vector<128x128xf32>
    %6 = arith.truncf %5 : vector<128x128xf32> to vector<128x128xbf16>
    %c0_4 = arith.constant 0 : index
    %c0_5 = arith.constant 0 : index
    %7 = vector.load %arg3[%c0_4, %c0_5] : memref<128x128xbf16, #tpu.memory_space<vmem>>, vector<128x128xbf16>
    tpu.vector_store %arg3[%c0_4, %c0_5], %6 {strides = array<i32>} : memref<128x128xbf16, #tpu.memory_space<vmem>>, vector<128x128xbf16>,
    %cst_6 = arith.constant dense<0.000000e+00> : vector<128xf32>
    %8 = vector.multi_reduction <add>, %5, %cst_6 [0] : vector<128x128xf32> to vector<128xf32>
    %9 = vector.shape_cast %8 : vector<128xf32> to vector<1x128xf32>
    %10 = arith.mulf %5, %5 : vector<128x128xf32>
    %cst_7 = arith.constant dense<0.000000e+00> : vector<128xf32>
    %11 = vector.multi_reduction <add>, %10, %cst_7 [0] : vector<128x128xf32> to vector<128xf32>
    %12 = vector.shape_cast %11 : vector<128xf32> to vector<1x128xf32>
    %cst_8 = arith.constant 0.000000e+00 : f32
    %13 = vector.broadcast %cst_8 : f32 to vector<6x128xf32>
    %14 = tpu.concatenate %9, %12, %13 in 0 : vector<1x128xf32>, vector<1x128xf32>, vector<6x128xf32> -> vector<8x128xf32>
    %c0_9 = arith.constant 0 : index
    %c0_10 = arith.constant 0 : index
    %15 = vector.load %arg4[%c0_9, %c0_10] : memref<8x128xf32, #tpu.memory_space<vmem>>, vector<8x128xf32>
    %16 = arith.addf %15, %14 : vector<8x128xf32>
    %c0_11 = arith.constant 0 : index
    %c0_12 = arith.constant 0 : index
    %17 = vector.load %arg4[%c0_11, %c0_12] : memref<8x128xf32, #tpu.memory_space<vmem>>, vector<8x128xf32>
    tpu.vector_store %arg4[%c0_11, %c0_12], %16 {strides = array<i32>} : memref<8x128xf32, #tpu.memory_space<vmem>>, vector<8x128xf32>,
    return
  }
  func.func @transform_0(%arg0: i32) -> (i32, i32) {
    %c0_i32 = arith.constant 0 : i32
    %c0_i32_0 = arith.constant 0 : i32
    return %arg0, %c0_i32 : i32, i32
  }
  func.func @transform_1(%arg0: i32) -> (i32, i32) {
    %c0_i32 = arith.constant 0 : i32
    %c0_i32_0 = arith.constant 0 : i32
    %c0_i32_1 = arith.constant 0 : i32
    return %c0_i32, %c0_i32_0 : i32, i32
  }
  func.func @transform_2(%arg0: i32) -> (i32, i32) {
    %c0_i32 = arith.constant 0 : i32
    %c0_i32_0 = arith.constant 0 : i32
    return %arg0, %c0_i32 : i32, i32
  }
  func.func @transform_3(%arg0: i32) -> (i32, i32) {
    %c0_i32 = arith.constant 0 : i32
    %c0_i32_0 = arith.constant 0 : i32
    %c0_i32_1 = arith.constant 0 : i32
    return %c0_i32, %c0_i32_0 : i32, i32
  }
}

module attributes {stable_mosaic.version = 11 : i64} {
  func.func @_scale_relu_kernel(%arg0: i32, %arg1: memref<128x128xbf16, #tpu.memory_space<vmem>>, %arg2: memref<8x128xf32, #tpu.memory_space<vmem>>, %arg3: memref<128x128xbf16, #tpu.memory_space<vmem>>) attributes {dimension_semantics = [#tpu.dimension_semantics<parallel>], iteration_bounds = array<i64: 1>, scalar_prefetch = 0 : i64, scratch_operands = 0 : i64, tpu.core_type = #tpu.core_type<tc>, window_params = [{transform_indices = @transform_0, window_bounds = array<i64: 128, 128>}, {pipeline_mode = #tpu.pipeline_mode<synchronous>, transform_indices = @transform_1, window_bounds = array<i64: 8, 128>}, {transform_indices = @transform_2, window_bounds = array<i64: 128, 128>}]} {
    %c0 = arith.constant 0 : index
    %c0_0 = arith.constant 0 : index
    %0 = vector.load %arg1[%c0, %c0_0] : memref<128x128xbf16, #tpu.memory_space<vmem>>, vector<128x128xbf16>
    %1 = arith.extf %0 : vector<128x128xbf16> to vector<128x128xf32>
    %c0_1 = arith.constant 0 : index
    %c0_2 = arith.constant 0 : index
    %2 = vector.load %arg2[%c0_1, %c0_2] : memref<8x128xf32, #tpu.memory_space<vmem>>, vector<1x128xf32>
    %3 = vector.broadcast %2 : vector<1x128xf32> to vector<128x128xf32>
    %4 = arith.mulf %1, %3 : vector<128x128xf32>
    %c1 = arith.constant 1 : index
    %c0_3 = arith.constant 0 : index
    %5 = vector.load %arg2[%c1, %c0_3] : memref<8x128xf32, #tpu.memory_space<vmem>>, vector<1x128xf32>
    %6 = vector.broadcast %5 : vector<1x128xf32> to vector<128x128xf32>
    %7 = arith.addf %4, %6 : vector<128x128xf32>
    %cst = arith.constant 0.000000e+00 : f32
    %8 = vector.broadcast %cst : f32 to vector<128x128xf32>
    %9 = arith.maximumf %7, %8 : vector<128x128xf32>
    %10 = arith.truncf %9 : vector<128x128xf32> to vector<128x128xbf16>
    %c0_4 = arith.constant 0 : index
    %c0_5 = arith.constant 0 : index
    %11 = vector.load %arg3[%c0_4, %c0_5] : memref<128x128xbf16, #tpu.memory_space<vmem>>, vector<128x128xbf16>
    tpu.vector_store %arg3[%c0_4, %c0_5], %10 {strides = array<i32>} : memref<128x128xbf16, #tpu.memory_space<vmem>>, vector<128x128xbf16>,
    return
  }
  func.func @transform_0(%arg0: i32) -> (i32, i32) {
    %c0_i32 = arith.constant 0 : i32
    %c0_i32_0 = arith.constant 0 : i32
    return %arg0, %c0_i32 : i32, i32
  }
  func.func @transform_1(%arg0: i32) -> (i32, i32) {
    %c0_i32 = arith.constant 0 : i32
    %c0_i32_0 = arith.constant 0 : i32
    %c0_i32_1 = arith.constant 0 : i32
    return %c0_i32, %c0_i32_0 : i32, i32
  }
  func.func @transform_2(%arg0: i32) -> (i32, i32) {
    %c0_i32 = arith.constant 0 : i32
    %c0_i32_0 = arith.constant 0 : i32
    return %arg0, %c0_i32 : i32, i32
  }
}

module attributes {stable_mosaic.version = 11 : i64} {
  func.func @kernel(%arg0: i32, %arg1: memref<1x10x10x128xbf16, #tpu.memory_space<vmem>>, %arg2: memref<9x128x128xbf16, #tpu.memory_space<vmem>>, %arg3: memref<1x64x128xbf16, #tpu.memory_space<vmem>>, %arg4: memref<128x128xbf16, #tpu.memory_space<vmem>>, %arg5: memref<1x64x128xbf16, #tpu.memory_space<vmem>>, %arg6: memref<8x128xf32, #tpu.memory_space<vmem>>) attributes {dimension_semantics = [#tpu.dimension_semantics<arbitrary>], iteration_bounds = array<i64: 2>, scalar_prefetch = 0 : i64, scratch_operands = 0 : i64, tpu.core_type = #tpu.core_type<tc>, window_params = [{transform_indices = @transform_0, window_bounds = array<i64: 1, 10, 10, 128>}, {pipeline_mode = #tpu.pipeline_mode<synchronous>, transform_indices = @transform_1, window_bounds = array<i64: 9, 128, 128>}, {transform_indices = @transform_2, window_bounds = array<i64: 1, 64, 128>}, {pipeline_mode = #tpu.pipeline_mode<synchronous>, transform_indices = @transform_3, window_bounds = array<i64: 128, 128>}, {transform_indices = @transform_4, window_bounds = array<i64: 1, 64, 128>}, {pipeline_mode = #tpu.pipeline_mode<synchronous>, transform_indices = @transform_5, window_bounds = array<i64: 8, 128>}]} {
    %c0_i32 = arith.constant 0 : i32
    %0 = arith.cmpi eq, %arg0, %c0_i32 : i32
    %1 = arith.extui %0 : i1 to i32
    %c0_i32_0 = arith.constant 0 : i32
    %2 = arith.cmpi ne, %1, %c0_i32_0 : i32
    scf.if %2 {
      %cst_50 = arith.constant 0.000000e+00 : f32
      %83 = vector.broadcast %cst_50 : f32 to vector<8x128xf32>
      %c0_51 = arith.constant 0 : index
      %c0_52 = arith.constant 0 : index
      %84 = vector.load %arg6[%c0_51, %c0_52] : memref<8x128xf32, #tpu.memory_space<vmem>>, vector<8x128xf32>
      tpu.vector_store %arg6[%c0_51, %c0_52], %83 {strides = array<i32>} : memref<8x128xf32, #tpu.memory_space<vmem>>, vector<8x128xf32>,
    } else {
    }
    %c0 = arith.constant 0 : index
    %c0_1 = arith.constant 0 : index
    %c0_2 = arith.constant 0 : index
    %c0_3 = arith.constant 0 : index
    %3 = vector.load %arg1[%c0, %c0_1, %c0_2, %c0_3] : memref<1x10x10x128xbf16, #tpu.memory_space<vmem>>, vector<1x10x10x128xbf16>
    %4 = vector.shape_cast %3 : vector<1x10x10x128xbf16> to vector<10x10x128xbf16>
    %cst = arith.constant 0.000000e+00 : f32
    %5 = vector.broadcast %cst : f32 to vector<64x128xf32>
    %6 = vector.extract_strided_slice %4 {offsets = [0, 0, 0], sizes = [8, 8, 128], strides = [1, 1, 1]} : vector<10x10x128xbf16> to vector<8x8x128xbf16>
    %7 = vector.shape_cast %6 : vector<8x8x128xbf16> to vector<64x128xbf16>
    %c0_4 = arith.constant 0 : index
    %c0_5 = arith.constant 0 : index
    %c0_6 = arith.constant 0 : index
    %8 = vector.load %arg2[%c0_4, %c0_5, %c0_6] : memref<9x128x128xbf16, #tpu.memory_space<vmem>>, vector<1x128x128xbf16>
    %9 = vector.shape_cast %8 : vector<1x128x128xbf16> to vector<128x128xbf16>
    %cst_7 = arith.constant dense<0.000000e+00> : vector<64x128xf32>
    %10 = tpu.matmul %7, %9, %cst_7 {dimension_numbers = #tpu.dot_dimension_numbers<[1], [0], [0], [1], [0, 0, 1, 1], [], []>} : vector<64x128xbf16>, vector<128x128xbf16>, vector<64x128xf32> -> vector<64x128xf32>
    %11 = arith.addf %5, %10 : vector<64x128xf32>
    %12 = vector.extract_strided_slice %4 {offsets = [0, 1, 0], sizes = [8, 8, 128], strides = [1, 1, 1]} : vector<10x10x128xbf16> to vector<8x8x128xbf16>
    %13 = vector.shape_cast %12 : vector<8x8x128xbf16> to vector<64x128xbf16>
    %c1 = arith.constant 1 : index
    %c0_8 = arith.constant 0 : index
    %c0_9 = arith.constant 0 : index
    %14 = vector.load %arg2[%c1, %c0_8, %c0_9] : memref<9x128x128xbf16, #tpu.memory_space<vmem>>, vector<1x128x128xbf16>
    %15 = vector.shape_cast %14 : vector<1x128x128xbf16> to vector<128x128xbf16>
    %cst_10 = arith.constant dense<0.000000e+00> : vector<64x128xf32>
    %16 = tpu.matmul %13, %15, %cst_10 {dimension_numbers = #tpu.dot_dimension_numbers<[1], [0], [0], [1], [0, 0, 1, 1], [], []>} : vector<64x128xbf16>, vector<128x128xbf16>, vector<64x128xf32> -> vector<64x128xf32>
    %17 = arith.addf %11, %16 : vector<64x128xf32>
    %18 = vector.extract_strided_slice %4 {offsets = [0, 2, 0], sizes = [8, 8, 128], strides = [1, 1, 1]} : vector<10x10x128xbf16> to vector<8x8x128xbf16>
    %19 = vector.shape_cast %18 : vector<8x8x128xbf16> to vector<64x128xbf16>
    %c2 = arith.constant 2 : index
    %c0_11 = arith.constant 0 : index
    %c0_12 = arith.constant 0 : index
    %20 = vector.load %arg2[%c2, %c0_11, %c0_12] : memref<9x128x128xbf16, #tpu.memory_space<vmem>>, vector<1x128x128xbf16>
    %21 = vector.shape_cast %20 : vector<1x128x128xbf16> to vector<128x128xbf16>
    %cst_13 = arith.constant dense<0.000000e+00> : vector<64x128xf32>
    %22 = tpu.matmul %19, %21, %cst_13 {dimension_numbers = #tpu.dot_dimension_numbers<[1], [0], [0], [1], [0, 0, 1, 1], [], []>} : vector<64x128xbf16>, vector<128x128xbf16>, vector<64x128xf32> -> vector<64x128xf32>
    %23 = arith.addf %17, %22 : vector<64x128xf32>
    %24 = vector.extract_strided_slice %4 {offsets = [1, 0, 0], sizes = [8, 8, 128], strides = [1, 1, 1]} : vector<10x10x128xbf16> to vector<8x8x128xbf16>
    %25 = vector.shape_cast %24 : vector<8x8x128xbf16> to vector<64x128xbf16>
    %c3 = arith.constant 3 : index
    %c0_14 = arith.constant 0 : index
    %c0_15 = arith.constant 0 : index
    %26 = vector.load %arg2[%c3, %c0_14, %c0_15] : memref<9x128x128xbf16, #tpu.memory_space<vmem>>, vector<1x128x128xbf16>
    %27 = vector.shape_cast %26 : vector<1x128x128xbf16> to vector<128x128xbf16>
    %cst_16 = arith.constant dense<0.000000e+00> : vector<64x128xf32>
    %28 = tpu.matmul %25, %27, %cst_16 {dimension_numbers = #tpu.dot_dimension_numbers<[1], [0], [0], [1], [0, 0, 1, 1], [], []>} : vector<64x128xbf16>, vector<128x128xbf16>, vector<64x128xf32> -> vector<64x128xf32>
    %29 = arith.addf %23, %28 : vector<64x128xf32>
    %30 = vector.extract_strided_slice %4 {offsets = [1, 1, 0], sizes = [8, 8, 128], strides = [1, 1, 1]} : vector<10x10x128xbf16> to vector<8x8x128xbf16>
    %31 = vector.shape_cast %30 : vector<8x8x128xbf16> to vector<64x128xbf16>
    %c4 = arith.constant 4 : index
    %c0_17 = arith.constant 0 : index
    %c0_18 = arith.constant 0 : index
    %32 = vector.load %arg2[%c4, %c0_17, %c0_18] : memref<9x128x128xbf16, #tpu.memory_space<vmem>>, vector<1x128x128xbf16>
    %33 = vector.shape_cast %32 : vector<1x128x128xbf16> to vector<128x128xbf16>
    %cst_19 = arith.constant dense<0.000000e+00> : vector<64x128xf32>
    %34 = tpu.matmul %31, %33, %cst_19 {dimension_numbers = #tpu.dot_dimension_numbers<[1], [0], [0], [1], [0, 0, 1, 1], [], []>} : vector<64x128xbf16>, vector<128x128xbf16>, vector<64x128xf32> -> vector<64x128xf32>
    %35 = arith.addf %29, %34 : vector<64x128xf32>
    %36 = vector.extract_strided_slice %4 {offsets = [1, 2, 0], sizes = [8, 8, 128], strides = [1, 1, 1]} : vector<10x10x128xbf16> to vector<8x8x128xbf16>
    %37 = vector.shape_cast %36 : vector<8x8x128xbf16> to vector<64x128xbf16>
    %c5 = arith.constant 5 : index
    %c0_20 = arith.constant 0 : index
    %c0_21 = arith.constant 0 : index
    %38 = vector.load %arg2[%c5, %c0_20, %c0_21] : memref<9x128x128xbf16, #tpu.memory_space<vmem>>, vector<1x128x128xbf16>
    %39 = vector.shape_cast %38 : vector<1x128x128xbf16> to vector<128x128xbf16>
    %cst_22 = arith.constant dense<0.000000e+00> : vector<64x128xf32>
    %40 = tpu.matmul %37, %39, %cst_22 {dimension_numbers = #tpu.dot_dimension_numbers<[1], [0], [0], [1], [0, 0, 1, 1], [], []>} : vector<64x128xbf16>, vector<128x128xbf16>, vector<64x128xf32> -> vector<64x128xf32>
    %41 = arith.addf %35, %40 : vector<64x128xf32>
    %42 = vector.extract_strided_slice %4 {offsets = [2, 0, 0], sizes = [8, 8, 128], strides = [1, 1, 1]} : vector<10x10x128xbf16> to vector<8x8x128xbf16>
    %43 = vector.shape_cast %42 : vector<8x8x128xbf16> to vector<64x128xbf16>
    %c6 = arith.constant 6 : index
    %c0_23 = arith.constant 0 : index
    %c0_24 = arith.constant 0 : index
    %44 = vector.load %arg2[%c6, %c0_23, %c0_24] : memref<9x128x128xbf16, #tpu.memory_space<vmem>>, vector<1x128x128xbf16>
    %45 = vector.shape_cast %44 : vector<1x128x128xbf16> to vector<128x128xbf16>
    %cst_25 = arith.constant dense<0.000000e+00> : vector<64x128xf32>
    %46 = tpu.matmul %43, %45, %cst_25 {dimension_numbers = #tpu.dot_dimension_numbers<[1], [0], [0], [1], [0, 0, 1, 1], [], []>} : vector<64x128xbf16>, vector<128x128xbf16>, vector<64x128xf32> -> vector<64x128xf32>
    %47 = arith.addf %41, %46 : vector<64x128xf32>
    %48 = vector.extract_strided_slice %4 {offsets = [2, 1, 0], sizes = [8, 8, 128], strides = [1, 1, 1]} : vector<10x10x128xbf16> to vector<8x8x128xbf16>
    %49 = vector.shape_cast %48 : vector<8x8x128xbf16> to vector<64x128xbf16>
    %c7 = arith.constant 7 : index
    %c0_26 = arith.constant 0 : index
    %c0_27 = arith.constant 0 : index
    %50 = vector.load %arg2[%c7, %c0_26, %c0_27] : memref<9x128x128xbf16, #tpu.memory_space<vmem>>, vector<1x128x128xbf16>
    %51 = vector.shape_cast %50 : vector<1x128x128xbf16> to vector<128x128xbf16>
    %cst_28 = arith.constant dense<0.000000e+00> : vector<64x128xf32>
    %52 = tpu.matmul %49, %51, %cst_28 {dimension_numbers = #tpu.dot_dimension_numbers<[1], [0], [0], [1], [0, 0, 1, 1], [], []>} : vector<64x128xbf16>, vector<128x128xbf16>, vector<64x128xf32> -> vector<64x128xf32>
    %53 = arith.addf %47, %52 : vector<64x128xf32>
    %54 = vector.extract_strided_slice %4 {offsets = [2, 2, 0], sizes = [8, 8, 128], strides = [1, 1, 1]} : vector<10x10x128xbf16> to vector<8x8x128xbf16>
    %55 = vector.shape_cast %54 : vector<8x8x128xbf16> to vector<64x128xbf16>
    %c8 = arith.constant 8 : index
    %c0_29 = arith.constant 0 : index
    %c0_30 = arith.constant 0 : index
    %56 = vector.load %arg2[%c8, %c0_29, %c0_30] : memref<9x128x128xbf16, #tpu.memory_space<vmem>>, vector<1x128x128xbf16>
    %57 = vector.shape_cast %56 : vector<1x128x128xbf16> to vector<128x128xbf16>
    %cst_31 = arith.constant dense<0.000000e+00> : vector<64x128xf32>
    %58 = tpu.matmul %55, %57, %cst_31 {dimension_numbers = #tpu.dot_dimension_numbers<[1], [0], [0], [1], [0, 0, 1, 1], [], []>} : vector<64x128xbf16>, vector<128x128xbf16>, vector<64x128xf32> -> vector<64x128xf32>
    %59 = arith.addf %53, %58 : vector<64x128xf32>
    %60 = arith.truncf %59 : vector<64x128xf32> to vector<64x128xbf16>
    %c0_32 = arith.constant 0 : index
    %c0_33 = arith.constant 0 : index
    %c0_34 = arith.constant 0 : index
    %61 = vector.load %arg5[%c0_32, %c0_33, %c0_34] : memref<1x64x128xbf16, #tpu.memory_space<vmem>>, vector<1x64x128xbf16>
    %62 = vector.shape_cast %61 : vector<1x64x128xbf16> to vector<64x128xbf16>
    %63 = vector.shape_cast %60 : vector<64x128xbf16> to vector<1x64x128xbf16>
    tpu.vector_store %arg5[%c0_32, %c0_33, %c0_34], %63 {strides = array<i32>} : memref<1x64x128xbf16, #tpu.memory_space<vmem>>, vector<1x64x128xbf16>,
    %c0_35 = arith.constant 0 : index
    %c0_36 = arith.constant 0 : index
    %c0_37 = arith.constant 0 : index
    %64 = vector.load %arg3[%c0_35, %c0_36, %c0_37] : memref<1x64x128xbf16, #tpu.memory_space<vmem>>, vector<1x64x128xbf16>
    %65 = vector.shape_cast %64 : vector<1x64x128xbf16> to vector<64x128xbf16>
    %c0_38 = arith.constant 0 : index
    %c0_39 = arith.constant 0 : index
    %66 = vector.load %arg4[%c0_38, %c0_39] : memref<128x128xbf16, #tpu.memory_space<vmem>>, vector<128x128xbf16>
    %cst_40 = arith.constant dense<0.000000e+00> : vector<64x128xf32>
    %67 = tpu.matmul %65, %66, %cst_40 {dimension_numbers = #tpu.dot_dimension_numbers<[1], [0], [0], [1], [0, 0, 1, 1], [], []>} : vector<64x128xbf16>, vector<128x128xbf16>, vector<64x128xf32> -> vector<64x128xf32>
    %cst_41 = arith.constant dense<0.000000e+00> : vector<128xf32>
    %68 = vector.multi_reduction <add>, %59, %cst_41 [0] : vector<64x128xf32> to vector<128xf32>
    %69 = vector.shape_cast %68 : vector<128xf32> to vector<1x128xf32>
    %70 = arith.mulf %59, %59 : vector<64x128xf32>
    %cst_42 = arith.constant dense<0.000000e+00> : vector<128xf32>
    %71 = vector.multi_reduction <add>, %70, %cst_42 [0] : vector<64x128xf32> to vector<128xf32>
    %72 = vector.shape_cast %71 : vector<128xf32> to vector<1x128xf32>
    %cst_43 = arith.constant dense<0.000000e+00> : vector<128xf32>
    %73 = vector.multi_reduction <add>, %67, %cst_43 [0] : vector<64x128xf32> to vector<128xf32>
    %74 = vector.shape_cast %73 : vector<128xf32> to vector<1x128xf32>
    %75 = arith.mulf %67, %67 : vector<64x128xf32>
    %cst_44 = arith.constant dense<0.000000e+00> : vector<128xf32>
    %76 = vector.multi_reduction <add>, %75, %cst_44 [0] : vector<64x128xf32> to vector<128xf32>
    %77 = vector.shape_cast %76 : vector<128xf32> to vector<1x128xf32>
    %cst_45 = arith.constant 0.000000e+00 : f32
    %78 = vector.broadcast %cst_45 : f32 to vector<4x128xf32>
    %79 = tpu.concatenate %69, %72, %74, %77, %78 in 0 : vector<1x128xf32>, vector<1x128xf32>, vector<1x128xf32>, vector<1x128xf32>, vector<4x128xf32> -> vector<8x128xf32>
    %c0_46 = arith.constant 0 : index
    %c0_47 = arith.constant 0 : index
    %80 = vector.load %arg6[%c0_46, %c0_47] : memref<8x128xf32, #tpu.memory_space<vmem>>, vector<8x128xf32>
    %81 = arith.addf %80, %79 : vector<8x128xf32>
    %c0_48 = arith.constant 0 : index
    %c0_49 = arith.constant 0 : index
    %82 = vector.load %arg6[%c0_48, %c0_49] : memref<8x128xf32, #tpu.memory_space<vmem>>, vector<8x128xf32>
    tpu.vector_store %arg6[%c0_48, %c0_49], %81 {strides = array<i32>} : memref<8x128xf32, #tpu.memory_space<vmem>>, vector<8x128xf32>,
    return
  }
  func.func @transform_0(%arg0: i32) -> (i32, i32, i32, i32) {
    %c0_i32 = arith.constant 0 : i32
    %c0_i32_0 = arith.constant 0 : i32
    %c0_i32_1 = arith.constant 0 : i32
    %c0_i32_2 = arith.constant 0 : i32
    return %arg0, %c0_i32, %c0_i32_0, %c0_i32_1 : i32, i32, i32, i32
  }
  func.func @transform_1(%arg0: i32) -> (i32, i32, i32) {
    %c0_i32 = arith.constant 0 : i32
    %c0_i32_0 = arith.constant 0 : i32
    %c0_i32_1 = arith.constant 0 : i32
    %c0_i32_2 = arith.constant 0 : i32
    return %c0_i32, %c0_i32_0, %c0_i32_1 : i32, i32, i32
  }
  func.func @transform_2(%arg0: i32) -> (i32, i32, i32) {
    %c0_i32 = arith.constant 0 : i32
    %c0_i32_0 = arith.constant 0 : i32
    %c0_i32_1 = arith.constant 0 : i32
    return %arg0, %c0_i32, %c0_i32_0 : i32, i32, i32
  }
  func.func @transform_3(%arg0: i32) -> (i32, i32) {
    %c0_i32 = arith.constant 0 : i32
    %c0_i32_0 = arith.constant 0 : i32
    %c0_i32_1 = arith.constant 0 : i32
    return %c0_i32, %c0_i32_0 : i32, i32
  }
  func.func @transform_4(%arg0: i32) -> (i32, i32, i32) {
    %c0_i32 = arith.constant 0 : i32
    %c0_i32_0 = arith.constant 0 : i32
    %c0_i32_1 = arith.constant 0 : i32
    return %arg0, %c0_i32, %c0_i32_0 : i32, i32, i32
  }
  func.func @transform_5(%arg0: i32) -> (i32, i32) {
    %c0_i32 = arith.constant 0 : i32
    %c0_i32_0 = arith.constant 0 : i32
    %c0_i32_1 = arith.constant 0 : i32
    return %c0_i32, %c0_i32_0 : i32, i32
  }
}

module attributes {stable_mosaic.version = 11 : i64} {
  func.func @_conv2_finalize_kernel(%arg0: i32, %arg1: memref<1x64x128xbf16, #tpu.memory_space<vmem>>, %arg2: memref<8x128xf32, #tpu.memory_space<vmem>>, %arg3: memref<1x64x128xbf16, #tpu.memory_space<vmem>>, %arg4: memref<128x128xbf16, #tpu.memory_space<vmem>>, %arg5: memref<1x64x128xf32, #tpu.memory_space<vmem>>) attributes {dimension_semantics = [#tpu.dimension_semantics<parallel>], iteration_bounds = array<i64: 2>, scalar_prefetch = 0 : i64, scratch_operands = 0 : i64, tpu.core_type = #tpu.core_type<tc>, window_params = [{transform_indices = @transform_0, window_bounds = array<i64: 1, 64, 128>}, {pipeline_mode = #tpu.pipeline_mode<synchronous>, transform_indices = @transform_1, window_bounds = array<i64: 8, 128>}, {transform_indices = @transform_2, window_bounds = array<i64: 1, 64, 128>}, {pipeline_mode = #tpu.pipeline_mode<synchronous>, transform_indices = @transform_3, window_bounds = array<i64: 128, 128>}, {transform_indices = @transform_4, window_bounds = array<i64: 1, 64, 128>}]} {
    %c0 = arith.constant 0 : index
    %c0_0 = arith.constant 0 : index
    %c0_1 = arith.constant 0 : index
    %0 = vector.load %arg1[%c0, %c0_0, %c0_1] : memref<1x64x128xbf16, #tpu.memory_space<vmem>>, vector<1x64x128xbf16>
    %1 = vector.shape_cast %0 : vector<1x64x128xbf16> to vector<64x128xbf16>
    %2 = arith.extf %1 : vector<64x128xbf16> to vector<64x128xf32>
    %c0_2 = arith.constant 0 : index
    %c0_3 = arith.constant 0 : index
    %c0_4 = arith.constant 0 : index
    %3 = vector.load %arg3[%c0_2, %c0_3, %c0_4] : memref<1x64x128xbf16, #tpu.memory_space<vmem>>, vector<1x64x128xbf16>
    %4 = vector.shape_cast %3 : vector<1x64x128xbf16> to vector<64x128xbf16>
    %c0_5 = arith.constant 0 : index
    %c0_6 = arith.constant 0 : index
    %5 = vector.load %arg4[%c0_5, %c0_6] : memref<128x128xbf16, #tpu.memory_space<vmem>>, vector<128x128xbf16>
    %cst = arith.constant dense<0.000000e+00> : vector<64x128xf32>
    %6 = tpu.matmul %4, %5, %cst {dimension_numbers = #tpu.dot_dimension_numbers<[1], [0], [0], [1], [0, 0, 1, 1], [], []>} : vector<64x128xbf16>, vector<128x128xbf16>, vector<64x128xf32> -> vector<64x128xf32>
    %c0_7 = arith.constant 0 : index
    %c0_8 = arith.constant 0 : index
    %7 = vector.load %arg2[%c0_7, %c0_8] : memref<8x128xf32, #tpu.memory_space<vmem>>, vector<1x128xf32>
    %8 = vector.broadcast %7 : vector<1x128xf32> to vector<64x128xf32>
    %9 = arith.mulf %2, %8 : vector<64x128xf32>
    %c1 = arith.constant 1 : index
    %c0_9 = arith.constant 0 : index
    %10 = vector.load %arg2[%c1, %c0_9] : memref<8x128xf32, #tpu.memory_space<vmem>>, vector<1x128xf32>
    %11 = vector.broadcast %10 : vector<1x128xf32> to vector<64x128xf32>
    %12 = arith.addf %9, %11 : vector<64x128xf32>
    %c2 = arith.constant 2 : index
    %c0_10 = arith.constant 0 : index
    %13 = vector.load %arg2[%c2, %c0_10] : memref<8x128xf32, #tpu.memory_space<vmem>>, vector<1x128xf32>
    %14 = vector.broadcast %13 : vector<1x128xf32> to vector<64x128xf32>
    %15 = arith.mulf %6, %14 : vector<64x128xf32>
    %16 = arith.addf %12, %15 : vector<64x128xf32>
    %c3 = arith.constant 3 : index
    %c0_11 = arith.constant 0 : index
    %17 = vector.load %arg2[%c3, %c0_11] : memref<8x128xf32, #tpu.memory_space<vmem>>, vector<1x128xf32>
    %18 = vector.broadcast %17 : vector<1x128xf32> to vector<64x128xf32>
    %19 = arith.addf %16, %18 : vector<64x128xf32>
    %cst_12 = arith.constant 0.000000e+00 : f32
    %20 = vector.broadcast %cst_12 : f32 to vector<64x128xf32>
    %21 = arith.maximumf %19, %20 : vector<64x128xf32>
    %c0_13 = arith.constant 0 : index
    %c0_14 = arith.constant 0 : index
    %c0_15 = arith.constant 0 : index
    %22 = vector.load %arg5[%c0_13, %c0_14, %c0_15] : memref<1x64x128xf32, #tpu.memory_space<vmem>>, vector<1x64x128xf32>
    %23 = vector.shape_cast %22 : vector<1x64x128xf32> to vector<64x128xf32>
    %24 = vector.shape_cast %21 : vector<64x128xf32> to vector<1x64x128xf32>
    tpu.vector_store %arg5[%c0_13, %c0_14, %c0_15], %24 {strides = array<i32>} : memref<1x64x128xf32, #tpu.memory_space<vmem>>, vector<1x64x128xf32>,
    return
  }
  func.func @transform_0(%arg0: i32) -> (i32, i32, i32) {
    %c0_i32 = arith.constant 0 : i32
    %c0_i32_0 = arith.constant 0 : i32
    %c0_i32_1 = arith.constant 0 : i32
    return %arg0, %c0_i32, %c0_i32_0 : i32, i32, i32
  }
  func.func @transform_1(%arg0: i32) -> (i32, i32) {
    %c0_i32 = arith.constant 0 : i32
    %c0_i32_0 = arith.constant 0 : i32
    %c0_i32_1 = arith.constant 0 : i32
    return %c0_i32, %c0_i32_0 : i32, i32
  }
  func.func @transform_2(%arg0: i32) -> (i32, i32, i32) {
    %c0_i32 = arith.constant 0 : i32
    %c0_i32_0 = arith.constant 0 : i32
    %c0_i32_1 = arith.constant 0 : i32
    return %arg0, %c0_i32, %c0_i32_0 : i32, i32, i32
  }
  func.func @transform_3(%arg0: i32) -> (i32, i32) {
    %c0_i32 = arith.constant 0 : i32
    %c0_i32_0 = arith.constant 0 : i32
    %c0_i32_1 = arith.constant 0 : i32
    return %c0_i32, %c0_i32_0 : i32, i32
  }
  func.func @transform_4(%arg0: i32) -> (i32, i32, i32) {
    %c0_i32 = arith.constant 0 : i32
    %c0_i32_0 = arith.constant 0 : i32
    %c0_i32_1 = arith.constant 0 : i32
    return %arg0, %c0_i32, %c0_i32_0 : i32, i32, i32
  }
}

</mosaic_0001>

<llo_original>
// kernel: restnet_down_block.5
$region0: #{restnet_down_block.5}
  #allocation0 [shape = 'u32[]', space=smem, size = 0x4, offset = 0x4, fixed_abs, tag = 'smem constant byte address 0x4 - core index']
  #allocation1 [shape = 'u32[144,128]{1,0:T(1,128)}', space=vmem, size = 0x12000, scoped, tag = 'internal scratch']
  %s0 = inlined_call_operand.vmem [shape: bf16[128,128], index: 0, kind: input, shape index: {}]
  %s1 = inlined_call_operand.vmem [shape: f32[8,128], index: 1, kind: input, shape index: {}]
  %s2 = inlined_call_operand.vmem [shape: bf16[128,128], index: 2, kind: output, shape index: {}]
  %s3 = sld [smem:[#allocation0]]
  $region18: #{restnet_down_block.5} parent=0
    _
  %s5 = ssub.s32 1, %s3
  %s6 = scalar_select 0, %s5, %s3
  // Predicated region
  $region2: #{restnet_down_block.5} parent=0 // pred_check
    _
  $region3: #{restnet_down_block.5} parent=0 // pred_check_branch
    %8 = sbr.rel (0) target = $region5
  $region4: #{restnet_down_block.5} parent=0 // pred_region
    _
  $region5: #{restnet_down_block.5} parent=0 // pred_fallthru
    _
  // Predicated region
  $region6: #{restnet_down_block.5} parent=0 // pred_check
    _
  $region7: #{restnet_down_block.5} parent=0 // pred_check_branch
    %10 = sbr.rel (0) target = $region9
  $region8: #{restnet_down_block.5} parent=0 // pred_region
    _
  $region9: #{restnet_down_block.5} parent=0 // pred_fallthru
    _
  %v11 = vld [vmem:[%s0] sm:$0xf]
  %v12 = vld [vmem:[%s0 + $0x4] sm:$0xf]
  %v13 = vld [vmem:[%s0 + $0x8] sm:$0xf]
  %v14 = vld [vmem:[%s0 + $0xc] sm:$0xf]
  %v15 = vld [vmem:[%s0 + $0x10] sm:$0xf]
  %v16 = vld [vmem:[%s0 + $0x14] sm:$0xf]
  %v17 = vld [vmem:[%s0 + $0x18] sm:$0xf]
  %v18 = vld [vmem:[%s0 + $0x1c] sm:$0xf]
  %v19 = vld [vmem:[%s0 + $0x20] sm:$0xf]
  %v20 = vld [vmem:[%s0 + $0x24] sm:$0xf]
  %v21 = vld [vmem:[%s0 + $0x28] sm:$0xf]
  %v22 = vld [vmem:[%s0 + $0x2c] sm:$0xf]
  %v23 = vld [vmem:[%s0 + $0x30] sm:$0xf]
  %v24 = vld [vmem:[%s0 + $0x34] sm:$0xf]
  %v25 = vld [vmem:[%s0 + $0x38] sm:$0xf]
  %v26 = vld [vmem:[%s0 + $0x3c] sm:$0xf]
  %v27 = vunpack.c.l.bf16 %v11
  %v28 = vunpack.c.l.bf16 %v12
  %v29 = vunpack.c.l.bf16 %v13
  %v30 = vunpack.c.l.bf16 %v14
  %v31 = vunpack.c.l.bf16 %v15
  %v32 = vunpack.c.l.bf16 %v16
  %v33 = vunpack.c.l.bf16 %v17
  %v34 = vunpack.c.l.bf16 %v18
  %v35 = vunpack.c.l.bf16 %v19
  %v36 = vunpack.c.l.bf16 %v20
  %v37 = vunpack.c.l.bf16 %v21
  %v38 = vunpack.c.l.bf16 %v22
  %v39 = vunpack.c.l.bf16 %v23
  %v40 = vunpack.c.l.bf16 %v24
  %v41 = vunpack.c.l.bf16 %v25
  %v42 = vunpack.c.l.bf16 %v26
  %v43 = vld [vmem:[%s1] sm:$0x1]
  %v44 = vlaneseq
  %v45 = vshrl.u32 %v44, 7
  %v46 = vsub.s32 0, %v45
  %v47 = vrot.slane %v43, %v46
  %v48 = vmul.f32 %v27, %v47
  %v49 = vmul.f32 %v28, %v47
  %v50 = vmul.f32 %v29, %v47
  %v51 = vmul.f32 %v30, %v47
  %v52 = vmul.f32 %v31, %v47
  %v53 = vmul.f32 %v32, %v47
  %v54 = vmul.f32 %v33, %v47
  %v55 = vmul.f32 %v34, %v47
  %v56 = vmul.f32 %v35, %v47
  %v57 = vmul.f32 %v36, %v47
  %v58 = vmul.f32 %v37, %v47
  %v59 = vmul.f32 %v38, %v47
  %v60 = vmul.f32 %v39, %v47
  %v61 = vmul.f32 %v40, %v47
  %v62 = vmul.f32 %v41, %v47
  %v63 = vmul.f32 %v42, %v47
  %v64 = vld [vmem:[%s1 + $0x1] sm:$0x1]
  %v65 = vlaneseq
  %v66 = vshrl.u32 %v65, 7
  %v67 = vsub.s32 0, %v66
  %v68 = vrot.slane %v64, %v67
  %v69 = vadd.f32 %v48, %v68
  %v70 = vadd.f32 %v49, %v68
  %v71 = vadd.f32 %v50, %v68
  %v72 = vadd.f32 %v51, %v68
  %v73 = vadd.f32 %v52, %v68
  %v74 = vadd.f32 %v53, %v68
  %v75 = vadd.f32 %v54, %v68
  %v76 = vadd.f32 %v55, %v68
  %v77 = vadd.f32 %v56, %v68
  %v78 = vadd.f32 %v57, %v68
  %v79 = vadd.f32 %v58, %v68
  %v80 = vadd.f32 %v59, %v68
  %v81 = vadd.f32 %v60, %v68
  %v82 = vadd.f32 %v61, %v68
  %v83 = vadd.f32 %v62, %v68
  %v84 = vadd.f32 %v63, %v68
  %v85 = vmax.f32 %v69, 0.0
  %v86 = vmax.f32 %v70, 0.0
  %v87 = vmax.f32 %v71, 0.0
  %v88 = vmax.f32 %v72, 0.0
  %v89 = vmax.f32 %v73, 0.0
  %v90 = vmax.f32 %v74, 0.0
  %v91 = vmax.f32 %v75, 0.0
  %v92 = vmax.f32 %v76, 0.0
  %v93 = vmax.f32 %v77, 0.0
  %v94 = vmax.f32 %v78, 0.0
  %v95 = vmax.f32 %v79, 0.0
  %v96 = vmax.f32 %v80, 0.0
  %v97 = vmax.f32 %v81, 0.0
  %v98 = vmax.f32 %v82, 0.0
  %v99 = vmax.f32 %v83, 0.0
  %v100 = vmax.f32 %v84, 0.0
  %v101 = vpack.c.bf16 %v86, %v85
  %v102 = vpack.c.bf16 %v88, %v87
  %v103 = vpack.c.bf16 %v90, %v89
  %v104 = vpack.c.bf16 %v92, %v91
  %v105 = vpack.c.bf16 %v94, %v93
  %v106 = vpack.c.bf16 %v96, %v95
  %v107 = vpack.c.bf16 %v98, %v97
  %v108 = vpack.c.bf16 %v100, %v99
  %v117 = vunpack.c.l.b16 %v101
  %v118 = vunpack.c.h.b16 %v101
  %v119 = vunpack.c.l.b16 %v102
  %v120 = vunpack.c.h.b16 %v102
  %v121 = vunpack.c.l.b16 %v103
  %v122 = vunpack.c.h.b16 %v103
  %v123 = vunpack.c.l.b16 %v104
  %v124 = vunpack.c.h.b16 %v104
  %v125 = vunpack.c.l.b16 %v105
  %v126 = vunpack.c.h.b16 %v105
  %v127 = vunpack.c.l.b16 %v106
  %v128 = vunpack.c.h.b16 %v106
  %v129 = vunpack.c.l.b16 %v107
  %v130 = vunpack.c.h.b16 %v107
  %v131 = vunpack.c.l.b16 %v108
  %v132 = vunpack.c.h.b16 %v108
  %v133 = vpack.c.b16 %v117, %v117
  %v134 = vpack.c.b16 %v118, %v118
  %v135 = vpack.c.b16 %v119, %v119
  %v136 = vpack.c.b16 %v120, %v120
  %v137 = vpack.c.b16 %v121, %v121
  %v138 = vpack.c.b16 %v122, %v122
  %v139 = vpack.c.b16 %v123, %v123
  %v140 = vpack.c.b16 %v124, %v124
  %v141 = vpack.c.b16 %v125, %v125
  %v142 = vpack.c.b16 %v126, %v126
  %v143 = vpack.c.b16 %v127, %v127
  %v144 = vpack.c.b16 %v128, %v128
  %v145 = vpack.c.b16 %v129, %v129
  %v146 = vpack.c.b16 %v130, %v130
  %v147 = vpack.c.b16 %v131, %v131
  %v148 = vpack.c.b16 %v132, %v132
  %165 = vst [vmem:[%s2] sm:$0xf] %v133
  %166 = vst [vmem:[%s2 + $0x4] sm:$0xf] %v134
  %167 = vst [vmem:[%s2 + $0x8] sm:$0xf] %v135
  %168 = vst [vmem:[%s2 + $0xc] sm:$0xf] %v136
  %169 = vst [vmem:[%s2 + $0x10] sm:$0xf] %v137
  %170 = vst [vmem:[%s2 + $0x14] sm:$0xf] %v138
  %171 = vst [vmem:[%s2 + $0x18] sm:$0xf] %v139
  %172 = vst [vmem:[%s2 + $0x1c] sm:$0xf] %v140
  %173 = vst [vmem:[%s2 + $0x20] sm:$0xf] %v141
  %174 = vst [vmem:[%s2 + $0x24] sm:$0xf] %v142
  %175 = vst [vmem:[%s2 + $0x28] sm:$0xf] %v143
  %176 = vst [vmem:[%s2 + $0x2c] sm:$0xf] %v144
  %177 = vst [vmem:[%s2 + $0x30] sm:$0xf] %v145
  %178 = vst [vmem:[%s2 + $0x34] sm:$0xf] %v146
  %179 = vst [vmem:[%s2 + $0x38] sm:$0xf] %v147
  %180 = vst [vmem:[%s2 + $0x3c] sm:$0xf] %v148
  // Predicated region
  $region10: #{restnet_down_block.5} parent=0 // pred_check
    _
  $region11: #{restnet_down_block.5} parent=0 // pred_check_branch
    %182 = sbr.rel (0) target = $region13
  $region12: #{restnet_down_block.5} parent=0 // pred_region
    _
  $region13: #{restnet_down_block.5} parent=0 // pred_fallthru
    _
  // Predicated region
  $region14: #{restnet_down_block.5} parent=0 // pred_check
    _
  $region15: #{restnet_down_block.5} parent=0 // pred_check_branch
    %184 = sbr.rel (0) target = $region17
  $region16: #{restnet_down_block.5} parent=0 // pred_region
    _
  $region17: #{restnet_down_block.5} parent=0 // pred_fallthru
    _

// kernel: restnet_down_block.4
$region0: #{restnet_down_block.4}
  #allocation0 [shape = 'u32[]', space=smem, size = 0x4, offset = 0x4, fixed_abs, tag = 'smem constant byte address 0x4 - core index']
  #allocation1 [shape = 'u32[144,128]{1,0:T(1,128)}', space=vmem, size = 0x12000, scoped, tag = 'internal scratch']
  %s0 = inlined_call_operand.vmem [shape: bf16[128,36], index: 0, kind: input, shape index: {}]
  %s1 = inlined_call_operand.vmem [shape: bf16[36,128], index: 1, kind: input, shape index: {}]
  %s2 = inlined_call_operand.vmem [shape: bf16[128,128], index: 2, kind: output, shape index: {0}]
  %s3 = inlined_call_operand.vmem [shape: f32[8,128], index: 3, kind: output, shape index: {1}]
  %4 = xla_tuple %s2, %s3
  %s5 = sld [smem:[#allocation0]]
  $region30: #{restnet_down_block.4} parent=0
    _
  %s7 = ssub.s32 1, %s5
  %s8 = scalar_select 0, %s7, %s5
  // Predicated region
  $region2: #{restnet_down_block.4} parent=0 // pred_check
    _
  $region3: #{restnet_down_block.4} parent=0 // pred_check_branch
    %10 = sbr.rel (0) target = $region5
  $region4: #{restnet_down_block.4} parent=0 // pred_region
    _
  $region5: #{restnet_down_block.4} parent=0 // pred_fallthru
    _
  // Predicated region
  $region6: #{restnet_down_block.4} parent=0 // pred_check
    _
  $region7: #{restnet_down_block.4} parent=0 // pred_check_branch
    %12 = sbr.rel (0) target = $region9
  $region8: #{restnet_down_block.4} parent=0 // pred_region
    _
  $region9: #{restnet_down_block.4} parent=0 // pred_fallthru
    _
  %p14 = scmp.eq.s32.totalorder 0, 0
  // Predicated region
  $region10: #{restnet_down_block.4} parent=0 // pred_check
    %p15 = pneg %p14
  $region11: #{restnet_down_block.4} parent=0 // pred_check_branch
    %17 = sbr.rel (%p15) target = $region13
  $region12: #{restnet_down_block.4} parent=0 // pred_region
    %18 = vst [vmem:[%s3] sm:$0xff] 0.0
  $region13: #{restnet_down_block.4} parent=0 // pred_fallthru
    _
  %v19 = vld [vmem:[%s0] sm:$0xf]
  %v20 = vld [vmem:[%s0 + $0x4] sm:$0xf]
  %v21 = vld [vmem:[%s0 + $0x8] sm:$0xf]
  %v22 = vld [vmem:[%s0 + $0xc] sm:$0xf]
  %v23 = vld [vmem:[%s0 + $0x10] sm:$0xf]
  %v24 = vld [vmem:[%s0 + $0x14] sm:$0xf]
  %v25 = vld [vmem:[%s0 + $0x18] sm:$0xf]
  %v26 = vld [vmem:[%s0 + $0x1c] sm:$0xf]
  %v27 = vld [vmem:[%s0 + $0x20] sm:$0xf]
  %v28 = vld [vmem:[%s0 + $0x24] sm:$0xf]
  %v29 = vld [vmem:[%s0 + $0x28] sm:$0xf]
  %v30 = vld [vmem:[%s0 + $0x2c] sm:$0xf]
  %v31 = vld [vmem:[%s0 + $0x30] sm:$0xf]
  %v32 = vld [vmem:[%s0 + $0x34] sm:$0xf]
  %v33 = vld [vmem:[%s0 + $0x38] sm:$0xf]
  %v34 = vld [vmem:[%s0 + $0x3c] sm:$0xf]
  %v35 = vld [vmem:[%s1] sm:$0xf]
  %v36 = vld [vmem:[%s1 + $0x4] sm:$0xf]
  %v37 = vld [vmem:[%s1 + $0x8] sm:$0xf]
  %v38 = vld [vmem:[%s1 + $0xc] sm:$0xf]
  %v39 = vld [vmem:[%s1 + $0x10] sm:$0x3]
  %v56 = vunpack.c.l.b16 %v19
  %v57 = vunpack.c.l.b16 %v20
  %v58 = vunpack.c.l.b16 %v21
  %v59 = vunpack.c.l.b16 %v22
  %v60 = vunpack.c.l.b16 %v23
  %v61 = vunpack.c.l.b16 %v24
  %v62 = vunpack.c.l.b16 %v25
  %v63 = vunpack.c.l.b16 %v26
  %v64 = vunpack.c.l.b16 %v27
  %v65 = vunpack.c.l.b16 %v28
  %v66 = vunpack.c.l.b16 %v29
  %v67 = vunpack.c.l.b16 %v30
  %v68 = vunpack.c.l.b16 %v31
  %v69 = vunpack.c.l.b16 %v32
  %v70 = vunpack.c.l.b16 %v33
  %v71 = vunpack.c.l.b16 %v34
  %v72 = vpack.c.b16 %v57, %v56
  %v73 = vpack.c.b16 %v59, %v58
  %v74 = vpack.c.b16 %v61, %v60
  %v75 = vpack.c.b16 %v63, %v62
  %v76 = vpack.c.b16 %v65, %v64
  %v77 = vpack.c.b16 %v67, %v66
  %v78 = vpack.c.b16 %v69, %v68
  %v79 = vpack.c.b16 %v71, %v70
  %v85 = vunpack.c.l.b16 %v35
  %v86 = vunpack.c.l.b16 %v36
  %v87 = vunpack.c.l.b16 %v37
  %v88 = vunpack.c.l.b16 %v38
  %v89 = vunpack.c.l.b16 %v39
  %v90 = vpack.c.b16 %v86, %v85
  %v91 = vpack.c.b16 %v88, %v87
  %v92 = vpack.c.b16 %v89, %v89
  %vm95 = vcmask 293888
  %v97 = vsel %vm95, %v72, 0
  %v100 = vsel %vm95, %v73, 0
  %v103 = vsel %vm95, %v74, 0
  %v106 = vsel %vm95, %v75, 0
  %v109 = vsel %vm95, %v76, 0
  %v112 = vsel %vm95, %v77, 0
  %v115 = vsel %vm95, %v78, 0
  %v118 = vsel %vm95, %v79, 0
  %vm120 = vcmask 1041408
  %v122 = vsel %vm120, %v92, 0
  %124 = vmatprep.subr.bf16.mxu0 0
  %125 = vmatpush1.bf16.msra.mxu0 %v90
  %126 = vmatprep.subr.bf16.mxu0 0
  %127 = vmatpush1.bf16.msra.mxu0 %v91
  %128 = vmatprep.subr.bf16.mxu0 0
  %129 = vmatpush1.bf16.msra.mxu0 %v122
  %130 = vmatprep.subr.bf16.mxu0 0
  %131 = vmatpush1.bf16.msra.mxu0 0
  %132 = vmatprep.subr.bf16.mxu0 0
  %133 = vmatpush1.bf16.msra.mxu0 0
  %134 = vmatprep.subr.bf16.mxu0 0
  %135 = vmatpush1.bf16.msra.mxu0 0
  %136 = vmatprep.subr.bf16.mxu0 0
  %137 = vmatpush1.bf16.msra.mxu0 0
  %138 = vmatprep.subr.bf16.mxu0 0
  %139 = vmatpush1.bf16.msra.mxu0 0
  %140 = vmatprep.subr.bf16.mxu0 0
  %141 = vmatpush1.bf16.msra.mxu0 0
  %142 = vmatprep.subr.bf16.mxu0 0
  %143 = vmatpush1.bf16.msra.mxu0 0
  %144 = vmatprep.subr.bf16.mxu0 0
  %145 = vmatpush1.bf16.msra.mxu0 0
  %146 = vmatprep.subr.bf16.mxu0 0
  %147 = vmatpush1.bf16.msra.mxu0 0
  %148 = vmatprep.subr.bf16.mxu0 0
  %149 = vmatpush1.bf16.msra.mxu0 0
  %150 = vmatprep.subr.bf16.mxu0 0
  %151 = vmatpush1.bf16.msra.mxu0 0
  %152 = vmatprep.subr.bf16.mxu0 0
  %153 = vmatpush1.bf16.msra.mxu0 0
  %154 = vmatprep.subr.bf16.mxu0 0
  %155 = vmatpush1.bf16.msra.mxu0 0
  %156 = vmatprep.mubr.bf16.mxu0 0
  %157 = vmatmul.mubr.bf16.gmra.mrb[0].mxu0 %v97
  %v158 = vpop.f32.mrb[0].mxu0
  %v159 = vadd.f32 0.0, %v158
  %v160 = vpop.f32.mrb[0].mxu0
  %v161 = vpop.f32.mrb[0].mxu0
  %v162 = vadd.f32 0.0, %v161
  %v163 = vpop.f32.mrb[0].mxu0
  %164 = vmatprep.mubr.bf16.mxu0 0
  %165 = vmatmul.mubr.bf16.gmra.mrb[0].mxu0 %v100
  %v166 = vpop.f32.mrb[0].mxu0
  %v167 = vadd.f32 0.0, %v166
  %v168 = vpop.f32.mrb[0].mxu0
  %v169 = vpop.f32.mrb[0].mxu0
  %v170 = vadd.f32 0.0, %v169
  %v171 = vpop.f32.mrb[0].mxu0
  %172 = vmatprep.mubr.bf16.mxu0 0
  %173 = vmatmul.mubr.bf16.gmra.mrb[0].mxu0 %v103
  %v174 = vpop.f32.mrb[0].mxu0
  %v175 = vadd.f32 0.0, %v174
  %v176 = vpop.f32.mrb[0].mxu0
  %v177 = vpop.f32.mrb[0].mxu0
  %v178 = vadd.f32 0.0, %v177
  %v179 = vpop.f32.mrb[0].mxu0
  %180 = vmatprep.mubr.bf16.mxu0 0
  %181 = vmatmul.mubr.bf16.gmra.mrb[0].mxu0 %v106
  %v182 = vpop.f32.mrb[0].mxu0
  %v183 = vadd.f32 0.0, %v182
  %v184 = vpop.f32.mrb[0].mxu0
  %v185 = vpop.f32.mrb[0].mxu0
  %v186 = vadd.f32 0.0, %v185
  %v187 = vpop.f32.mrb[0].mxu0
  %188 = vmatprep.mubr.bf16.mxu0 0
  %189 = vmatmul.mubr.bf16.gmra.mrb[0].mxu0 %v109
  %v190 = vpop.f32.mrb[0].mxu0
  %v191 = vadd.f32 0.0, %v190
  %v192 = vpop.f32.mrb[0].mxu0
  %v193 = vpop.f32.mrb[0].mxu0
  %v194 = vadd.f32 0.0, %v193
  %v195 = vpop.f32.mrb[0].mxu0
  %196 = vmatprep.mubr.bf16.mxu0 0
  %197 = vmatmul.mubr.bf16.gmra.mrb[0].mxu0 %v112
  %v198 = vpop.f32.mrb[0].mxu0
  %v199 = vadd.f32 0.0, %v198
  %v200 = vpop.f32.mrb[0].mxu0
  %v201 = vpop.f32.mrb[0].mxu0
  %v202 = vadd.f32 0.0, %v201
  %v203 = vpop.f32.mrb[0].mxu0
  %204 = vmatprep.mubr.bf16.mxu0 0
  %205 = vmatmul.mubr.bf16.gmra.mrb[0].mxu0 %v115
  %v206 = vpop.f32.mrb[0].mxu0
  %v207 = vadd.f32 0.0, %v206
  %v208 = vpop.f32.mrb[0].mxu0
  %v209 = vpop.f32.mrb[0].mxu0
  %v210 = vadd.f32 0.0, %v209
  %v211 = vpop.f32.mrb[0].mxu0
  %212 = vmatprep.mubr.bf16.mxu0 0
  %213 = vmatmul.mubr.bf16.gmra.mrb[0].mxu0 %v118
  %v214 = vpop.f32.mrb[0].mxu0
  %v215 = vadd.f32 0.0, %v214
  %v216 = vpop.f32.mrb[0].mxu0
  %v217 = vpop.f32.mrb[0].mxu0
  %v218 = vadd.f32 0.0, %v217
  %v219 = vpop.f32.mrb[0].mxu0
  %220 = vdwg.mxu0
  %v221 = vpack.c.bf16 %v162, %v159
  %v222 = vpack.c.bf16 %v170, %v167
  %v223 = vpack.c.bf16 %v178, %v175
  %v224 = vpack.c.bf16 %v186, %v183
  %v225 = vpack.c.bf16 %v194, %v191
  %v226 = vpack.c.bf16 %v202, %v199
  %v227 = vpack.c.bf16 %v210, %v207
  %v228 = vpack.c.bf16 %v218, %v215
  %v237 = vunpack.c.l.b16 %v221
  %v238 = vunpack.c.h.b16 %v221
  %v239 = vunpack.c.l.b16 %v222
  %v240 = vunpack.c.h.b16 %v222
  %v241 = vunpack.c.l.b16 %v223
  %v242 = vunpack.c.h.b16 %v223
  %v243 = vunpack.c.l.b16 %v224
  %v244 = vunpack.c.h.b16 %v224
  %v245 = vunpack.c.l.b16 %v225
  %v246 = vunpack.c.h.b16 %v225
  %v247 = vunpack.c.l.b16 %v226
  %v248 = vunpack.c.h.b16 %v226
  %v249 = vunpack.c.l.b16 %v227
  %v250 = vunpack.c.h.b16 %v227
  %v251 = vunpack.c.l.b16 %v228
  %v252 = vunpack.c.h.b16 %v228
  %v253 = vpack.c.b16 %v237, %v237
  %v254 = vpack.c.b16 %v238, %v238
  %v255 = vpack.c.b16 %v239, %v239
  %v256 = vpack.c.b16 %v240, %v240
  %v257 = vpack.c.b16 %v241, %v241
  %v258 = vpack.c.b16 %v242, %v242
  %v259 = vpack.c.b16 %v243, %v243
  %v260 = vpack.c.b16 %v244, %v244
  %v261 = vpack.c.b16 %v245, %v245
  %v262 = vpack.c.b16 %v246, %v246
  %v263 = vpack.c.b16 %v247, %v247
  %v264 = vpack.c.b16 %v248, %v248
  %v265 = vpack.c.b16 %v249, %v249
  %v266 = vpack.c.b16 %v250, %v250
  %v267 = vpack.c.b16 %v251, %v251
  %v268 = vpack.c.b16 %v252, %v252
  %285 = vst [vmem:[%s2] sm:$0xf] %v253
  %286 = vst [vmem:[%s2 + $0x4] sm:$0xf] %v254
  %287 = vst [vmem:[%s2 + $0x8] sm:$0xf] %v255
  %288 = vst [vmem:[%s2 + $0xc] sm:$0xf] %v256
  %289 = vst [vmem:[%s2 + $0x10] sm:$0xf] %v257
  %290 = vst [vmem:[%s2 + $0x14] sm:$0xf] %v258
  %291 = vst [vmem:[%s2 + $0x18] sm:$0xf] %v259
  %292 = vst [vmem:[%s2 + $0x1c] sm:$0xf] %v260
  %293 = vst [vmem:[%s2 + $0x20] sm:$0xf] %v261
  %294 = vst [vmem:[%s2 + $0x24] sm:$0xf] %v262
  %295 = vst [vmem:[%s2 + $0x28] sm:$0xf] %v263
  %296 = vst [vmem:[%s2 + $0x2c] sm:$0xf] %v264
  %297 = vst [vmem:[%s2 + $0x30] sm:$0xf] %v265
  %298 = vst [vmem:[%s2 + $0x34] sm:$0xf] %v266
  %299 = vst [vmem:[%s2 + $0x38] sm:$0xf] %v267
  %300 = vst [vmem:[%s2 + $0x3c] sm:$0xf] %v268
  %v301 = vadd.f32 %v159, %v162
  %v302 = vadd.f32 %v301, %v167
  %v303 = vadd.f32 %v302, %v170
  %v304 = vadd.f32 %v303, %v175
  %v305 = vadd.f32 %v304, %v178
  %v306 = vadd.f32 %v305, %v183
  %v307 = vadd.f32 %v306, %v186
  %v308 = vadd.f32 %v307, %v191
  %v309 = vadd.f32 %v308, %v194
  %v310 = vadd.f32 %v309, %v199
  %v311 = vadd.f32 %v310, %v202
  %v312 = vadd.f32 %v311, %v207
  %v313 = vadd.f32 %v312, %v210
  %v314 = vadd.f32 %v313, %v215
  %v315 = vadd.f32 %v314, %v218
  %v316 = vrot.slane %v315, 4
  %v317 = vadd.f32 %v315, %v316
  %v318 = vrot.slane %v317, 2
  %v319 = vadd.f32 %v317, %v318
  %v320 = vrot.slane %v319, 1
  %v321 = vadd.f32 %v319, %v320
  %v322 = vmul.f32 %v159, %v159
  %v323 = vmul.f32 %v162, %v162
  %v324 = vmul.f32 %v167, %v167
  %v325 = vmul.f32 %v170, %v170
  %v326 = vmul.f32 %v175, %v175
  %v327 = vmul.f32 %v178, %v178
  %v328 = vmul.f32 %v183, %v183
  %v329 = vmul.f32 %v186, %v186
  %v330 = vmul.f32 %v191, %v191
  %v331 = vmul.f32 %v194, %v194
  %v332 = vmul.f32 %v199, %v199
  %v333 = vmul.f32 %v202, %v202
  %v334 = vmul.f32 %v207, %v207
  %v335 = vmul.f32 %v210, %v210
  %v336 = vmul.f32 %v215, %v215
  %v337 = vmul.f32 %v218, %v218
  %v338 = vadd.f32 %v322, %v323
  %v339 = vadd.f32 %v338, %v324
  %v340 = vadd.f32 %v339, %v325
  %v341 = vadd.f32 %v340, %v326
  %v342 = vadd.f32 %v341, %v327
  %v343 = vadd.f32 %v342, %v328
  %v344 = vadd.f32 %v343, %v329
  %v345 = vadd.f32 %v344, %v330
  %v346 = vadd.f32 %v345, %v331
  %v347 = vadd.f32 %v346, %v332
  %v348 = vadd.f32 %v347, %v333
  %v349 = vadd.f32 %v348, %v334
  %v350 = vadd.f32 %v349, %v335
  %v351 = vadd.f32 %v350, %v336
  %v352 = vadd.f32 %v351, %v337
  %v353 = vrot.slane %v352, 4
  %v354 = vadd.f32 %v352, %v353
  %v355 = vrot.slane %v354, 2
  %v356 = vadd.f32 %v354, %v355
  %v357 = vrot.slane %v356, 1
  %v358 = vadd.f32 %v356, %v357
  %vm359 = vcmask 1040384
  %v360 = vsel %vm359, %v321, %v358
  %v361 = vsel %vm120, %v360, 0.0
  %v362 = vld [vmem:[%s3] sm:$0xff]
  %v363 = vadd.f32 %v362, %v361
  %364 = vst [vmem:[%s3] sm:$0xff] %v363
  // Predicated region
  $region14: #{restnet_down_block.4} parent=0 // pred_check
    _
  $region15: #{restnet_down_block.4} parent=0 // pred_check_branch
    %366 = sbr.rel (0) target = $region17
  $region16: #{restnet_down_block.4} parent=0 // pred_region
    _
  $region17: #{restnet_down_block.4} parent=0 // pred_fallthru
    _
  // Predicated region
  $region18: #{restnet_down_block.4} parent=0 // pred_check
    _
  $region19: #{restnet_down_block.4} parent=0 // pred_check_branch
    %368 = sbr.rel (0) target = $region21
  $region20: #{restnet_down_block.4} parent=0 // pred_region
    _
  $region21: #{restnet_down_block.4} parent=0 // pred_fallthru
    _
  // Predicated region
  $region22: #{restnet_down_block.4} parent=0 // pred_check
    _
  $region23: #{restnet_down_block.4} parent=0 // pred_check_branch
    %370 = sbr.rel (0) target = $region25
  $region24: #{restnet_down_block.4} parent=0 // pred_region
    _
  $region25: #{restnet_down_block.4} parent=0 // pred_fallthru
    _
  // Predicated region
  $region26: #{restnet_down_block.4} parent=0 // pred_check
    _
  $region27: #{restnet_down_block.4} parent=0 // pred_check_branch
    %372 = sbr.rel (0) target = $region29
  $region28: #{restnet_down_block.4} parent=0 // pred_region
    _
  $region29: #{restnet_down_block.4} parent=0 // pred_fallthru
    _

// kernel: restnet_down_block.7
$region0: #{restnet_down_block.7}
  #allocation0 [shape = 'u32[]', space=smem, size = 0x4, offset = 0x4, fixed_abs, tag = 'smem constant byte address 0x4 - core index']
  #allocation1 [shape = 'u32[144,128]{1,0:T(1,128)}', space=vmem, size = 0x12000, scoped, tag = 'internal scratch']
  %s0 = inlined_call_operand.vmem [shape: bf16[2,64,128], index: 0, kind: input, shape index: {}]
  %s1 = inlined_call_operand.vmem [shape: f32[8,128], index: 1, kind: input, shape index: {}]
  %s2 = inlined_call_operand.vmem [shape: bf16[2,64,128], index: 2, kind: input, shape index: {}]
  %s3 = inlined_call_operand.vmem [shape: bf16[128,128], index: 3, kind: input, shape index: {}]
  %s4 = inlined_call_operand.vmem [shape: f32[2,64,128], index: 4, kind: output, shape index: {}]
  %s5 = sld [smem:[#allocation0]]
  $region49: #{restnet_down_block.7} parent=0
    _
  %s7 = ssub.s32 1, %s5
  %s8 = scalar_select 0, %s7, %s5
  loop: start=0, step=1, limit=4
  $region2: #{restnet_down_block.7} parent=0 // loop_pre_header
    _
  $region3: #{restnet_down_block.7} parent=0 // loop_header
    %s10 = sphi 0, %s14
    %p11 = scmp.ge.s32.totalorder %s10, 4
    %s20 = sphi 0, %s22
    %s23 = sphi 0, %s20
    %s24 = sphi 0, %s23
    %s40 = sphi 0, %s24
    %s44 = sphi 0, %s44
    %s46 = sphi 0, %s44
    %s47 = sphi 0, %s46
    %s61 = sphi 0, %s47
    %s67 = sphi 0, %s69
    %s70 = sphi 0, %s67
    %s71 = sphi 0, %s70
    %s87 = sphi 0, %s71
    %s91 = sphi 0, %s91
    %s93 = sphi 0, %s91
    %s94 = sphi 0, %s93
    %s108 = sphi 0, %s94
    %s114 = sphi 0, %s116
    %s117 = sphi 0, %s114
    %s118 = sphi 0, %s117
    %s134 = sphi 0, %s118
  $region4: #{restnet_down_block.7} parent=0 // loop_header_branch
    %13 = sbr.rel (%p11) target = $region8
  $region5: #{restnet_down_block.7} parent=0 // loop_body
    %s15 = ssub.s32 %s10, 1
    %s16 = ssub.s32 %s10, 2
    %s17 = sadd.s32 %s10, 1
    %s18 = ssub.s32 %s10, %s17
    %p19 = scmp.eq.s32.totalorder %s18, 0
    %s21 = sadd.s32 %s20, 1
    %s22 = scalar_select %p19, %s20, %s21
    %p25 = pneg %p19
    %p26 = scmp.eq.s32.totalorder %s10, 1
    %p27 = por %p25, %p26
    %p28 = scmp.ne.s32.totalorder %s20, %s23
    %p29 = scmp.eq.s32.totalorder %s10, 0
    %p30 = por %p28, %p29
    %p31 = scmp.ne.s32.totalorder %s20, %s23
    %p32 = scmp.eq.s32.totalorder %s15, 1
    %p33 = por %p31, %p32
    %p34 = scmp.ne.s32.totalorder %s23, %s24
    %p35 = scmp.eq.s32.totalorder %s15, 0
    %p36 = por %p34, %p35
    %p37 = scmp.ne.s32.totalorder %s23, %s24
    %p38 = scmp.eq.s32.totalorder %s16, 1
    %p39 = por %p37, %p38
    %p41 = scmp.ne.s32.totalorder %s24, %s40
    %p42 = scmp.eq.s32.totalorder %s16, 0
    %p43 = por %p41, %p42
    %s45 = sadd.s32 %s44, 1
    %p48 = scmp.eq.s32.totalorder %s10, 1
    %p49 = scmp.ne.s32.totalorder %s44, %s46
    %p50 = scmp.eq.s32.totalorder %s10, 0
    %p51 = por %p49, %p50
    %p52 = scmp.ne.s32.totalorder %s44, %s46
    %p53 = scmp.eq.s32.totalorder %s15, 1
    %p54 = por %p52, %p53
    %p55 = scmp.ne.s32.totalorder %s46, %s47
    %p56 = scmp.eq.s32.totalorder %s15, 0
    %p57 = por %p55, %p56
    %p58 = scmp.ne.s32.totalorder %s46, %s47
    %p59 = scmp.eq.s32.totalorder %s16, 1
    %p60 = por %p58, %p59
    %p62 = scmp.ne.s32.totalorder %s47, %s61
    %p63 = scmp.eq.s32.totalorder %s16, 0
    %p64 = por %p62, %p63
    %s65 = ssub.s32 %s10, %s17
    %p66 = scmp.eq.s32.totalorder %s65, 0
    %s68 = sadd.s32 %s67, 1
    %s69 = scalar_select %p66, %s67, %s68
    %p72 = pneg %p66
    %p73 = scmp.eq.s32.totalorder %s10, 1
    %p74 = por %p72, %p73
    %p75 = scmp.ne.s32.totalorder %s67, %s70
    %p76 = scmp.eq.s32.totalorder %s10, 0
    %p77 = por %p75, %p76
    %p78 = scmp.ne.s32.totalorder %s67, %s70
    %p79 = scmp.eq.s32.totalorder %s15, 1
    %p80 = por %p78, %p79
    %p81 = scmp.ne.s32.totalorder %s70, %s71
    %p82 = scmp.eq.s32.totalorder %s15, 0
    %p83 = por %p81, %p82
    %p84 = scmp.ne.s32.totalorder %s70, %s71
    %p85 = scmp.eq.s32.totalorder %s16, 1
    %p86 = por %p84, %p85
    %p88 = scmp.ne.s32.totalorder %s71, %s87
    %p89 = scmp.eq.s32.totalorder %s16, 0
    %p90 = por %p88, %p89
    %s92 = sadd.s32 %s91, 1
    %p95 = scmp.eq.s32.totalorder %s10, 1
    %p96 = scmp.ne.s32.totalorder %s91, %s93
    %p97 = scmp.eq.s32.totalorder %s10, 0
    %p98 = por %p96, %p97
    %p99 = scmp.ne.s32.totalorder %s91, %s93
    %p100 = scmp.eq.s32.totalorder %s15, 1
    %p101 = por %p99, %p100
    %p102 = scmp.ne.s32.totalorder %s93, %s94
    %p103 = scmp.eq.s32.totalorder %s15, 0
    %p104 = por %p102, %p103
    %p105 = scmp.ne.s32.totalorder %s93, %s94
    %p106 = scmp.eq.s32.totalorder %s16, 1
    %p107 = por %p105, %p106
    %p109 = scmp.ne.s32.totalorder %s94, %s108
    %p110 = scmp.eq.s32.totalorder %s16, 0
    %p111 = por %p109, %p110
    %s112 = ssub.s32 %s10, %s17
    %p113 = scmp.eq.s32.totalorder %s112, 0
    %s115 = sadd.s32 %s114, 1
    %s116 = scalar_select %p113, %s114, %s115
    %p119 = pneg %p113
    %p120 = scmp.eq.s32.totalorder %s10, 1
    %p121 = por %p119, %p120
    %p122 = scmp.ne.s32.totalorder %s114, %s117
    %p123 = scmp.eq.s32.totalorder %s10, 0
    %p124 = por %p122, %p123
    %p125 = scmp.ne.s32.totalorder %s114, %s117
    %p126 = scmp.eq.s32.totalorder %s15, 1
    %p127 = por %p125, %p126
    %p128 = scmp.ne.s32.totalorder %s117, %s118
    %p129 = scmp.eq.s32.totalorder %s15, 0
    %p130 = por %p128, %p129
    %p131 = scmp.ne.s32.totalorder %s117, %s118
    %p132 = scmp.eq.s32.totalorder %s16, 1
    %p133 = por %p131, %p132
    %p135 = scmp.ne.s32.totalorder %s118, %s134
    %p136 = scmp.eq.s32.totalorder %s16, 0
    %p137 = por %p135, %p136
    %p138 = scmp.le.s32.totalorder 1, %s10
    %p139 = scmp.lt.s32.totalorder %s10, 3
    %p140 = pnand %p138, %p139
    %p141 = pneg %p140
    // Predicated region
    $region9: #{restnet_down_block.7} parent=5 // pred_check
      _
    $region10: #{restnet_down_block.7} parent=5 // pred_check_branch
      %143 = sbr.rel (%p140) target = $region12
    $region11: #{restnet_down_block.7} parent=5 // pred_region
      %s144 = ssub.s32 %s10, 1
      // Predicated region
      $region13: #{restnet_down_block.7} parent=11 // pred_check
        %p145 = pneg %p57
      $region14: #{restnet_down_block.7} parent=11 // pred_check_branch
        %147 = sbr.rel (%p145) target = $region16
      $region15: #{restnet_down_block.7} parent=11 // pred_region
        _
      $region16: #{restnet_down_block.7} parent=11 // pred_fallthru
        _
      // Predicated region
      $region17: #{restnet_down_block.7} parent=11 // pred_check
        %p148 = pneg %p104
      $region18: #{restnet_down_block.7} parent=11 // pred_check_branch
        %150 = sbr.rel (%p148) target = $region20
      $region19: #{restnet_down_block.7} parent=11 // pred_region
        _
      $region20: #{restnet_down_block.7} parent=11 // pred_fallthru
        _
    $region12: #{restnet_down_block.7} parent=5 // pred_fallthru
      _
    %p151 = scmp.lt.s32.totalorder %s10, 2
    // Predicated region
    $region21: #{restnet_down_block.7} parent=5 // pred_check
      %p152 = pneg %p151
    $region22: #{restnet_down_block.7} parent=5 // pred_check_branch
      %154 = sbr.rel (%p152) target = $region24
    $region23: #{restnet_down_block.7} parent=5 // pred_region
      // Predicated region
      $region25: #{restnet_down_block.7} parent=23 // pred_check
        %p155 = pneg %p30
      $region26: #{restnet_down_block.7} parent=23 // pred_check_branch
        %157 = sbr.rel (%p155) target = $region28
      $region27: #{restnet_down_block.7} parent=23 // pred_region
        %p158 = scmp.lt.s32.totalorder %s10, 1
        %s159 = scalar_select %p158, %s10, 1
        %s160 = smul.addr %s159, 8
        %s161 = smul.addr %s160, 4
        %s162 = scalar_lea.vmem %s0, %s161
      $region28: #{restnet_down_block.7} parent=23 // pred_fallthru
        _
      // Predicated region
      $region29: #{restnet_down_block.7} parent=23 // pred_check
        %p163 = pneg %p77
      $region30: #{restnet_down_block.7} parent=23 // pred_check_branch
        %165 = sbr.rel (%p163) target = $region32
      $region31: #{restnet_down_block.7} parent=23 // pred_region
        %p166 = scmp.lt.s32.totalorder %s10, 1
        %s167 = scalar_select %p166, %s10, 1
        %s168 = smul.addr %s167, 8
        %s169 = smul.addr %s168, 4
        %s170 = scalar_lea.vmem %s2, %s169
      $region32: #{restnet_down_block.7} parent=23 // pred_fallthru
        _
    $region24: #{restnet_down_block.7} parent=5 // pred_fallthru
      _
    %p171 = scmp.le.s32.totalorder 1, %s10
    %p172 = scmp.lt.s32.totalorder %s10, 3
    %p173 = pnand %p171, %p172
    %p174 = pneg %p173
    // Predicated region
    $region33: #{restnet_down_block.7} parent=5 // pred_check
      _
    $region34: #{restnet_down_block.7} parent=5 // pred_check_branch
      %176 = sbr.rel (%p173) target = $region36
    $region35: #{restnet_down_block.7} parent=5 // pred_region
      %s177 = ssub.s32 %s10, 1
      %p178 = scmp.lt.s32.totalorder %s15, 1
      %s179 = scalar_select %p178, %s15, 1
      %s180 = smul.addr %s179, 8
      %s181 = smul.addr %s180, 4
      %s182 = scalar_lea.vmem %s0, %s181
      %p183 = pneg %p36
      %p184 = pneg %p33
      %p185 = pneg %p57
      %p186 = pneg %p54
      %p187 = scmp.lt.s32.totalorder %s15, 1
      %s188 = scalar_select %p187, %s15, 1
      %s189 = smul.addr %s188, 8
      %s190 = smul.addr %s189, 4
      %s191 = scalar_lea.vmem %s2, %s190
      %p192 = pneg %p83
      %p193 = pneg %p80
      %p194 = pneg %p104
      %p195 = pneg %p101
      %p196 = pneg %p130
      %p197 = pneg %p127
      %p198 = scmp.lt.s32.totalorder %s15, 1
      %s199 = scalar_select %p198, %s15, 1
      %s200 = smul.addr %s199, 8
      %s201 = smul.addr %s200, 8
      %s202 = scalar_lea.vmem %s4, %s201
      %p203 = scmp.lt.s32.totalorder %s15, 1
      %s204 = scalar_select %p203, %s15, 1
      %s205 = smul.addr %s204, 8
      %s206 = smul.addr %s205, 4
      %s207 = scalar_lea.vmem %s0, %s206
      %p208 = scmp.lt.s32.totalorder %s15, 1
      %s209 = scalar_select %p208, %s15, 1
      %s210 = smul.addr %s209, 8
      %s211 = smul.addr %s210, 4
      %s212 = scalar_lea.vmem %s2, %s211
      %p213 = scmp.lt.s32.totalorder %s15, 1
      %s214 = scalar_select %p213, %s15, 1
      %s215 = smul.addr %s214, 8
      %s216 = smul.addr %s215, 8
      %s217 = scalar_lea.vmem %s4, %s216
      %v219 = vld [vmem:[%s207] sm:$0xf]
      %v220 = vld [vmem:[%s207 + $0x4] sm:$0xf]
      %v221 = vld [vmem:[%s207 + $0x8] sm:$0xf]
      %v222 = vld [vmem:[%s207 + $0xc] sm:$0xf]
      %v223 = vld [vmem:[%s207 + $0x10] sm:$0xf]
      %v224 = vld [vmem:[%s207 + $0x14] sm:$0xf]
      %v225 = vld [vmem:[%s207 + $0x18] sm:$0xf]
      %v226 = vld [vmem:[%s207 + $0x1c] sm:$0xf]
      %v227 = vunpack.c.l.bf16 %v219
      %v228 = vunpack.c.l.bf16 %v220
      %v229 = vunpack.c.l.bf16 %v221
      %v230 = vunpack.c.l.bf16 %v222
      %v231 = vunpack.c.l.bf16 %v223
      %v232 = vunpack.c.l.bf16 %v224
      %v233 = vunpack.c.l.bf16 %v225
      %v234 = vunpack.c.l.bf16 %v226
      %v235 = vld [vmem:[%s212] sm:$0xf]
      %v236 = vld [vmem:[%s212 + $0x4] sm:$0xf]
      %v237 = vld [vmem:[%s212 + $0x8] sm:$0xf]
      %v238 = vld [vmem:[%s212 + $0xc] sm:$0xf]
      %v239 = vld [vmem:[%s212 + $0x10] sm:$0xf]
      %v240 = vld [vmem:[%s212 + $0x14] sm:$0xf]
      %v241 = vld [vmem:[%s212 + $0x18] sm:$0xf]
      %v242 = vld [vmem:[%s212 + $0x1c] sm:$0xf]
      %v243 = vld [vmem:[%s3] sm:$0xf]
      %v244 = vld [vmem:[%s3 + $0x4] sm:$0xf]
      %v245 = vld [vmem:[%s3 + $0x8] sm:$0xf]
      %v246 = vld [vmem:[%s3 + $0xc] sm:$0xf]
      %v247 = vld [vmem:[%s3 + $0x10] sm:$0xf]
      %v248 = vld [vmem:[%s3 + $0x14] sm:$0xf]
      %v249 = vld [vmem:[%s3 + $0x18] sm:$0xf]
      %v250 = vld [vmem:[%s3 + $0x1c] sm:$0xf]
      %v251 = vld [vmem:[%s3 + $0x20] sm:$0xf]
      %v252 = vld [vmem:[%s3 + $0x24] sm:$0xf]
      %v253 = vld [vmem:[%s3 + $0x28] sm:$0xf]
      %v254 = vld [vmem:[%s3 + $0x2c] sm:$0xf]
      %v255 = vld [vmem:[%s3 + $0x30] sm:$0xf]
      %v256 = vld [vmem:[%s3 + $0x34] sm:$0xf]
      %v257 = vld [vmem:[%s3 + $0x38] sm:$0xf]
      %v258 = vld [vmem:[%s3 + $0x3c] sm:$0xf]
      %v267 = vunpack.c.l.b16 %v235
      %v268 = vunpack.c.l.b16 %v236
      %v269 = vunpack.c.l.b16 %v237
      %v270 = vunpack.c.l.b16 %v238
      %v271 = vunpack.c.l.b16 %v239
      %v272 = vunpack.c.l.b16 %v240
      %v273 = vunpack.c.l.b16 %v241
      %v274 = vunpack.c.l.b16 %v242
      %v275 = vpack.c.b16 %v268, %v267
      %v276 = vpack.c.b16 %v270, %v269
      %v277 = vpack.c.b16 %v272, %v271
      %v278 = vpack.c.b16 %v274, %v273
      %v299 = vunpack.c.l.b16 %v243
      %v300 = vunpack.c.l.b16 %v244
      %v301 = vunpack.c.l.b16 %v245
      %v302 = vunpack.c.l.b16 %v246
      %v303 = vunpack.c.l.b16 %v247
      %v304 = vunpack.c.l.b16 %v248
      %v305 = vunpack.c.l.b16 %v249
      %v306 = vunpack.c.l.b16 %v250
      %v307 = vunpack.c.l.b16 %v251
      %v308 = vunpack.c.l.b16 %v252
      %v309 = vunpack.c.l.b16 %v253
      %v310 = vunpack.c.l.b16 %v254
      %v311 = vunpack.c.l.b16 %v255
      %v312 = vunpack.c.l.b16 %v256
      %v313 = vunpack.c.l.b16 %v257
      %v314 = vunpack.c.l.b16 %v258
      %v315 = vpack.c.b16 %v300, %v299
      %v316 = vpack.c.b16 %v302, %v301
      %v317 = vpack.c.b16 %v304, %v303
      %v318 = vpack.c.b16 %v306, %v305
      %v319 = vpack.c.b16 %v308, %v307
      %v320 = vpack.c.b16 %v310, %v309
      %v321 = vpack.c.b16 %v312, %v311
      %v322 = vpack.c.b16 %v314, %v313
      %331 = vmatprep.subr.bf16.mxu0 0
      %332 = vmatpush1.bf16.msra.mxu0 %v315
      %333 = vmatprep.subr.bf16.mxu0 0
      %334 = vmatpush1.bf16.msra.mxu0 %v316
      %335 = vmatprep.subr.bf16.mxu0 0
      %336 = vmatpush1.bf16.msra.mxu0 %v317
      %337 = vmatprep.subr.bf16.mxu0 0
      %338 = vmatpush1.bf16.msra.mxu0 %v318
      %339 = vmatprep.subr.bf16.mxu0 0
      %340 = vmatpush1.bf16.msra.mxu0 %v319
      %341 = vmatprep.subr.bf16.mxu0 0
      %342 = vmatpush1.bf16.msra.mxu0 %v320
      %343 = vmatprep.subr.bf16.mxu0 0
      %344 = vmatpush1.bf16.msra.mxu0 %v321
      %345 = vmatprep.subr.bf16.mxu0 0
      %346 = vmatpush1.bf16.msra.mxu0 %v322
      %347 = vmatprep.subr.bf16.mxu0 0
      %348 = vmatpush1.bf16.msra.mxu0 0
      %349 = vmatprep.subr.bf16.mxu0 0
      %350 = vmatpush1.bf16.msra.mxu0 0
      %351 = vmatprep.subr.bf16.mxu0 0
      %352 = vmatpush1.bf16.msra.mxu0 0
      %353 = vmatprep.subr.bf16.mxu0 0
      %354 = vmatpush1.bf16.msra.mxu0 0
      %355 = vmatprep.subr.bf16.mxu0 0
      %356 = vmatpush1.bf16.msra.mxu0 0
      %357 = vmatprep.subr.bf16.mxu0 0
      %358 = vmatpush1.bf16.msra.mxu0 0
      %359 = vmatprep.subr.bf16.mxu0 0
      %360 = vmatpush1.bf16.msra.mxu0 0
      %361 = vmatprep.subr.bf16.mxu0 0
      %362 = vmatpush1.bf16.msra.mxu0 0
      %363 = vmatprep.mubr.bf16.mxu0 0
      %364 = vmatmul.mubr.bf16.gmra.mrb[0].mxu0 %v275
      %v365 = vpop.f32.mrb[0].mxu0
      %v366 = vadd.f32 0.0, %v365
      %v367 = vpop.f32.mrb[0].mxu0
      %v368 = vpop.f32.mrb[0].mxu0
      %v369 = vadd.f32 0.0, %v368
      %v370 = vpop.f32.mrb[0].mxu0
      %371 = vmatprep.mubr.bf16.mxu0 0
      %372 = vmatmul.mubr.bf16.gmra.mrb[0].mxu0 %v276
      %v373 = vpop.f32.mrb[0].mxu0
      %v374 = vadd.f32 0.0, %v373
      %v375 = vpop.f32.mrb[0].mxu0
      %v376 = vpop.f32.mrb[0].mxu0
      %v377 = vadd.f32 0.0, %v376
      %v378 = vpop.f32.mrb[0].mxu0
      %379 = vmatprep.mubr.bf16.mxu0 0
      %380 = vmatmul.mubr.bf16.gmra.mrb[0].mxu0 %v277
      %v381 = vpop.f32.mrb[0].mxu0
      %v382 = vadd.f32 0.0, %v381
      %v383 = vpop.f32.mrb[0].mxu0
      %v384 = vpop.f32.mrb[0].mxu0
      %v385 = vadd.f32 0.0, %v384
      %v386 = vpop.f32.mrb[0].mxu0
      %387 = vmatprep.mubr.bf16.mxu0 0
      %388 = vmatmul.mubr.bf16.gmra.mrb[0].mxu0 %v278
      %v389 = vpop.f32.mrb[0].mxu0
      %v390 = vadd.f32 0.0, %v389
      %v391 = vpop.f32.mrb[0].mxu0
      %v392 = vpop.f32.mrb[0].mxu0
      %v393 = vadd.f32 0.0, %v392
      %v394 = vpop.f32.mrb[0].mxu0
      %395 = vdwg.mxu0
      %v396 = vld [vmem:[%s1] sm:$0x1]
      %v397 = vlaneseq
      %v398 = vshrl.u32 %v397, 7
      %v399 = vsub.s32 0, %v398
      %v400 = vrot.slane %v396, %v399
      %v401 = vmul.f32 %v227, %v400
      %v402 = vmul.f32 %v228, %v400
      %v403 = vmul.f32 %v229, %v400
      %v404 = vmul.f32 %v230, %v400
      %v405 = vmul.f32 %v231, %v400
      %v406 = vmul.f32 %v232, %v400
      %v407 = vmul.f32 %v233, %v400
      %v408 = vmul.f32 %v234, %v400
      %v409 = vld [vmem:[%s1 + $0x1] sm:$0x1]
      %v410 = vlaneseq
      %v411 = vshrl.u32 %v410, 7
      %v412 = vsub.s32 0, %v411
      %v413 = vrot.slane %v409, %v412
      %v414 = vadd.f32 %v401, %v413
      %v415 = vadd.f32 %v402, %v413
      %v416 = vadd.f32 %v403, %v413
      %v417 = vadd.f32 %v404, %v413
      %v418 = vadd.f32 %v405, %v413
      %v419 = vadd.f32 %v406, %v413
      %v420 = vadd.f32 %v407, %v413
      %v421 = vadd.f32 %v408, %v413
      %v422 = vld [vmem:[%s1 + $0x2] sm:$0x1]
      %v423 = vlaneseq
      %v424 = vshrl.u32 %v423, 7
      %v425 = vsub.s32 0, %v424
      %v426 = vrot.slane %v422, %v425
      %v427 = vmul.f32 %v366, %v426
      %v428 = vmul.f32 %v369, %v426
      %v429 = vmul.f32 %v374, %v426
      %v430 = vmul.f32 %v377, %v426
      %v431 = vmul.f32 %v382, %v426
      %v432 = vmul.f32 %v385, %v426
      %v433 = vmul.f32 %v390, %v426
      %v434 = vmul.f32 %v393, %v426
      %v435 = vadd.f32 %v414, %v427
      %v436 = vadd.f32 %v415, %v428
      %v437 = vadd.f32 %v416, %v429
      %v438 = vadd.f32 %v417, %v430
      %v439 = vadd.f32 %v418, %v431
      %v440 = vadd.f32 %v419, %v432
      %v441 = vadd.f32 %v420, %v433
      %v442 = vadd.f32 %v421, %v434
      %v443 = vld [vmem:[%s1 + $0x3] sm:$0x1]
      %v444 = vlaneseq
      %v445 = vshrl.u32 %v444, 7
      %v446 = vsub.s32 0, %v445
      %v447 = vrot.slane %v443, %v446
      %v448 = vadd.f32 %v435, %v447
      %v449 = vadd.f32 %v436, %v447
      %v450 = vadd.f32 %v437, %v447
      %v451 = vadd.f32 %v438, %v447
      %v452 = vadd.f32 %v439, %v447
      %v453 = vadd.f32 %v440, %v447
      %v454 = vadd.f32 %v441, %v447
      %v455 = vadd.f32 %v442, %v447
      %v456 = vmax.f32 %v448, 0.0
      %v457 = vmax.f32 %v449, 0.0
      %v458 = vmax.f32 %v450, 0.0
      %v459 = vmax.f32 %v451, 0.0
      %v460 = vmax.f32 %v452, 0.0
      %v461 = vmax.f32 %v453, 0.0
      %v462 = vmax.f32 %v454, 0.0
      %v463 = vmax.f32 %v455, 0.0
      %464 = vst [vmem:[%s217] sm:$0xff] %v456
      %465 = vst [vmem:[%s217 + $0x8] sm:$0xff] %v457
      %466 = vst [vmem:[%s217 + $0x10] sm:$0xff] %v458
      %467 = vst [vmem:[%s217 + $0x18] sm:$0xff] %v459
      %468 = vst [vmem:[%s217 + $0x20] sm:$0xff] %v460
      %469 = vst [vmem:[%s217 + $0x28] sm:$0xff] %v461
      %470 = vst [vmem:[%s217 + $0x30] sm:$0xff] %v462
      %471 = vst [vmem:[%s217 + $0x38] sm:$0xff] %v463
      %p472 = scmp.lt.s32.totalorder %s15, 1
      %s473 = scalar_select %p472, %s15, 1
      %s474 = smul.addr %s473, 8
      %s475 = smul.addr %s474, 8
      %s476 = scalar_lea.vmem %s4, %s475
      // Predicated region
      $region37: #{restnet_down_block.7} parent=35 // pred_check
        %p477 = pneg %p127
      $region38: #{restnet_down_block.7} parent=35 // pred_check_branch
        %479 = sbr.rel (%p477) target = $region40
      $region39: #{restnet_down_block.7} parent=35 // pred_region
        _
      $region40: #{restnet_down_block.7} parent=35 // pred_fallthru
        _
    $region36: #{restnet_down_block.7} parent=5 // pred_fallthru
      _
    %p480 = scmp.le.s32.totalorder 2, %s10
    // Predicated region
    $region41: #{restnet_down_block.7} parent=5 // pred_check
      %p481 = pneg %p480
    $region42: #{restnet_down_block.7} parent=5 // pred_check_branch
      %483 = sbr.rel (%p481) target = $region44
    $region43: #{restnet_down_block.7} parent=5 // pred_region
      %s484 = ssub.s32 %s10, 2
      // Predicated region
      $region45: #{restnet_down_block.7} parent=43 // pred_check
        %p485 = pneg %p133
      $region46: #{restnet_down_block.7} parent=43 // pred_check_branch
        %487 = sbr.rel (%p485) target = $region48
      $region47: #{restnet_down_block.7} parent=43 // pred_region
        %p488 = scmp.lt.s32.totalorder %s16, 1
        %s489 = scalar_select %p488, %s16, 1
        %s490 = smul.addr %s489, 8
        %s491 = smul.addr %s490, 8
        %s492 = scalar_lea.vmem %s4, %s491
      $region48: #{restnet_down_block.7} parent=43 // pred_fallthru
        _
    $region44: #{restnet_down_block.7} parent=5 // pred_fallthru
      _
  $region6: #{restnet_down_block.7} parent=0 // loop_footer
    %s14 = sadd.s32 1, %s10
  $region7: #{restnet_down_block.7} parent=0 // loop_footer_branch
    %9 = sbr.rel target = $region3
  $region8: #{restnet_down_block.7} parent=0 // loop_exit
    _

// kernel: restnet_down_block.6
$region0: #{restnet_down_block.6}
  #allocation0 [shape = 'u32[]', space=smem, size = 0x4, offset = 0x4, fixed_abs, tag = 'smem constant byte address 0x4 - core index']
  #allocation1 [shape = 'u32[144,128]{1,0:T(1,128)}', space=vmem, size = 0x12000, scoped, tag = 'internal scratch']
  %s0 = inlined_call_operand.vmem [shape: bf16[2,10,10,128], index: 0, kind: input, shape index: {}]
  %s1 = inlined_call_operand.vmem [shape: bf16[9,128,128], index: 1, kind: input, shape index: {}]
  %s2 = inlined_call_operand.vmem [shape: bf16[2,64,128], index: 2, kind: input, shape index: {}]
  %s3 = inlined_call_operand.vmem [shape: bf16[128,128], index: 3, kind: input, shape index: {}]
  %s4 = inlined_call_operand.vmem [shape: bf16[2,64,128], index: 4, kind: output, shape index: {0}]
  %s5 = inlined_call_operand.vmem [shape: f32[8,128], index: 5, kind: output, shape index: {1}]
  %6 = xla_tuple %s4, %s5
  %s7 = sld [smem:[#allocation0]]
  $region61: #{restnet_down_block.6} parent=0
    _
  %s9 = ssub.s32 1, %s7
  %s10 = scalar_select 0, %s9, %s7
  loop: start=0, step=1, limit=4
  $region2: #{restnet_down_block.6} parent=0 // loop_pre_header
    _
  $region3: #{restnet_down_block.6} parent=0 // loop_header
    %s12 = sphi 0, %s16
    %p13 = scmp.ge.s32.totalorder %s12, 4
    %s22 = sphi 0, %s24
    %s25 = sphi 0, %s22
    %s26 = sphi 0, %s25
    %s42 = sphi 0, %s26
    %s46 = sphi 0, %s46
    %s48 = sphi 0, %s46
    %s49 = sphi 0, %s48
    %s63 = sphi 0, %s49
    %s69 = sphi 0, %s71
    %s72 = sphi 0, %s69
    %s73 = sphi 0, %s72
    %s89 = sphi 0, %s73
    %s93 = sphi 0, %s93
    %s95 = sphi 0, %s93
    %s96 = sphi 0, %s95
    %s110 = sphi 0, %s96
    %s116 = sphi 0, %s118
    %s119 = sphi 0, %s116
    %s120 = sphi 0, %s119
    %s136 = sphi 0, %s120
    %s140 = sphi 0, %s140
    %s142 = sphi 0, %s140
    %s143 = sphi 0, %s142
    %s157 = sphi 0, %s143
  $region4: #{restnet_down_block.6} parent=0 // loop_header_branch
    %15 = sbr.rel (%p13) target = $region8
  $region5: #{restnet_down_block.6} parent=0 // loop_body
    %s17 = ssub.s32 %s12, 1
    %s18 = ssub.s32 %s12, 2
    %s19 = sadd.s32 %s12, 1
    %s20 = ssub.s32 %s12, %s19
    %p21 = scmp.eq.s32.totalorder %s20, 0
    %s23 = sadd.s32 %s22, 1
    %s24 = scalar_select %p21, %s22, %s23
    %p27 = pneg %p21
    %p28 = scmp.eq.s32.totalorder %s12, 1
    %p29 = por %p27, %p28
    %p30 = scmp.ne.s32.totalorder %s22, %s25
    %p31 = scmp.eq.s32.totalorder %s12, 0
    %p32 = por %p30, %p31
    %p33 = scmp.ne.s32.totalorder %s22, %s25
    %p34 = scmp.eq.s32.totalorder %s17, 1
    %p35 = por %p33, %p34
    %p36 = scmp.ne.s32.totalorder %s25, %s26
    %p37 = scmp.eq.s32.totalorder %s17, 0
    %p38 = por %p36, %p37
    %p39 = scmp.ne.s32.totalorder %s25, %s26
    %p40 = scmp.eq.s32.totalorder %s18, 1
    %p41 = por %p39, %p40
    %p43 = scmp.ne.s32.totalorder %s26, %s42
    %p44 = scmp.eq.s32.totalorder %s18, 0
    %p45 = por %p43, %p44
    %s47 = sadd.s32 %s46, 1
    %p50 = scmp.eq.s32.totalorder %s12, 1
    %p51 = scmp.ne.s32.totalorder %s46, %s48
    %p52 = scmp.eq.s32.totalorder %s12, 0
    %p53 = por %p51, %p52
    %p54 = scmp.ne.s32.totalorder %s46, %s48
    %p55 = scmp.eq.s32.totalorder %s17, 1
    %p56 = por %p54, %p55
    %p57 = scmp.ne.s32.totalorder %s48, %s49
    %p58 = scmp.eq.s32.totalorder %s17, 0
    %p59 = por %p57, %p58
    %p60 = scmp.ne.s32.totalorder %s48, %s49
    %p61 = scmp.eq.s32.totalorder %s18, 1
    %p62 = por %p60, %p61
    %p64 = scmp.ne.s32.totalorder %s49, %s63
    %p65 = scmp.eq.s32.totalorder %s18, 0
    %p66 = por %p64, %p65
    %s67 = ssub.s32 %s12, %s19
    %p68 = scmp.eq.s32.totalorder %s67, 0
    %s70 = sadd.s32 %s69, 1
    %s71 = scalar_select %p68, %s69, %s70
    %p74 = pneg %p68
    %p75 = scmp.eq.s32.totalorder %s12, 1
    %p76 = por %p74, %p75
    %p77 = scmp.ne.s32.totalorder %s69, %s72
    %p78 = scmp.eq.s32.totalorder %s12, 0
    %p79 = por %p77, %p78
    %p80 = scmp.ne.s32.totalorder %s69, %s72
    %p81 = scmp.eq.s32.totalorder %s17, 1
    %p82 = por %p80, %p81
    %p83 = scmp.ne.s32.totalorder %s72, %s73
    %p84 = scmp.eq.s32.totalorder %s17, 0
    %p85 = por %p83, %p84
    %p86 = scmp.ne.s32.totalorder %s72, %s73
    %p87 = scmp.eq.s32.totalorder %s18, 1
    %p88 = por %p86, %p87
    %p90 = scmp.ne.s32.totalorder %s73, %s89
    %p91 = scmp.eq.s32.totalorder %s18, 0
    %p92 = por %p90, %p91
    %s94 = sadd.s32 %s93, 1
    %p97 = scmp.eq.s32.totalorder %s12, 1
    %p98 = scmp.ne.s32.totalorder %s93, %s95
    %p99 = scmp.eq.s32.totalorder %s12, 0
    %p100 = por %p98, %p99
    %p101 = scmp.ne.s32.totalorder %s93, %s95
    %p102 = scmp.eq.s32.totalorder %s17, 1
    %p103 = por %p101, %p102
    %p104 = scmp.ne.s32.totalorder %s95, %s96
    %p105 = scmp.eq.s32.totalorder %s17, 0
    %p106 = por %p104, %p105
    %p107 = scmp.ne.s32.totalorder %s95, %s96
    %p108 = scmp.eq.s32.totalorder %s18, 1
    %p109 = por %p107, %p108
    %p111 = scmp.ne.s32.totalorder %s96, %s110
    %p112 = scmp.eq.s32.totalorder %s18, 0
    %p113 = por %p111, %p112
    %s114 = ssub.s32 %s12, %s19
    %p115 = scmp.eq.s32.totalorder %s114, 0
    %s117 = sadd.s32 %s116, 1
    %s118 = scalar_select %p115, %s116, %s117
    %p121 = pneg %p115
    %p122 = scmp.eq.s32.totalorder %s12, 1
    %p123 = por %p121, %p122
    %p124 = scmp.ne.s32.totalorder %s116, %s119
    %p125 = scmp.eq.s32.totalorder %s12, 0
    %p126 = por %p124, %p125
    %p127 = scmp.ne.s32.totalorder %s116, %s119
    %p128 = scmp.eq.s32.totalorder %s17, 1
    %p129 = por %p127, %p128
    %p130 = scmp.ne.s32.totalorder %s119, %s120
    %p131 = scmp.eq.s32.totalorder %s17, 0
    %p132 = por %p130, %p131
    %p133 = scmp.ne.s32.totalorder %s119, %s120
    %p134 = scmp.eq.s32.totalorder %s18, 1
    %p135 = por %p133, %p134
    %p137 = scmp.ne.s32.totalorder %s120, %s136
    %p138 = scmp.eq.s32.totalorder %s18, 0
    %p139 = por %p137, %p138
    %s141 = sadd.s32 %s140, 1
    %p144 = scmp.eq.s32.totalorder %s12, 1
    %p145 = scmp.ne.s32.totalorder %s140, %s142
    %p146 = scmp.eq.s32.totalorder %s12, 0
    %p147 = por %p145, %p146
    %p148 = scmp.ne.s32.totalorder %s140, %s142
    %p149 = scmp.eq.s32.totalorder %s17, 1
    %p150 = por %p148, %p149
    %p151 = scmp.ne.s32.totalorder %s142, %s143
    %p152 = scmp.eq.s32.totalorder %s17, 0
    %p153 = por %p151, %p152
    %p154 = scmp.ne.s32.totalorder %s142, %s143
    %p155 = scmp.eq.s32.totalorder %s18, 1
    %p156 = por %p154, %p155
    %p158 = scmp.ne.s32.totalorder %s143, %s157
    %p159 = scmp.eq.s32.totalorder %s18, 0
    %p160 = por %p158, %p159
    %p161 = scmp.le.s32.totalorder 1, %s12
    %p162 = scmp.lt.s32.totalorder %s12, 3
    %p163 = pnand %p161, %p162
    %p164 = pneg %p163
    // Predicated region
    $region9: #{restnet_down_block.6} parent=5 // pred_check
      _
    $region10: #{restnet_down_block.6} parent=5 // pred_check_branch
      %166 = sbr.rel (%p163) target = $region12
    $region11: #{restnet_down_block.6} parent=5 // pred_region
      %s167 = ssub.s32 %s12, 1
      // Predicated region
      $region13: #{restnet_down_block.6} parent=11 // pred_check
        %p168 = pneg %p59
      $region14: #{restnet_down_block.6} parent=11 // pred_check_branch
        %170 = sbr.rel (%p168) target = $region16
      $region15: #{restnet_down_block.6} parent=11 // pred_region
        _
      $region16: #{restnet_down_block.6} parent=11 // pred_fallthru
        _
      // Predicated region
      $region17: #{restnet_down_block.6} parent=11 // pred_check
        %p171 = pneg %p106
      $region18: #{restnet_down_block.6} parent=11 // pred_check_branch
        %173 = sbr.rel (%p171) target = $region20
      $region19: #{restnet_down_block.6} parent=11 // pred_region
        _
      $region20: #{restnet_down_block.6} parent=11 // pred_fallthru
        _
    $region12: #{restnet_down_block.6} parent=5 // pred_fallthru
      _
    %p174 = scmp.lt.s32.totalorder %s12, 2
    // Predicated region
    $region21: #{restnet_down_block.6} parent=5 // pred_check
      %p175 = pneg %p174
    $region22: #{restnet_down_block.6} parent=5 // pred_check_branch
      %177 = sbr.rel (%p175) target = $region24
    $region23: #{restnet_down_block.6} parent=5 // pred_region
      // Predicated region
      $region25: #{restnet_down_block.6} parent=23 // pred_check
        %p178 = pneg %p32
      $region26: #{restnet_down_block.6} parent=23 // pred_check_branch
        %180 = sbr.rel (%p178) target = $region28
      $region27: #{restnet_down_block.6} parent=23 // pred_region
        %p181 = scmp.lt.s32.totalorder %s12, 1
        %s182 = scalar_select %p181, %s12, 1
        %s183 = smul.addr %s182, 20
        %s184 = smul.addr %s183, 4
        %s185 = scalar_lea.vmem %s0, %s184
      $region28: #{restnet_down_block.6} parent=23 // pred_fallthru
        _
      // Predicated region
      $region29: #{restnet_down_block.6} parent=23 // pred_check
        %p186 = pneg %p79
      $region30: #{restnet_down_block.6} parent=23 // pred_check_branch
        %188 = sbr.rel (%p186) target = $region32
      $region31: #{restnet_down_block.6} parent=23 // pred_region
        %p189 = scmp.lt.s32.totalorder %s12, 1
        %s190 = scalar_select %p189, %s12, 1
        %s191 = smul.addr %s190, 8
        %s192 = smul.addr %s191, 4
        %s193 = scalar_lea.vmem %s2, %s192
      $region32: #{restnet_down_block.6} parent=23 // pred_fallthru
        _
    $region24: #{restnet_down_block.6} parent=5 // pred_fallthru
      _
    %p194 = scmp.le.s32.totalorder 1, %s12
    %p195 = scmp.lt.s32.totalorder %s12, 3
    %p196 = pnand %p194, %p195
    %p197 = pneg %p196
    // Predicated region
    $region33: #{restnet_down_block.6} parent=5 // pred_check
      _
    $region34: #{restnet_down_block.6} parent=5 // pred_check_branch
      %199 = sbr.rel (%p196) target = $region36
    $region35: #{restnet_down_block.6} parent=5 // pred_region
      %s200 = ssub.s32 %s12, 1
      %p201 = scmp.lt.s32.totalorder %s17, 1
      %s202 = scalar_select %p201, %s17, 1
      %s203 = smul.addr %s202, 20
      %s204 = smul.addr %s203, 4
      %s205 = scalar_lea.vmem %s0, %s204
      %p206 = pneg %p38
      %p207 = pneg %p35
      %p208 = pneg %p59
      %p209 = pneg %p56
      %p210 = scmp.lt.s32.totalorder %s17, 1
      %s211 = scalar_select %p210, %s17, 1
      %s212 = smul.addr %s211, 8
      %s213 = smul.addr %s212, 4
      %s214 = scalar_lea.vmem %s2, %s213
      %p215 = pneg %p85
      %p216 = pneg %p82
      %p217 = pneg %p106
      %p218 = pneg %p103
      %p219 = pneg %p132
      %p220 = pneg %p129
      %p221 = scmp.lt.s32.totalorder %s17, 1
      %s222 = scalar_select %p221, %s17, 1
      %s223 = smul.addr %s222, 8
      %s224 = smul.addr %s223, 4
      %s225 = scalar_lea.vmem %s4, %s224
      %p226 = pneg %p153
      %p227 = pneg %p150
      %p228 = scmp.lt.s32.totalorder %s17, 1
      %s229 = scalar_select %p228, %s17, 1
      %s230 = smul.addr %s229, 20
      %s231 = smul.addr %s230, 4
      %s232 = scalar_lea.vmem %s0, %s231
      %p233 = scmp.lt.s32.totalorder %s17, 1
      %s234 = scalar_select %p233, %s17, 1
      %s235 = smul.addr %s234, 8
      %s236 = smul.addr %s235, 4
      %s237 = scalar_lea.vmem %s2, %s236
      %p238 = scmp.lt.s32.totalorder %s17, 1
      %s239 = scalar_select %p238, %s17, 1
      %s240 = smul.addr %s239, 8
      %s241 = smul.addr %s240, 4
      %s242 = scalar_lea.vmem %s4, %s241
      %p244 = scmp.eq.s32.totalorder %s17, 0
      // Predicated region
      $region37: #{restnet_down_block.6} parent=35 // pred_check
        %p245 = pneg %p244
      $region38: #{restnet_down_block.6} parent=35 // pred_check_branch
        %247 = sbr.rel (%p245) target = $region40
      $region39: #{restnet_down_block.6} parent=35 // pred_region
        %248 = vst [vmem:[%s5] sm:$0xff] 0.0
      $region40: #{restnet_down_block.6} parent=35 // pred_fallthru
        _
      %v249 = vld [vmem:[%s232] sm:$0xf]
      %v250 = vld [vmem:[%s232 + $0x4] sm:$0x1]
      %v251 = vld [vmem:[%s232 + $0x8] sm:$0xf]
      %v252 = vld [vmem:[%s232 + $0xc] sm:$0x1]
      %v253 = vld [vmem:[%s232 + $0x10] sm:$0xf]
      %v254 = vld [vmem:[%s232 + $0x14] sm:$0x1]
      %v255 = vld [vmem:[%s232 + $0x18] sm:$0xf]
      %v256 = vld [vmem:[%s232 + $0x1c] sm:$0x1]
      %v257 = vld [vmem:[%s232 + $0x20] sm:$0xf]
      %v258 = vld [vmem:[%s232 + $0x24] sm:$0x1]
      %v259 = vld [vmem:[%s232 + $0x28] sm:$0xf]
      %v260 = vld [vmem:[%s232 + $0x2c] sm:$0x1]
      %v261 = vld [vmem:[%s232 + $0x30] sm:$0xf]
      %v262 = vld [vmem:[%s232 + $0x34] sm:$0x1]
      %v263 = vld [vmem:[%s232 + $0x38] sm:$0xf]
      %v264 = vld [vmem:[%s232 + $0x3c] sm:$0x1]
      %v265 = vld [vmem:[%s232 + $0x40] sm:$0xf]
      %v266 = vld [vmem:[%s232 + $0x44] sm:$0x1]
      %v267 = vld [vmem:[%s232 + $0x48] sm:$0xf]
      %v268 = vld [vmem:[%s232 + $0x4c] sm:$0x1]
      %v269 = vld [vmem:[%s1] sm:$0xf]
      %v270 = vld [vmem:[%s1 + $0x4] sm:$0xf]
      %v271 = vld [vmem:[%s1 + $0x8] sm:$0xf]
      %v272 = vld [vmem:[%s1 + $0xc] sm:$0xf]
      %v273 = vld [vmem:[%s1 + $0x10] sm:$0xf]
      %v274 = vld [vmem:[%s1 + $0x14] sm:$0xf]
      %v275 = vld [vmem:[%s1 + $0x18] sm:$0xf]
      %v276 = vld [vmem:[%s1 + $0x1c] sm:$0xf]
      %v277 = vld [vmem:[%s1 + $0x20] sm:$0xf]
      %v278 = vld [vmem:[%s1 + $0x24] sm:$0xf]
      %v279 = vld [vmem:[%s1 + $0x28] sm:$0xf]
      %v280 = vld [vmem:[%s1 + $0x2c] sm:$0xf]
      %v281 = vld [vmem:[%s1 + $0x30] sm:$0xf]
      %v282 = vld [vmem:[%s1 + $0x34] sm:$0xf]
      %v283 = vld [vmem:[%s1 + $0x38] sm:$0xf]
      %v284 = vld [vmem:[%s1 + $0x3c] sm:$0xf]
      %vm285 = vsmask.f32 3328
      %vm286 = vsmask.f32 7440
      %vm287 = vmor %vm285, %vm286
      %v289 = vshrl.u32 %v249, 16
      %v291 = vrot.slane %v289, 4
      %v292 = vshll.u32 %v249, 16
      %v294 = vrot.slane %v292, 5
      %v295 = vor.u32 %v291, %v294
      %v296 = vrot.slane %v295, 4
      %v298 = vshll.u32 %v250, 16
      %v300 = vrot.slane %v298, 5
      %v301 = vsel %vm287, %v296, %v300
      %v303 = vshrl.u32 %v251, 16
      %v305 = vrot.slane %v303, 4
      %v306 = vshll.u32 %v251, 16
      %v308 = vrot.slane %v306, 5
      %v309 = vor.u32 %v305, %v308
      %v310 = vrot.slane %v309, 4
      %v312 = vshll.u32 %v252, 16
      %v314 = vrot.slane %v312, 5
      %v315 = vsel %vm287, %v310, %v314
      %v317 = vshrl.u32 %v253, 16
      %v319 = vrot.slane %v317, 4
      %v320 = vshll.u32 %v253, 16
      %v322 = vrot.slane %v320, 5
      %v323 = vor.u32 %v319, %v322
      %v324 = vrot.slane %v323, 4
      %v326 = vshll.u32 %v254, 16
      %v328 = vrot.slane %v326, 5
      %v329 = vsel %vm287, %v324, %v328
      %v331 = vshrl.u32 %v255, 16
      %v333 = vrot.slane %v331, 4
      %v334 = vshll.u32 %v255, 16
      %v336 = vrot.slane %v334, 5
      %v337 = vor.u32 %v333, %v336
      %v338 = vrot.slane %v337, 4
      %v340 = vshll.u32 %v256, 16
      %v342 = vrot.slane %v340, 5
      %v343 = vsel %vm287, %v338, %v342
      %v345 = vshrl.u32 %v257, 16
      %v347 = vrot.slane %v345, 4
      %v348 = vshll.u32 %v257, 16
      %v350 = vrot.slane %v348, 5
      %v351 = vor.u32 %v347, %v350
      %v352 = vrot.slane %v351, 4
      %v354 = vshll.u32 %v258, 16
      %v356 = vrot.slane %v354, 5
      %v357 = vsel %vm287, %v352, %v356
      %v359 = vshrl.u32 %v259, 16
      %v361 = vrot.slane %v359, 4
      %v362 = vshll.u32 %v259, 16
      %v364 = vrot.slane %v362, 5
      %v365 = vor.u32 %v361, %v364
      %v366 = vrot.slane %v365, 4
      %v368 = vshll.u32 %v260, 16
      %v370 = vrot.slane %v368, 5
      %v371 = vsel %vm287, %v366, %v370
      %v373 = vshrl.u32 %v261, 16
      %v375 = vrot.slane %v373, 4
      %v376 = vshll.u32 %v261, 16
      %v378 = vrot.slane %v376, 5
      %v379 = vor.u32 %v375, %v378
      %v380 = vrot.slane %v379, 4
      %v382 = vshll.u32 %v262, 16
      %v384 = vrot.slane %v382, 5
      %v385 = vsel %vm287, %v380, %v384
      %v387 = vshrl.u32 %v263, 16
      %v389 = vrot.slane %v387, 4
      %v390 = vshll.u32 %v263, 16
      %v392 = vrot.slane %v390, 5
      %v393 = vor.u32 %v389, %v392
      %v394 = vrot.slane %v393, 4
      %v396 = vshll.u32 %v264, 16
      %v398 = vrot.slane %v396, 5
      %v399 = vsel %vm287, %v394, %v398
      %s400 = scalar_lea.vmem %s1, 64
      %v401 = vld [vmem:[%s400] sm:$0xf]
      %v402 = vld [vmem:[%s400 + $0x4] sm:$0xf]
      %v403 = vld [vmem:[%s400 + $0x8] sm:$0xf]
      %v404 = vld [vmem:[%s400 + $0xc] sm:$0xf]
      %v405 = vld [vmem:[%s400 + $0x10] sm:$0xf]
      %v406 = vld [vmem:[%s400 + $0x14] sm:$0xf]
      %v407 = vld [vmem:[%s400 + $0x18] sm:$0xf]
      %v408 = vld [vmem:[%s400 + $0x1c] sm:$0xf]
      %v409 = vld [vmem:[%s400 + $0x20] sm:$0xf]
      %v410 = vld [vmem:[%s400 + $0x24] sm:$0xf]
      %v411 = vld [vmem:[%s400 + $0x28] sm:$0xf]
      %v412 = vld [vmem:[%s400 + $0x2c] sm:$0xf]
      %v413 = vld [vmem:[%s400 + $0x30] sm:$0xf]
      %v414 = vld [vmem:[%s400 + $0x34] sm:$0xf]
      %v415 = vld [vmem:[%s400 + $0x38] sm:$0xf]
      %v416 = vld [vmem:[%s400 + $0x3c] sm:$0xf]
      %v417 = vunpack.c.l.b16 %v301
      %v418 = vunpack.c.l.b16 %v315
      %v419 = vunpack.c.l.b16 %v329
      %v420 = vunpack.c.l.b16 %v343
      %v421 = vunpack.c.l.b16 %v357
      %v422 = vunpack.c.l.b16 %v371
      %v423 = vunpack.c.l.b16 %v385
      %v424 = vunpack.c.l.b16 %v399
      %v425 = vpack.c.b16 %v418, %v417
      %v426 = vpack.c.b16 %v420, %v419
      %v427 = vpack.c.b16 %v422, %v421
      %v428 = vpack.c.b16 %v424, %v423
      %v449 = vunpack.c.l.b16 %v401
      %v450 = vunpack.c.l.b16 %v402
      %v451 = vunpack.c.l.b16 %v403
      %v452 = vunpack.c.l.b16 %v404
      %v453 = vunpack.c.l.b16 %v405
      %v454 = vunpack.c.l.b16 %v406
      %v455 = vunpack.c.l.b16 %v407
      %v456 = vunpack.c.l.b16 %v408
      %v457 = vunpack.c.l.b16 %v409
      %v458 = vunpack.c.l.b16 %v410
      %v459 = vunpack.c.l.b16 %v411
      %v460 = vunpack.c.l.b16 %v412
      %v461 = vunpack.c.l.b16 %v413
      %v462 = vunpack.c.l.b16 %v414
      %v463 = vunpack.c.l.b16 %v415
      %v464 = vunpack.c.l.b16 %v416
      %v465 = vpack.c.b16 %v450, %v449
      %v466 = vpack.c.b16 %v452, %v451
      %v467 = vpack.c.b16 %v454, %v453
      %v468 = vpack.c.b16 %v456, %v455
      %v469 = vpack.c.b16 %v458, %v457
      %v470 = vpack.c.b16 %v460, %v459
      %v471 = vpack.c.b16 %v462, %v461
      %v472 = vpack.c.b16 %v464, %v463
      %481 = vmatprep.subr.bf16.mxu0 0
      %482 = vmatpush1.bf16.msra.mxu0 %v465
      %483 = vmatprep.subr.bf16.mxu0 0
      %484 = vmatpush1.bf16.msra.mxu0 %v466
      %485 = vmatprep.subr.bf16.mxu0 0
      %486 = vmatpush1.bf16.msra.mxu0 %v467
      %487 = vmatprep.subr.bf16.mxu0 0
      %488 = vmatpush1.bf16.msra.mxu0 %v468
      %489 = vmatprep.subr.bf16.mxu0 0
      %490 = vmatpush1.bf16.msra.mxu0 %v469
      %491 = vmatprep.subr.bf16.mxu0 0
      %492 = vmatpush1.bf16.msra.mxu0 %v470
      %493 = vmatprep.subr.bf16.mxu0 0
      %494 = vmatpush1.bf16.msra.mxu0 %v471
      %495 = vmatprep.subr.bf16.mxu0 0
      %496 = vmatpush1.bf16.msra.mxu0 %v472
      %497 = vmatprep.subr.bf16.mxu0 0
      %498 = vmatpush1.bf16.msra.mxu0 0
      %499 = vmatprep.subr.bf16.mxu0 0
      %500 = vmatpush1.bf16.msra.mxu0 0
      %501 = vmatprep.subr.bf16.mxu0 0
      %502 = vmatpush1.bf16.msra.mxu0 0
      %503 = vmatprep.subr.bf16.mxu0 0
      %504 = vmatpush1.bf16.msra.mxu0 0
      %505 = vmatprep.subr.bf16.mxu0 0
      %506 = vmatpush1.bf16.msra.mxu0 0
      %507 = vmatprep.subr.bf16.mxu0 0
      %508 = vmatpush1.bf16.msra.mxu0 0
      %509 = vmatprep.subr.bf16.mxu0 0
      %510 = vmatpush1.bf16.msra.mxu0 0
      %511 = vmatprep.subr.bf16.mxu0 0
      %512 = vmatpush1.bf16.msra.mxu0 0
      %513 = vmatprep.mubr.bf16.mxu0 0
      %514 = vmatmul.mubr.bf16.gmra.mrb[0].mxu0 %v425
      %v515 = vpop.f32.mrb[0].mxu0
      %v516 = vadd.f32 0.0, %v515
      %v517 = vpop.f32.mrb[0].mxu0
      %v518 = vpop.f32.mrb[0].mxu0
      %v519 = vadd.f32 0.0, %v518
      %v520 = vpop.f32.mrb[0].mxu0
      %521 = vmatprep.mubr.bf16.mxu0 0
      %522 = vmatmul.mubr.bf16.gmra.mrb[0].mxu0 %v426
      %v523 = vpop.f32.mrb[0].mxu0
      %v524 = vadd.f32 0.0, %v523
      %v525 = vpop.f32.mrb[0].mxu0
      %v526 = vpop.f32.mrb[0].mxu0
      %v527 = vadd.f32 0.0, %v526
      %v528 = vpop.f32.mrb[0].mxu0
      %529 = vmatprep.mubr.bf16.mxu0 0
      %530 = vmatmul.mubr.bf16.gmra.mrb[0].mxu0 %v427
      %v531 = vpop.f32.mrb[0].mxu0
      %v532 = vadd.f32 0.0, %v531
      %v533 = vpop.f32.mrb[0].mxu0
      %v534 = vpop.f32.mrb[0].mxu0
      %v535 = vadd.f32 0.0, %v534
      %v536 = vpop.f32.mrb[0].mxu0
      %537 = vmatprep.mubr.bf16.mxu0 0
      %538 = vmatmul.mubr.bf16.gmra.mrb[0].mxu0 %v428
      %v539 = vpop.f32.mrb[0].mxu0
      %v540 = vadd.f32 0.0, %v539
      %v541 = vpop.f32.mrb[0].mxu0
      %v542 = vpop.f32.mrb[0].mxu0
      %v543 = vadd.f32 0.0, %v542
      %v544 = vpop.f32.mrb[0].mxu0
      %545 = vdwg.mxu0
      %v554 = vunpack.c.l.b16 %v249
      %v555 = vunpack.c.l.b16 %v251
      %v556 = vunpack.c.l.b16 %v253
      %v557 = vunpack.c.l.b16 %v255
      %v558 = vunpack.c.l.b16 %v257
      %v559 = vunpack.c.l.b16 %v259
      %v560 = vunpack.c.l.b16 %v261
      %v561 = vunpack.c.l.b16 %v263
      %v562 = vpack.c.b16 %v555, %v554
      %v563 = vpack.c.b16 %v557, %v556
      %v564 = vpack.c.b16 %v559, %v558
      %v565 = vpack.c.b16 %v561, %v560
      %v586 = vunpack.c.l.b16 %v269
      %v587 = vunpack.c.l.b16 %v270
      %v588 = vunpack.c.l.b16 %v271
      %v589 = vunpack.c.l.b16 %v272
      %v590 = vunpack.c.l.b16 %v273
      %v591 = vunpack.c.l.b16 %v274
      %v592 = vunpack.c.l.b16 %v275
      %v593 = vunpack.c.l.b16 %v276
      %v594 = vunpack.c.l.b16 %v277
      %v595 = vunpack.c.l.b16 %v278
      %v596 = vunpack.c.l.b16 %v279
      %v597 = vunpack.c.l.b16 %v280
      %v598 = vunpack.c.l.b16 %v281
      %v599 = vunpack.c.l.b16 %v282
      %v600 = vunpack.c.l.b16 %v283
      %v601 = vunpack.c.l.b16 %v284
      %v602 = vpack.c.b16 %v587, %v586
      %v603 = vpack.c.b16 %v589, %v588
      %v604 = vpack.c.b16 %v591, %v590
      %v605 = vpack.c.b16 %v593, %v592
      %v606 = vpack.c.b16 %v595, %v594
      %v607 = vpack.c.b16 %v597, %v596
      %v608 = vpack.c.b16 %v599, %v598
      %v609 = vpack.c.b16 %v601, %v600
      %618 = vmatprep.subr.bf16.mxu0 0
      %619 = vmatpush1.bf16.msra.mxu0 %v602
      %620 = vmatprep.subr.bf16.mxu0 0
      %621 = vmatpush1.bf16.msra.mxu0 %v603
      %622 = vmatprep.subr.bf16.mxu0 0
      %623 = vmatpush1.bf16.msra.mxu0 %v604
      %624 = vmatprep.subr.bf16.mxu0 0
      %625 = vmatpush1.bf16.msra.mxu0 %v605
      %626 = vmatprep.subr.bf16.mxu0 0
      %627 = vmatpush1.bf16.msra.mxu0 %v606
      %628 = vmatprep.subr.bf16.mxu0 0
      %629 = vmatpush1.bf16.msra.mxu0 %v607
      %630 = vmatprep.subr.bf16.mxu0 0
      %631 = vmatpush1.bf16.msra.mxu0 %v608
      %632 = vmatprep.subr.bf16.mxu0 0
      %633 = vmatpush1.bf16.msra.mxu0 %v609
      %634 = vmatprep.subr.bf16.mxu0 0
      %635 = vmatpush1.bf16.msra.mxu0 0
      %636 = vmatprep.subr.bf16.mxu0 0
      %637 = vmatpush1.bf16.msra.mxu0 0
      %638 = vmatprep.subr.bf16.mxu0 0
      %639 = vmatpush1.bf16.msra.mxu0 0
      %640 = vmatprep.subr.bf16.mxu0 0
      %641 = vmatpush1.bf16.msra.mxu0 0
      %642 = vmatprep.subr.bf16.mxu0 0
      %643 = vmatpush1.bf16.msra.mxu0 0
      %644 = vmatprep.subr.bf16.mxu0 0
      %645 = vmatpush1.bf16.msra.mxu0 0
      %646 = vmatprep.subr.bf16.mxu0 0
      %647 = vmatpush1.bf16.msra.mxu0 0
      %648 = vmatprep.subr.bf16.mxu0 0
      %649 = vmatpush1.bf16.msra.mxu0 0
      %650 = vmatprep.mubr.bf16.mxu0 0
      %651 = vmatmul.mubr.bf16.gmra.mrb[0].mxu0 %v562
      %v652 = vpop.f32.mrb[0].mxu0
      %v653 = vadd.f32 %v516, %v652
      %v654 = vpop.f32.mrb[0].mxu0
      %v655 = vpop.f32.mrb[0].mxu0
      %v656 = vadd.f32 %v519, %v655
      %v657 = vpop.f32.mrb[0].mxu0
      %658 = vmatprep.mubr.bf16.mxu0 0
      %659 = vmatmul.mubr.bf16.gmra.mrb[0].mxu0 %v563
      %v660 = vpop.f32.mrb[0].mxu0
      %v661 = vadd.f32 %v524, %v660
      %v662 = vpop.f32.mrb[0].mxu0
      %v663 = vpop.f32.mrb[0].mxu0
      %v664 = vadd.f32 %v527, %v663
      %v665 = vpop.f32.mrb[0].mxu0
      %666 = vmatprep.mubr.bf16.mxu0 0
      %667 = vmatmul.mubr.bf16.gmra.mrb[0].mxu0 %v564
      %v668 = vpop.f32.mrb[0].mxu0
      %v669 = vadd.f32 %v532, %v668
      %v670 = vpop.f32.mrb[0].mxu0
      %v671 = vpop.f32.mrb[0].mxu0
      %v672 = vadd.f32 %v535, %v671
      %v673 = vpop.f32.mrb[0].mxu0
      %674 = vmatprep.mubr.bf16.mxu0 0
      %675 = vmatmul.mubr.bf16.gmra.mrb[0].mxu0 %v565
      %v676 = vpop.f32.mrb[0].mxu0
      %v677 = vadd.f32 %v540, %v676
      %v678 = vpop.f32.mrb[0].mxu0
      %v679 = vpop.f32.mrb[0].mxu0
      %v680 = vadd.f32 %v543, %v679
      %v681 = vpop.f32.mrb[0].mxu0
      %682 = vdwg.mxu0
      %vm691 = vcmask 1042432
      %vm692 = vcmask 1046532
      %vm693 = vmor %vm691, %vm692
      %v694 = vrot.slane %v249, 5
      %v695 = vrot.slane %v694, 4
      %v696 = vrot.slane %v250, 5
      %v697 = vsel %vm693, %v695, %v696
      %v698 = vrot.slane %v251, 5
      %v699 = vrot.slane %v698, 4
      %v700 = vrot.slane %v252, 5
      %v701 = vsel %vm693, %v699, %v700
      %v702 = vrot.slane %v253, 5
      %v703 = vrot.slane %v702, 4
      %v704 = vrot.slane %v254, 5
      %v705 = vsel %vm693, %v703, %v704
      %v706 = vrot.slane %v255, 5
      %v707 = vrot.slane %v706, 4
      %v708 = vrot.slane %v256, 5
      %v709 = vsel %vm693, %v707, %v708
      %v710 = vrot.slane %v257, 5
      %v711 = vrot.slane %v710, 4
      %v712 = vrot.slane %v258, 5
      %v713 = vsel %vm693, %v711, %v712
      %v714 = vrot.slane %v259, 5
      %v715 = vrot.slane %v714, 4
      %v716 = vrot.slane %v260, 5
      %v717 = vsel %vm693, %v715, %v716
      %v718 = vrot.slane %v261, 5
      %v719 = vrot.slane %v718, 4
      %v720 = vrot.slane %v262, 5
      %v721 = vsel %vm693, %v719, %v720
      %v722 = vrot.slane %v263, 5
      %v723 = vrot.slane %v722, 4
      %v724 = vrot.slane %v264, 5
      %v725 = vsel %vm693, %v723, %v724
      %s726 = scalar_lea.vmem %s1, 128
      %v727 = vld [vmem:[%s726] sm:$0xf]
      %v728 = vld [vmem:[%s726 + $0x4] sm:$0xf]
      %v729 = vld [vmem:[%s726 + $0x8] sm:$0xf]
      %v730 = vld [vmem:[%s726 + $0xc] sm:$0xf]
      %v731 = vld [vmem:[%s726 + $0x10] sm:$0xf]
      %v732 = vld [vmem:[%s726 + $0x14] sm:$0xf]
      %v733 = vld [vmem:[%s726 + $0x18] sm:$0xf]
      %v734 = vld [vmem:[%s726 + $0x1c] sm:$0xf]
      %v735 = vld [vmem:[%s726 + $0x20] sm:$0xf]
      %v736 = vld [vmem:[%s726 + $0x24] sm:$0xf]
      %v737 = vld [vmem:[%s726 + $0x28] sm:$0xf]
      %v738 = vld [vmem:[%s726 + $0x2c] sm:$0xf]
      %v739 = vld [vmem:[%s726 + $0x30] sm:$0xf]
      %v740 = vld [vmem:[%s726 + $0x34] sm:$0xf]
      %v741 = vld [vmem:[%s726 + $0x38] sm:$0xf]
      %v742 = vld [vmem:[%s726 + $0x3c] sm:$0xf]
      %v743 = vunpack.c.l.b16 %v697
      %v744 = vunpack.c.l.b16 %v701
      %v745 = vunpack.c.l.b16 %v705
      %v746 = vunpack.c.l.b16 %v709
      %v747 = vunpack.c.l.b16 %v713
      %v748 = vunpack.c.l.b16 %v717
      %v749 = vunpack.c.l.b16 %v721
      %v750 = vunpack.c.l.b16 %v725
      %v751 = vpack.c.b16 %v744, %v743
      %v752 = vpack.c.b16 %v746, %v745
      %v753 = vpack.c.b16 %v748, %v747
      %v754 = vpack.c.b16 %v750, %v749
      %v775 = vunpack.c.l.b16 %v727
      %v776 = vunpack.c.l.b16 %v728
      %v777 = vunpack.c.l.b16 %v729
      %v778 = vunpack.c.l.b16 %v730
      %v779 = vunpack.c.l.b16 %v731
      %v780 = vunpack.c.l.b16 %v732
      %v781 = vunpack.c.l.b16 %v733
      %v782 = vunpack.c.l.b16 %v734
      %v783 = vunpack.c.l.b16 %v735
      %v784 = vunpack.c.l.b16 %v736
      %v785 = vunpack.c.l.b16 %v737
      %v786 = vunpack.c.l.b16 %v738
      %v787 = vunpack.c.l.b16 %v739
      %v788 = vunpack.c.l.b16 %v740
      %v789 = vunpack.c.l.b16 %v741
      %v790 = vunpack.c.l.b16 %v742
      %v791 = vpack.c.b16 %v776, %v775
      %v792 = vpack.c.b16 %v778, %v777
      %v793 = vpack.c.b16 %v780, %v779
      %v794 = vpack.c.b16 %v782, %v781
      %v795 = vpack.c.b16 %v784, %v783
      %v796 = vpack.c.b16 %v786, %v785
      %v797 = vpack.c.b16 %v788, %v787
      %v798 = vpack.c.b16 %v790, %v789
      %807 = vmatprep.subr.bf16.mxu0 0
      %808 = vmatpush1.bf16.msra.mxu0 %v791
      %809 = vmatprep.subr.bf16.mxu0 0
      %810 = vmatpush1.bf16.msra.mxu0 %v792
      %811 = vmatprep.subr.bf16.mxu0 0
      %812 = vmatpush1.bf16.msra.mxu0 %v793
      %813 = vmatprep.subr.bf16.mxu0 0
      %814 = vmatpush1.bf16.msra.mxu0 %v794
      %815 = vmatprep.subr.bf16.mxu0 0
      %816 = vmatpush1.bf16.msra.mxu0 %v795
      %817 = vmatprep.subr.bf16.mxu0 0
      %818 = vmatpush1.bf16.msra.mxu0 %v796
      %819 = vmatprep.subr.bf16.mxu0 0
      %820 = vmatpush1.bf16.msra.mxu0 %v797
      %821 = vmatprep.subr.bf16.mxu0 0
      %822 = vmatpush1.bf16.msra.mxu0 %v798
      %823 = vmatprep.subr.bf16.mxu0 0
      %824 = vmatpush1.bf16.msra.mxu0 0
      %825 = vmatprep.subr.bf16.mxu0 0
      %826 = vmatpush1.bf16.msra.mxu0 0
      %827 = vmatprep.subr.bf16.mxu0 0
      %828 = vmatpush1.bf16.msra.mxu0 0
      %829 = vmatprep.subr.bf16.mxu0 0
      %830 = vmatpush1.bf16.msra.mxu0 0
      %831 = vmatprep.subr.bf16.mxu0 0
      %832 = vmatpush1.bf16.msra.mxu0 0
      %833 = vmatprep.subr.bf16.mxu0 0
      %834 = vmatpush1.bf16.msra.mxu0 0
      %835 = vmatprep.subr.bf16.mxu0 0
      %836 = vmatpush1.bf16.msra.mxu0 0
      %837 = vmatprep.subr.bf16.mxu0 0
      %838 = vmatpush1.bf16.msra.mxu0 0
      %839 = vmatprep.mubr.bf16.mxu0 0
      %840 = vmatmul.mubr.bf16.gmra.mrb[0].mxu0 %v751
      %v841 = vpop.f32.mrb[0].mxu0
      %v842 = vadd.f32 0.0, %v841
      %v843 = vpop.f32.mrb[0].mxu0
      %v844 = vpop.f32.mrb[0].mxu0
      %v845 = vadd.f32 0.0, %v844
      %v846 = vpop.f32.mrb[0].mxu0
      %847 = vmatprep.mubr.bf16.mxu0 0
      %848 = vmatmul.mubr.bf16.gmra.mrb[0].mxu0 %v752
      %v849 = vpop.f32.mrb[0].mxu0
      %v850 = vadd.f32 0.0, %v849
      %v851 = vpop.f32.mrb[0].mxu0
      %v852 = vpop.f32.mrb[0].mxu0
      %v853 = vadd.f32 0.0, %v852
      %v854 = vpop.f32.mrb[0].mxu0
      %855 = vmatprep.mubr.bf16.mxu0 0
      %856 = vmatmul.mubr.bf16.gmra.mrb[0].mxu0 %v753
      %v857 = vpop.f32.mrb[0].mxu0
      %v858 = vadd.f32 0.0, %v857
      %v859 = vpop.f32.mrb[0].mxu0
      %v860 = vpop.f32.mrb[0].mxu0
      %v861 = vadd.f32 0.0, %v860
      %v862 = vpop.f32.mrb[0].mxu0
      %863 = vmatprep.mubr.bf16.mxu0 0
      %864 = vmatmul.mubr.bf16.gmra.mrb[0].mxu0 %v754
      %v865 = vpop.f32.mrb[0].mxu0
      %v866 = vadd.f32 0.0, %v865
      %v867 = vpop.f32.mrb[0].mxu0
      %v868 = vpop.f32.mrb[0].mxu0
      %v869 = vadd.f32 0.0, %v868
      %v870 = vpop.f32.mrb[0].mxu0
      %871 = vdwg.mxu0
      %v872 = vadd.f32 %v653, %v842
      %v873 = vadd.f32 %v656, %v845
      %v874 = vadd.f32 %v661, %v850
      %v875 = vadd.f32 %v664, %v853
      %v876 = vadd.f32 %v669, %v858
      %v877 = vadd.f32 %v672, %v861
      %v878 = vadd.f32 %v677, %v866
      %v879 = vadd.f32 %v680, %v869
      %s880 = scalar_lea.vmem %s1, 192
      %v881 = vld [vmem:[%s880] sm:$0xf]
      %v882 = vld [vmem:[%s880 + $0x4] sm:$0xf]
      %v883 = vld [vmem:[%s880 + $0x8] sm:$0xf]
      %v884 = vld [vmem:[%s880 + $0xc] sm:$0xf]
      %v885 = vld [vmem:[%s880 + $0x10] sm:$0xf]
      %v886 = vld [vmem:[%s880 + $0x14] sm:$0xf]
      %v887 = vld [vmem:[%s880 + $0x18] sm:$0xf]
      %v888 = vld [vmem:[%s880 + $0x1c] sm:$0xf]
      %v889 = vld [vmem:[%s880 + $0x20] sm:$0xf]
      %v890 = vld [vmem:[%s880 + $0x24] sm:$0xf]
      %v891 = vld [vmem:[%s880 + $0x28] sm:$0xf]
      %v892 = vld [vmem:[%s880 + $0x2c] sm:$0xf]
      %v893 = vld [vmem:[%s880 + $0x30] sm:$0xf]
      %v894 = vld [vmem:[%s880 + $0x34] sm:$0xf]
      %v895 = vld [vmem:[%s880 + $0x38] sm:$0xf]
      %v896 = vld [vmem:[%s880 + $0x3c] sm:$0xf]
      %v898 = vunpack.c.l.b16 %v265
      %v899 = vpack.c.b16 %v556, %v555
      %v900 = vpack.c.b16 %v558, %v557
      %v901 = vpack.c.b16 %v560, %v559
      %v902 = vpack.c.b16 %v898, %v561
      %v923 = vunpack.c.l.b16 %v881
      %v924 = vunpack.c.l.b16 %v882
      %v925 = vunpack.c.l.b16 %v883
      %v926 = vunpack.c.l.b16 %v884
      %v927 = vunpack.c.l.b16 %v885
      %v928 = vunpack.c.l.b16 %v886
      %v929 = vunpack.c.l.b16 %v887
      %v930 = vunpack.c.l.b16 %v888
      %v931 = vunpack.c.l.b16 %v889
      %v932 = vunpack.c.l.b16 %v890
      %v933 = vunpack.c.l.b16 %v891
      %v934 = vunpack.c.l.b16 %v892
      %v935 = vunpack.c.l.b16 %v893
      %v936 = vunpack.c.l.b16 %v894
      %v937 = vunpack.c.l.b16 %v895
      %v938 = vunpack.c.l.b16 %v896
      %v939 = vpack.c.b16 %v924, %v923
      %v940 = vpack.c.b16 %v926, %v925
      %v941 = vpack.c.b16 %v928, %v927
      %v942 = vpack.c.b16 %v930, %v929
      %v943 = vpack.c.b16 %v932, %v931
      %v944 = vpack.c.b16 %v934, %v933
      %v945 = vpack.c.b16 %v936, %v935
      %v946 = vpack.c.b16 %v938, %v937
      %955 = vmatprep.subr.bf16.mxu0 0
      %956 = vmatpush1.bf16.msra.mxu0 %v939
      %957 = vmatprep.subr.bf16.mxu0 0
      %958 = vmatpush1.bf16.msra.mxu0 %v940
      %959 = vmatprep.subr.bf16.mxu0 0
      %960 = vmatpush1.bf16.msra.mxu0 %v941
      %961 = vmatprep.subr.bf16.mxu0 0
      %962 = vmatpush1.bf16.msra.mxu0 %v942
      %963 = vmatprep.subr.bf16.mxu0 0
      %964 = vmatpush1.bf16.msra.mxu0 %v943
      %965 = vmatprep.subr.bf16.mxu0 0
      %966 = vmatpush1.bf16.msra.mxu0 %v944
      %967 = vmatprep.subr.bf16.mxu0 0
      %968 = vmatpush1.bf16.msra.mxu0 %v945
      %969 = vmatprep.subr.bf16.mxu0 0
      %970 = vmatpush1.bf16.msra.mxu0 %v946
      %971 = vmatprep.subr.bf16.mxu0 0
      %972 = vmatpush1.bf16.msra.mxu0 0
      %973 = vmatprep.subr.bf16.mxu0 0
      %974 = vmatpush1.bf16.msra.mxu0 0
      %975 = vmatprep.subr.bf16.mxu0 0
      %976 = vmatpush1.bf16.msra.mxu0 0
      %977 = vmatprep.subr.bf16.mxu0 0
      %978 = vmatpush1.bf16.msra.mxu0 0
      %979 = vmatprep.subr.bf16.mxu0 0
      %980 = vmatpush1.bf16.msra.mxu0 0
      %981 = vmatprep.subr.bf16.mxu0 0
      %982 = vmatpush1.bf16.msra.mxu0 0
      %983 = vmatprep.subr.bf16.mxu0 0
      %984 = vmatpush1.bf16.msra.mxu0 0
      %985 = vmatprep.subr.bf16.mxu0 0
      %986 = vmatpush1.bf16.msra.mxu0 0
      %987 = vmatprep.mubr.bf16.mxu0 0
      %988 = vmatmul.mubr.bf16.gmra.mrb[0].mxu0 %v899
      %v989 = vpop.f32.mrb[0].mxu0
      %v990 = vadd.f32 0.0, %v989
      %v991 = vpop.f32.mrb[0].mxu0
      %v992 = vpop.f32.mrb[0].mxu0
      %v993 = vadd.f32 0.0, %v992
      %v994 = vpop.f32.mrb[0].mxu0
      %995 = vmatprep.mubr.bf16.mxu0 0
      %996 = vmatmul.mubr.bf16.gmra.mrb[0].mxu0 %v900
      %v997 = vpop.f32.mrb[0].mxu0
      %v998 = vadd.f32 0.0, %v997
      %v999 = vpop.f32.mrb[0].mxu0
      %v1000 = vpop.f32.mrb[0].mxu0
      %v1001 = vadd.f32 0.0, %v1000
      %v1002 = vpop.f32.mrb[0].mxu0
      %1003 = vmatprep.mubr.bf16.mxu0 0
      %1004 = vmatmul.mubr.bf16.gmra.mrb[0].mxu0 %v901
      %v1005 = vpop.f32.mrb[0].mxu0
      %v1006 = vadd.f32 0.0, %v1005
      %v1007 = vpop.f32.mrb[0].mxu0
      %v1008 = vpop.f32.mrb[0].mxu0
      %v1009 = vadd.f32 0.0, %v1008
      %v1010 = vpop.f32.mrb[0].mxu0
      %1011 = vmatprep.mubr.bf16.mxu0 0
      %1012 = vmatmul.mubr.bf16.gmra.mrb[0].mxu0 %v902
      %v1013 = vpop.f32.mrb[0].mxu0
      %v1014 = vadd.f32 0.0, %v1013
      %v1015 = vpop.f32.mrb[0].mxu0
      %v1016 = vpop.f32.mrb[0].mxu0
      %v1017 = vadd.f32 0.0, %v1016
      %v1018 = vpop.f32.mrb[0].mxu0
      %1019 = vdwg.mxu0
      %v1020 = vadd.f32 %v872, %v990
      %v1021 = vadd.f32 %v873, %v993
      %v1022 = vadd.f32 %v874, %v998
      %v1023 = vadd.f32 %v875, %v1001
      %v1024 = vadd.f32 %v876, %v1006
      %v1025 = vadd.f32 %v877, %v1009
      %v1026 = vadd.f32 %v878, %v1014
      %v1027 = vadd.f32 %v879, %v1017
      %v1029 = vshrl.u32 %v265, 16
      %v1031 = vrot.slane %v1029, 4
      %v1032 = vshll.u32 %v265, 16
      %v1034 = vrot.slane %v1032, 5
      %v1035 = vor.u32 %v1031, %v1034
      %v1036 = vrot.slane %v1035, 4
      %v1038 = vshll.u32 %v266, 16
      %v1040 = vrot.slane %v1038, 5
      %v1041 = vsel %vm287, %v1036, %v1040
      %s1042 = scalar_lea.vmem %s1, 256
      %v1043 = vld [vmem:[%s1042] sm:$0xf]
      %v1044 = vld [vmem:[%s1042 + $0x4] sm:$0xf]
      %v1045 = vld [vmem:[%s1042 + $0x8] sm:$0xf]
      %v1046 = vld [vmem:[%s1042 + $0xc] sm:$0xf]
      %v1047 = vld [vmem:[%s1042 + $0x10] sm:$0xf]
      %v1048 = vld [vmem:[%s1042 + $0x14] sm:$0xf]
      %v1049 = vld [vmem:[%s1042 + $0x18] sm:$0xf]
      %v1050 = vld [vmem:[%s1042 + $0x1c] sm:$0xf]
      %v1051 = vld [vmem:[%s1042 + $0x20] sm:$0xf]
      %v1052 = vld [vmem:[%s1042 + $0x24] sm:$0xf]
      %v1053 = vld [vmem:[%s1042 + $0x28] sm:$0xf]
      %v1054 = vld [vmem:[%s1042 + $0x2c] sm:$0xf]
      %v1055 = vld [vmem:[%s1042 + $0x30] sm:$0xf]
      %v1056 = vld [vmem:[%s1042 + $0x34] sm:$0xf]
      %v1057 = vld [vmem:[%s1042 + $0x38] sm:$0xf]
      %v1058 = vld [vmem:[%s1042 + $0x3c] sm:$0xf]
      %v1059 = vunpack.c.l.b16 %v1041
      %v1060 = vpack.c.b16 %v419, %v418
      %v1061 = vpack.c.b16 %v421, %v420
      %v1062 = vpack.c.b16 %v423, %v422
      %v1063 = vpack.c.b16 %v1059, %v424
      %v1084 = vunpack.c.l.b16 %v1043
      %v1085 = vunpack.c.l.b16 %v1044
      %v1086 = vunpack.c.l.b16 %v1045
      %v1087 = vunpack.c.l.b16 %v1046
      %v1088 = vunpack.c.l.b16 %v1047
      %v1089 = vunpack.c.l.b16 %v1048
      %v1090 = vunpack.c.l.b16 %v1049
      %v1091 = vunpack.c.l.b16 %v1050
      %v1092 = vunpack.c.l.b16 %v1051
      %v1093 = vunpack.c.l.b16 %v1052
      %v1094 = vunpack.c.l.b16 %v1053
      %v1095 = vunpack.c.l.b16 %v1054
      %v1096 = vunpack.c.l.b16 %v1055
      %v1097 = vunpack.c.l.b16 %v1056
      %v1098 = vunpack.c.l.b16 %v1057
      %v1099 = vunpack.c.l.b16 %v1058
      %v1100 = vpack.c.b16 %v1085, %v1084
      %v1101 = vpack.c.b16 %v1087, %v1086
      %v1102 = vpack.c.b16 %v1089, %v1088
      %v1103 = vpack.c.b16 %v1091, %v1090
      %v1104 = vpack.c.b16 %v1093, %v1092
      %v1105 = vpack.c.b16 %v1095, %v1094
      %v1106 = vpack.c.b16 %v1097, %v1096
      %v1107 = vpack.c.b16 %v1099, %v1098
      %1116 = vmatprep.subr.bf16.mxu0 0
      %1117 = vmatpush1.bf16.msra.mxu0 %v1100
      %1118 = vmatprep.subr.bf16.mxu0 0
      %1119 = vmatpush1.bf16.msra.mxu0 %v1101
      %1120 = vmatprep.subr.bf16.mxu0 0
      %1121 = vmatpush1.bf16.msra.mxu0 %v1102
      %1122 = vmatprep.subr.bf16.mxu0 0
      %1123 = vmatpush1.bf16.msra.mxu0 %v1103
      %1124 = vmatprep.subr.bf16.mxu0 0
      %1125 = vmatpush1.bf16.msra.mxu0 %v1104
      %1126 = vmatprep.subr.bf16.mxu0 0
      %1127 = vmatpush1.bf16.msra.mxu0 %v1105
      %1128 = vmatprep.subr.bf16.mxu0 0
      %1129 = vmatpush1.bf16.msra.mxu0 %v1106
      %1130 = vmatprep.subr.bf16.mxu0 0
      %1131 = vmatpush1.bf16.msra.mxu0 %v1107
      %1132 = vmatprep.subr.bf16.mxu0 0
      %1133 = vmatpush1.bf16.msra.mxu0 0
      %1134 = vmatprep.subr.bf16.mxu0 0
      %1135 = vmatpush1.bf16.msra.mxu0 0
      %1136 = vmatprep.subr.bf16.mxu0 0
      %1137 = vmatpush1.bf16.msra.mxu0 0
      %1138 = vmatprep.subr.bf16.mxu0 0
      %1139 = vmatpush1.bf16.msra.mxu0 0
      %1140 = vmatprep.subr.bf16.mxu0 0
      %1141 = vmatpush1.bf16.msra.mxu0 0
      %1142 = vmatprep.subr.bf16.mxu0 0
      %1143 = vmatpush1.bf16.msra.mxu0 0
      %1144 = vmatprep.subr.bf16.mxu0 0
      %1145 = vmatpush1.bf16.msra.mxu0 0
      %1146 = vmatprep.subr.bf16.mxu0 0
      %1147 = vmatpush1.bf16.msra.mxu0 0
      %1148 = vmatprep.mubr.bf16.mxu0 0
      %1149 = vmatmul.mubr.bf16.gmra.mrb[0].mxu0 %v1060
      %v1150 = vpop.f32.mrb[0].mxu0
      %v1151 = vadd.f32 0.0, %v1150
      %v1152 = vpop.f32.mrb[0].mxu0
      %v1153 = vpop.f32.mrb[0].mxu0
      %v1154 = vadd.f32 0.0, %v1153
      %v1155 = vpop.f32.mrb[0].mxu0
      %1156 = vmatprep.mubr.bf16.mxu0 0
      %1157 = vmatmul.mubr.bf16.gmra.mrb[0].mxu0 %v1061
      %v1158 = vpop.f32.mrb[0].mxu0
      %v1159 = vadd.f32 0.0, %v1158
      %v1160 = vpop.f32.mrb[0].mxu0
      %v1161 = vpop.f32.mrb[0].mxu0
      %v1162 = vadd.f32 0.0, %v1161
      %v1163 = vpop.f32.mrb[0].mxu0
      %1164 = vmatprep.mubr.bf16.mxu0 0
      %1165 = vmatmul.mubr.bf16.gmra.mrb[0].mxu0 %v1062
      %v1166 = vpop.f32.mrb[0].mxu0
      %v1167 = vadd.f32 0.0, %v1166
      %v1168 = vpop.f32.mrb[0].mxu0
      %v1169 = vpop.f32.mrb[0].mxu0
      %v1170 = vadd.f32 0.0, %v1169
      %v1171 = vpop.f32.mrb[0].mxu0
      %1172 = vmatprep.mubr.bf16.mxu0 0
      %1173 = vmatmul.mubr.bf16.gmra.mrb[0].mxu0 %v1063
      %v1174 = vpop.f32.mrb[0].mxu0
      %v1175 = vadd.f32 0.0, %v1174
      %v1176 = vpop.f32.mrb[0].mxu0
      %v1177 = vpop.f32.mrb[0].mxu0
      %v1178 = vadd.f32 0.0, %v1177
      %v1179 = vpop.f32.mrb[0].mxu0
      %1180 = vdwg.mxu0
      %v1181 = vadd.f32 %v1020, %v1151
      %v1182 = vadd.f32 %v1021, %v1154
      %v1183 = vadd.f32 %v1022, %v1159
      %v1184 = vadd.f32 %v1023, %v1162
      %v1185 = vadd.f32 %v1024, %v1167
      %v1186 = vadd.f32 %v1025, %v1170
      %v1187 = vadd.f32 %v1026, %v1175
      %v1188 = vadd.f32 %v1027, %v1178
      %v1190 = vrot.slane %v265, 5
      %v1191 = vrot.slane %v1190, 4
      %v1192 = vrot.slane %v266, 5
      %v1193 = vsel %vm693, %v1191, %v1192
      %s1194 = scalar_lea.vmem %s1, 320
      %v1195 = vld [vmem:[%s1194] sm:$0xf]
      %v1196 = vld [vmem:[%s1194 + $0x4] sm:$0xf]
      %v1197 = vld [vmem:[%s1194 + $0x8] sm:$0xf]
      %v1198 = vld [vmem:[%s1194 + $0xc] sm:$0xf]
      %v1199 = vld [vmem:[%s1194 + $0x10] sm:$0xf]
      %v1200 = vld [vmem:[%s1194 + $0x14] sm:$0xf]
      %v1201 = vld [vmem:[%s1194 + $0x18] sm:$0xf]
      %v1202 = vld [vmem:[%s1194 + $0x1c] sm:$0xf]
      %v1203 = vld [vmem:[%s1194 + $0x20] sm:$0xf]
      %v1204 = vld [vmem:[%s1194 + $0x24] sm:$0xf]
      %v1205 = vld [vmem:[%s1194 + $0x28] sm:$0xf]
      %v1206 = vld [vmem:[%s1194 + $0x2c] sm:$0xf]
      %v1207 = vld [vmem:[%s1194 + $0x30] sm:$0xf]
      %v1208 = vld [vmem:[%s1194 + $0x34] sm:$0xf]
      %v1209 = vld [vmem:[%s1194 + $0x38] sm:$0xf]
      %v1210 = vld [vmem:[%s1194 + $0x3c] sm:$0xf]
      %v1211 = vunpack.c.l.b16 %v1193
      %v1212 = vpack.c.b16 %v745, %v744
      %v1213 = vpack.c.b16 %v747, %v746
      %v1214 = vpack.c.b16 %v749, %v748
      %v1215 = vpack.c.b16 %v1211, %v750
      %v1236 = vunpack.c.l.b16 %v1195
      %v1237 = vunpack.c.l.b16 %v1196
      %v1238 = vunpack.c.l.b16 %v1197
      %v1239 = vunpack.c.l.b16 %v1198
      %v1240 = vunpack.c.l.b16 %v1199
      %v1241 = vunpack.c.l.b16 %v1200
      %v1242 = vunpack.c.l.b16 %v1201
      %v1243 = vunpack.c.l.b16 %v1202
      %v1244 = vunpack.c.l.b16 %v1203
      %v1245 = vunpack.c.l.b16 %v1204
      %v1246 = vunpack.c.l.b16 %v1205
      %v1247 = vunpack.c.l.b16 %v1206
      %v1248 = vunpack.c.l.b16 %v1207
      %v1249 = vunpack.c.l.b16 %v1208
      %v1250 = vunpack.c.l.b16 %v1209
      %v1251 = vunpack.c.l.b16 %v1210
      %v1252 = vpack.c.b16 %v1237, %v1236
      %v1253 = vpack.c.b16 %v1239, %v1238
      %v1254 = vpack.c.b16 %v1241, %v1240
      %v1255 = vpack.c.b16 %v1243, %v1242
      %v1256 = vpack.c.b16 %v1245, %v1244
      %v1257 = vpack.c.b16 %v1247, %v1246
      %v1258 = vpack.c.b16 %v1249, %v1248
      %v1259 = vpack.c.b16 %v1251, %v1250
      %1268 = vmatprep.subr.bf16.mxu0 0
      %1269 = vmatpush1.bf16.msra.mxu0 %v1252
      %1270 = vmatprep.subr.bf16.mxu0 0
      %1271 = vmatpush1.bf16.msra.mxu0 %v1253
      %1272 = vmatprep.subr.bf16.mxu0 0
      %1273 = vmatpush1.bf16.msra.mxu0 %v1254
      %1274 = vmatprep.subr.bf16.mxu0 0
      %1275 = vmatpush1.bf16.msra.mxu0 %v1255
      %1276 = vmatprep.subr.bf16.mxu0 0
      %1277 = vmatpush1.bf16.msra.mxu0 %v1256
      %1278 = vmatprep.subr.bf16.mxu0 0
      %1279 = vmatpush1.bf16.msra.mxu0 %v1257
      %1280 = vmatprep.subr.bf16.mxu0 0
      %1281 = vmatpush1.bf16.msra.mxu0 %v1258
      %1282 = vmatprep.subr.bf16.mxu0 0
      %1283 = vmatpush1.bf16.msra.mxu0 %v1259
      %1284 = vmatprep.subr.bf16.mxu0 0
      %1285 = vmatpush1.bf16.msra.mxu0 0
      %1286 = vmatprep.subr.bf16.mxu0 0
      %1287 = vmatpush1.bf16.msra.mxu0 0
      %1288 = vmatprep.subr.bf16.mxu0 0
      %1289 = vmatpush1.bf16.msra.mxu0 0
      %1290 = vmatprep.subr.bf16.mxu0 0
      %1291 = vmatpush1.bf16.msra.mxu0 0
      %1292 = vmatprep.subr.bf16.mxu0 0
      %1293 = vmatpush1.bf16.msra.mxu0 0
      %1294 = vmatprep.subr.bf16.mxu0 0
      %1295 = vmatpush1.bf16.msra.mxu0 0
      %1296 = vmatprep.subr.bf16.mxu0 0
      %1297 = vmatpush1.bf16.msra.mxu0 0
      %1298 = vmatprep.subr.bf16.mxu0 0
      %1299 = vmatpush1.bf16.msra.mxu0 0
      %1300 = vmatprep.mubr.bf16.mxu0 0
      %1301 = vmatmul.mubr.bf16.gmra.mrb[0].mxu0 %v1212
      %v1302 = vpop.f32.mrb[0].mxu0
      %v1303 = vadd.f32 0.0, %v1302
      %v1304 = vpop.f32.mrb[0].mxu0
      %v1305 = vpop.f32.mrb[0].mxu0
      %v1306 = vadd.f32 0.0, %v1305
      %v1307 = vpop.f32.mrb[0].mxu0
      %1308 = vmatprep.mubr.bf16.mxu0 0
      %1309 = vmatmul.mubr.bf16.gmra.mrb[0].mxu0 %v1213
      %v1310 = vpop.f32.mrb[0].mxu0
      %v1311 = vadd.f32 0.0, %v1310
      %v1312 = vpop.f32.mrb[0].mxu0
      %v1313 = vpop.f32.mrb[0].mxu0
      %v1314 = vadd.f32 0.0, %v1313
      %v1315 = vpop.f32.mrb[0].mxu0
      %1316 = vmatprep.mubr.bf16.mxu0 0
      %1317 = vmatmul.mubr.bf16.gmra.mrb[0].mxu0 %v1214
      %v1318 = vpop.f32.mrb[0].mxu0
      %v1319 = vadd.f32 0.0, %v1318
      %v1320 = vpop.f32.mrb[0].mxu0
      %v1321 = vpop.f32.mrb[0].mxu0
      %v1322 = vadd.f32 0.0, %v1321
      %v1323 = vpop.f32.mrb[0].mxu0
      %1324 = vmatprep.mubr.bf16.mxu0 0
      %1325 = vmatmul.mubr.bf16.gmra.mrb[0].mxu0 %v1215
      %v1326 = vpop.f32.mrb[0].mxu0
      %v1327 = vadd.f32 0.0, %v1326
      %v1328 = vpop.f32.mrb[0].mxu0
      %v1329 = vpop.f32.mrb[0].mxu0
      %v1330 = vadd.f32 0.0, %v1329
      %v1331 = vpop.f32.mrb[0].mxu0
      %1332 = vdwg.mxu0
      %v1333 = vadd.f32 %v1181, %v1303
      %v1334 = vadd.f32 %v1182, %v1306
      %v1335 = vadd.f32 %v1183, %v1311
      %v1336 = vadd.f32 %v1184, %v1314
      %v1337 = vadd.f32 %v1185, %v1319
      %v1338 = vadd.f32 %v1186, %v1322
      %v1339 = vadd.f32 %v1187, %v1327
      %v1340 = vadd.f32 %v1188, %v1330
      %s1341 = scalar_lea.vmem %s1, 384
      %v1342 = vld [vmem:[%s1341] sm:$0xf]
      %v1343 = vld [vmem:[%s1341 + $0x4] sm:$0xf]
      %v1344 = vld [vmem:[%s1341 + $0x8] sm:$0xf]
      %v1345 = vld [vmem:[%s1341 + $0xc] sm:$0xf]
      %v1346 = vld [vmem:[%s1341 + $0x10] sm:$0xf]
      %v1347 = vld [vmem:[%s1341 + $0x14] sm:$0xf]
      %v1348 = vld [vmem:[%s1341 + $0x18] sm:$0xf]
      %v1349 = vld [vmem:[%s1341 + $0x1c] sm:$0xf]
      %v1350 = vld [vmem:[%s1341 + $0x20] sm:$0xf]
      %v1351 = vld [vmem:[%s1341 + $0x24] sm:$0xf]
      %v1352 = vld [vmem:[%s1341 + $0x28] sm:$0xf]
      %v1353 = vld [vmem:[%s1341 + $0x2c] sm:$0xf]
      %v1354 = vld [vmem:[%s1341 + $0x30] sm:$0xf]
      %v1355 = vld [vmem:[%s1341 + $0x34] sm:$0xf]
      %v1356 = vld [vmem:[%s1341 + $0x38] sm:$0xf]
      %v1357 = vld [vmem:[%s1341 + $0x3c] sm:$0xf]
      %v1359 = vunpack.c.l.b16 %v267
      %v1360 = vpack.c.b16 %v1359, %v898
      %v1378 = vunpack.c.l.b16 %v1342
      %v1379 = vunpack.c.l.b16 %v1343
      %v1380 = vunpack.c.l.b16 %v1344
      %v1381 = vunpack.c.l.b16 %v1345
      %v1382 = vunpack.c.l.b16 %v1346
      %v1383 = vunpack.c.l.b16 %v1347
      %v1384 = vunpack.c.l.b16 %v1348
      %v1385 = vunpack.c.l.b16 %v1349
      %v1386 = vunpack.c.l.b16 %v1350
      %v1387 = vunpack.c.l.b16 %v1351
      %v1388 = vunpack.c.l.b16 %v1352
      %v1389 = vunpack.c.l.b16 %v1353
      %v1390 = vunpack.c.l.b16 %v1354
      %v1391 = vunpack.c.l.b16 %v1355
      %v1392 = vunpack.c.l.b16 %v1356
      %v1393 = vunpack.c.l.b16 %v1357
      %v1394 = vpack.c.b16 %v1379, %v1378
      %v1395 = vpack.c.b16 %v1381, %v1380
      %v1396 = vpack.c.b16 %v1383, %v1382
      %v1397 = vpack.c.b16 %v1385, %v1384
      %v1398 = vpack.c.b16 %v1387, %v1386
      %v1399 = vpack.c.b16 %v1389, %v1388
      %v1400 = vpack.c.b16 %v1391, %v1390
      %v1401 = vpack.c.b16 %v1393, %v1392
      %1410 = vmatprep.subr.bf16.mxu0 0
      %1411 = vmatpush1.bf16.msra.mxu0 %v1394
      %1412 = vmatprep.subr.bf16.mxu0 0
      %1413 = vmatpush1.bf16.msra.mxu0 %v1395
      %1414 = vmatprep.subr.bf16.mxu0 0
      %1415 = vmatpush1.bf16.msra.mxu0 %v1396
      %1416 = vmatprep.subr.bf16.mxu0 0
      %1417 = vmatpush1.bf16.msra.mxu0 %v1397
      %1418 = vmatprep.subr.bf16.mxu0 0
      %1419 = vmatpush1.bf16.msra.mxu0 %v1398
      %1420 = vmatprep.subr.bf16.mxu0 0
      %1421 = vmatpush1.bf16.msra.mxu0 %v1399
      %1422 = vmatprep.subr.bf16.mxu0 0
      %1423 = vmatpush1.bf16.msra.mxu0 %v1400
      %1424 = vmatprep.subr.bf16.mxu0 0
      %1425 = vmatpush1.bf16.msra.mxu0 %v1401
      %1426 = vmatprep.subr.bf16.mxu0 0
      %1427 = vmatpush1.bf16.msra.mxu0 0
      %1428 = vmatprep.subr.bf16.mxu0 0
      %1429 = vmatpush1.bf16.msra.mxu0 0
      %1430 = vmatprep.subr.bf16.mxu0 0
      %1431 = vmatpush1.bf16.msra.mxu0 0
      %1432 = vmatprep.subr.bf16.mxu0 0
      %1433 = vmatpush1.bf16.msra.mxu0 0
      %1434 = vmatprep.subr.bf16.mxu0 0
      %1435 = vmatpush1.bf16.msra.mxu0 0
      %1436 = vmatprep.subr.bf16.mxu0 0
      %1437 = vmatpush1.bf16.msra.mxu0 0
      %1438 = vmatprep.subr.bf16.mxu0 0
      %1439 = vmatpush1.bf16.msra.mxu0 0
      %1440 = vmatprep.subr.bf16.mxu0 0
      %1441 = vmatpush1.bf16.msra.mxu0 0
      %1442 = vmatprep.mubr.bf16.mxu0 0
      %1443 = vmatmul.mubr.bf16.gmra.mrb[0].mxu0 %v563
      %v1444 = vpop.f32.mrb[0].mxu0
      %v1445 = vadd.f32 0.0, %v1444
      %v1446 = vpop.f32.mrb[0].mxu0
      %v1447 = vpop.f32.mrb[0].mxu0
      %v1448 = vadd.f32 0.0, %v1447
      %v1449 = vpop.f32.mrb[0].mxu0
      %1450 = vmatprep.mubr.bf16.mxu0 0
      %1451 = vmatmul.mubr.bf16.gmra.mrb[0].mxu0 %v564
      %v1452 = vpop.f32.mrb[0].mxu0
      %v1453 = vadd.f32 0.0, %v1452
      %v1454 = vpop.f32.mrb[0].mxu0
      %v1455 = vpop.f32.mrb[0].mxu0
      %v1456 = vadd.f32 0.0, %v1455
      %v1457 = vpop.f32.mrb[0].mxu0
      %1458 = vmatprep.mubr.bf16.mxu0 0
      %1459 = vmatmul.mubr.bf16.gmra.mrb[0].mxu0 %v565
      %v1460 = vpop.f32.mrb[0].mxu0
      %v1461 = vadd.f32 0.0, %v1460
      %v1462 = vpop.f32.mrb[0].mxu0
      %v1463 = vpop.f32.mrb[0].mxu0
      %v1464 = vadd.f32 0.0, %v1463
      %v1465 = vpop.f32.mrb[0].mxu0
      %1466 = vmatprep.mubr.bf16.mxu0 0
      %1467 = vmatmul.mubr.bf16.gmra.mrb[0].mxu0 %v1360
      %v1468 = vpop.f32.mrb[0].mxu0
      %v1469 = vadd.f32 0.0, %v1468
      %v1470 = vpop.f32.mrb[0].mxu0
      %v1471 = vpop.f32.mrb[0].mxu0
      %v1472 = vadd.f32 0.0, %v1471
      %v1473 = vpop.f32.mrb[0].mxu0
      %1474 = vdwg.mxu0
      %v1475 = vadd.f32 %v1333, %v1445
      %v1476 = vadd.f32 %v1334, %v1448
      %v1477 = vadd.f32 %v1335, %v1453
      %v1478 = vadd.f32 %v1336, %v1456
      %v1479 = vadd.f32 %v1337, %v1461
      %v1480 = vadd.f32 %v1338, %v1464
      %v1481 = vadd.f32 %v1339, %v1469
      %v1482 = vadd.f32 %v1340, %v1472
      %v1484 = vshrl.u32 %v267, 16
      %v1486 = vrot.slane %v1484, 4
      %v1487 = vshll.u32 %v267, 16
      %v1489 = vrot.slane %v1487, 5
      %v1490 = vor.u32 %v1486, %v1489
      %v1491 = vrot.slane %v1490, 4
      %v1493 = vshll.u32 %v268, 16
      %v1495 = vrot.slane %v1493, 5
      %v1496 = vsel %vm287, %v1491, %v1495
      %s1497 = scalar_lea.vmem %s1, 448
      %v1498 = vld [vmem:[%s1497] sm:$0xf]
      %v1499 = vld [vmem:[%s1497 + $0x4] sm:$0xf]
      %v1500 = vld [vmem:[%s1497 + $0x8] sm:$0xf]
      %v1501 = vld [vmem:[%s1497 + $0xc] sm:$0xf]
      %v1502 = vld [vmem:[%s1497 + $0x10] sm:$0xf]
      %v1503 = vld [vmem:[%s1497 + $0x14] sm:$0xf]
      %v1504 = vld [vmem:[%s1497 + $0x18] sm:$0xf]
      %v1505 = vld [vmem:[%s1497 + $0x1c] sm:$0xf]
      %v1506 = vld [vmem:[%s1497 + $0x20] sm:$0xf]
      %v1507 = vld [vmem:[%s1497 + $0x24] sm:$0xf]
      %v1508 = vld [vmem:[%s1497 + $0x28] sm:$0xf]
      %v1509 = vld [vmem:[%s1497 + $0x2c] sm:$0xf]
      %v1510 = vld [vmem:[%s1497 + $0x30] sm:$0xf]
      %v1511 = vld [vmem:[%s1497 + $0x34] sm:$0xf]
      %v1512 = vld [vmem:[%s1497 + $0x38] sm:$0xf]
      %v1513 = vld [vmem:[%s1497 + $0x3c] sm:$0xf]
      %v1514 = vunpack.c.l.b16 %v1496
      %v1515 = vpack.c.b16 %v1514, %v1059
      %v1533 = vunpack.c.l.b16 %v1498
      %v1534 = vunpack.c.l.b16 %v1499
      %v1535 = vunpack.c.l.b16 %v1500
      %v1536 = vunpack.c.l.b16 %v1501
      %v1537 = vunpack.c.l.b16 %v1502
      %v1538 = vunpack.c.l.b16 %v1503
      %v1539 = vunpack.c.l.b16 %v1504
      %v1540 = vunpack.c.l.b16 %v1505
      %v1541 = vunpack.c.l.b16 %v1506
      %v1542 = vunpack.c.l.b16 %v1507
      %v1543 = vunpack.c.l.b16 %v1508
      %v1544 = vunpack.c.l.b16 %v1509
      %v1545 = vunpack.c.l.b16 %v1510
      %v1546 = vunpack.c.l.b16 %v1511
      %v1547 = vunpack.c.l.b16 %v1512
      %v1548 = vunpack.c.l.b16 %v1513
      %v1549 = vpack.c.b16 %v1534, %v1533
      %v1550 = vpack.c.b16 %v1536, %v1535
      %v1551 = vpack.c.b16 %v1538, %v1537
      %v1552 = vpack.c.b16 %v1540, %v1539
      %v1553 = vpack.c.b16 %v1542, %v1541
      %v1554 = vpack.c.b16 %v1544, %v1543
      %v1555 = vpack.c.b16 %v1546, %v1545
      %v1556 = vpack.c.b16 %v1548, %v1547
      %1565 = vmatprep.subr.bf16.mxu0 0
      %1566 = vmatpush1.bf16.msra.mxu0 %v1549
      %1567 = vmatprep.subr.bf16.mxu0 0
      %1568 = vmatpush1.bf16.msra.mxu0 %v1550
      %1569 = vmatprep.subr.bf16.mxu0 0
      %1570 = vmatpush1.bf16.msra.mxu0 %v1551
      %1571 = vmatprep.subr.bf16.mxu0 0
      %1572 = vmatpush1.bf16.msra.mxu0 %v1552
      %1573 = vmatprep.subr.bf16.mxu0 0
      %1574 = vmatpush1.bf16.msra.mxu0 %v1553
      %1575 = vmatprep.subr.bf16.mxu0 0
      %1576 = vmatpush1.bf16.msra.mxu0 %v1554
      %1577 = vmatprep.subr.bf16.mxu0 0
      %1578 = vmatpush1.bf16.msra.mxu0 %v1555
      %1579 = vmatprep.subr.bf16.mxu0 0
      %1580 = vmatpush1.bf16.msra.mxu0 %v1556
      %1581 = vmatprep.subr.bf16.mxu0 0
      %1582 = vmatpush1.bf16.msra.mxu0 0
      %1583 = vmatprep.subr.bf16.mxu0 0
      %1584 = vmatpush1.bf16.msra.mxu0 0
      %1585 = vmatprep.subr.bf16.mxu0 0
      %1586 = vmatpush1.bf16.msra.mxu0 0
      %1587 = vmatprep.subr.bf16.mxu0 0
      %1588 = vmatpush1.bf16.msra.mxu0 0
      %1589 = vmatprep.subr.bf16.mxu0 0
      %1590 = vmatpush1.bf16.msra.mxu0 0
      %1591 = vmatprep.subr.bf16.mxu0 0
      %1592 = vmatpush1.bf16.msra.mxu0 0
      %1593 = vmatprep.subr.bf16.mxu0 0
      %1594 = vmatpush1.bf16.msra.mxu0 0
      %1595 = vmatprep.subr.bf16.mxu0 0
      %1596 = vmatpush1.bf16.msra.mxu0 0
      %1597 = vmatprep.mubr.bf16.mxu0 0
      %1598 = vmatmul.mubr.bf16.gmra.mrb[0].mxu0 %v426
      %v1599 = vpop.f32.mrb[0].mxu0
      %v1600 = vadd.f32 0.0, %v1599
      %v1601 = vpop.f32.mrb[0].mxu0
      %v1602 = vpop.f32.mrb[0].mxu0
      %v1603 = vadd.f32 0.0, %v1602
      %v1604 = vpop.f32.mrb[0].mxu0
      %1605 = vmatprep.mubr.bf16.mxu0 0
      %1606 = vmatmul.mubr.bf16.gmra.mrb[0].mxu0 %v427
      %v1607 = vpop.f32.mrb[0].mxu0
      %v1608 = vadd.f32 0.0, %v1607
      %v1609 = vpop.f32.mrb[0].mxu0
      %v1610 = vpop.f32.mrb[0].mxu0
      %v1611 = vadd.f32 0.0, %v1610
      %v1612 = vpop.f32.mrb[0].mxu0
      %1613 = vmatprep.mubr.bf16.mxu0 0
      %1614 = vmatmul.mubr.bf16.gmra.mrb[0].mxu0 %v428
      %v1615 = vpop.f32.mrb[0].mxu0
      %v1616 = vadd.f32 0.0, %v1615
      %v1617 = vpop.f32.mrb[0].mxu0
      %v1618 = vpop.f32.mrb[0].mxu0
      %v1619 = vadd.f32 0.0, %v1618
      %v1620 = vpop.f32.mrb[0].mxu0
      %1621 = vmatprep.mubr.bf16.mxu0 0
      %1622 = vmatmul.mubr.bf16.gmra.mrb[0].mxu0 %v1515
      %v1623 = vpop.f32.mrb[0].mxu0
      %v1624 = vadd.f32 0.0, %v1623
      %v1625 = vpop.f32.mrb[0].mxu0
      %v1626 = vpop.f32.mrb[0].mxu0
      %v1627 = vadd.f32 0.0, %v1626
      %v1628 = vpop.f32.mrb[0].mxu0
      %1629 = vdwg.mxu0
      %v1630 = vadd.f32 %v1475, %v1600
      %v1631 = vadd.f32 %v1476, %v1603
      %v1632 = vadd.f32 %v1477, %v1608
      %v1633 = vadd.f32 %v1478, %v1611
      %v1634 = vadd.f32 %v1479, %v1616
      %v1635 = vadd.f32 %v1480, %v1619
      %v1636 = vadd.f32 %v1481, %v1624
      %v1637 = vadd.f32 %v1482, %v1627
      %v1639 = vrot.slane %v267, 5
      %v1640 = vrot.slane %v1639, 4
      %v1641 = vrot.slane %v268, 5
      %v1642 = vsel %vm693, %v1640, %v1641
      %s1643 = scalar_lea.vmem %s1, 512
      %v1644 = vld [vmem:[%s1643] sm:$0xf]
      %v1645 = vld [vmem:[%s1643 + $0x4] sm:$0xf]
      %v1646 = vld [vmem:[%s1643 + $0x8] sm:$0xf]
      %v1647 = vld [vmem:[%s1643 + $0xc] sm:$0xf]
      %v1648 = vld [vmem:[%s1643 + $0x10] sm:$0xf]
      %v1649 = vld [vmem:[%s1643 + $0x14] sm:$0xf]
      %v1650 = vld [vmem:[%s1643 + $0x18] sm:$0xf]
      %v1651 = vld [vmem:[%s1643 + $0x1c] sm:$0xf]
      %v1652 = vld [vmem:[%s1643 + $0x20] sm:$0xf]
      %v1653 = vld [vmem:[%s1643 + $0x24] sm:$0xf]
      %v1654 = vld [vmem:[%s1643 + $0x28] sm:$0xf]
      %v1655 = vld [vmem:[%s1643 + $0x2c] sm:$0xf]
      %v1656 = vld [vmem:[%s1643 + $0x30] sm:$0xf]
      %v1657 = vld [vmem:[%s1643 + $0x34] sm:$0xf]
      %v1658 = vld [vmem:[%s1643 + $0x38] sm:$0xf]
      %v1659 = vld [vmem:[%s1643 + $0x3c] sm:$0xf]
      %v1660 = vunpack.c.l.b16 %v1642
      %v1661 = vpack.c.b16 %v1660, %v1211
      %v1679 = vunpack.c.l.b16 %v1644
      %v1680 = vunpack.c.l.b16 %v1645
      %v1681 = vunpack.c.l.b16 %v1646
      %v1682 = vunpack.c.l.b16 %v1647
      %v1683 = vunpack.c.l.b16 %v1648
      %v1684 = vunpack.c.l.b16 %v1649
      %v1685 = vunpack.c.l.b16 %v1650
      %v1686 = vunpack.c.l.b16 %v1651
      %v1687 = vunpack.c.l.b16 %v1652
      %v1688 = vunpack.c.l.b16 %v1653
      %v1689 = vunpack.c.l.b16 %v1654
      %v1690 = vunpack.c.l.b16 %v1655
      %v1691 = vunpack.c.l.b16 %v1656
      %v1692 = vunpack.c.l.b16 %v1657
      %v1693 = vunpack.c.l.b16 %v1658
      %v1694 = vunpack.c.l.b16 %v1659
      %v1695 = vpack.c.b16 %v1680, %v1679
      %v1696 = vpack.c.b16 %v1682, %v1681
      %v1697 = vpack.c.b16 %v1684, %v1683
      %v1698 = vpack.c.b16 %v1686, %v1685
      %v1699 = vpack.c.b16 %v1688, %v1687
      %v1700 = vpack.c.b16 %v1690, %v1689
      %v1701 = vpack.c.b16 %v1692, %v1691
      %v1702 = vpack.c.b16 %v1694, %v1693
      %1711 = vmatprep.subr.bf16.mxu0 0
      %1712 = vmatpush1.bf16.msra.mxu0 %v1695
      %1713 = vmatprep.subr.bf16.mxu0 0
      %1714 = vmatpush1.bf16.msra.mxu0 %v1696
      %1715 = vmatprep.subr.bf16.mxu0 0
      %1716 = vmatpush1.bf16.msra.mxu0 %v1697
      %1717 = vmatprep.subr.bf16.mxu0 0
      %1718 = vmatpush1.bf16.msra.mxu0 %v1698
      %1719 = vmatprep.subr.bf16.mxu0 0
      %1720 = vmatpush1.bf16.msra.mxu0 %v1699
      %1721 = vmatprep.subr.bf16.mxu0 0
      %1722 = vmatpush1.bf16.msra.mxu0 %v1700
      %1723 = vmatprep.subr.bf16.mxu0 0
      %1724 = vmatpush1.bf16.msra.mxu0 %v1701
      %1725 = vmatprep.subr.bf16.mxu0 0
      %1726 = vmatpush1.bf16.msra.mxu0 %v1702
      %1727 = vmatprep.subr.bf16.mxu0 0
      %1728 = vmatpush1.bf16.msra.mxu0 0
      %1729 = vmatprep.subr.bf16.mxu0 0
      %1730 = vmatpush1.bf16.msra.mxu0 0
      %1731 = vmatprep.subr.bf16.mxu0 0
      %1732 = vmatpush1.bf16.msra.mxu0 0
      %1733 = vmatprep.subr.bf16.mxu0 0
      %1734 = vmatpush1.bf16.msra.mxu0 0
      %1735 = vmatprep.subr.bf16.mxu0 0
      %1736 = vmatpush1.bf16.msra.mxu0 0
      %1737 = vmatprep.subr.bf16.mxu0 0
      %1738 = vmatpush1.bf16.msra.mxu0 0
      %1739 = vmatprep.subr.bf16.mxu0 0
      %1740 = vmatpush1.bf16.msra.mxu0 0
      %1741 = vmatprep.subr.bf16.mxu0 0
      %1742 = vmatpush1.bf16.msra.mxu0 0
      %1743 = vmatprep.mubr.bf16.mxu0 0
      %1744 = vmatmul.mubr.bf16.gmra.mrb[0].mxu0 %v752
      %v1745 = vpop.f32.mrb[0].mxu0
      %v1746 = vadd.f32 0.0, %v1745
      %v1747 = vpop.f32.mrb[0].mxu0
      %v1748 = vpop.f32.mrb[0].mxu0
      %v1749 = vadd.f32 0.0, %v1748
      %v1750 = vpop.f32.mrb[0].mxu0
      %1751 = vmatprep.mubr.bf16.mxu0 0
      %1752 = vmatmul.mubr.bf16.gmra.mrb[0].mxu0 %v753
      %v1753 = vpop.f32.mrb[0].mxu0
      %v1754 = vadd.f32 0.0, %v1753
      %v1755 = vpop.f32.mrb[0].mxu0
      %v1756 = vpop.f32.mrb[0].mxu0
      %v1757 = vadd.f32 0.0, %v1756
      %v1758 = vpop.f32.mrb[0].mxu0
      %1759 = vmatprep.mubr.bf16.mxu0 0
      %1760 = vmatmul.mubr.bf16.gmra.mrb[0].mxu0 %v754
      %v1761 = vpop.f32.mrb[0].mxu0
      %v1762 = vadd.f32 0.0, %v1761
      %v1763 = vpop.f32.mrb[0].mxu0
      %v1764 = vpop.f32.mrb[0].mxu0
      %v1765 = vadd.f32 0.0, %v1764
      %v1766 = vpop.f32.mrb[0].mxu0
      %1767 = vmatprep.mubr.bf16.mxu0 0
      %1768 = vmatmul.mubr.bf16.gmra.mrb[0].mxu0 %v1661
      %v1769 = vpop.f32.mrb[0].mxu0
      %v1770 = vadd.f32 0.0, %v1769
      %v1771 = vpop.f32.mrb[0].mxu0
      %v1772 = vpop.f32.mrb[0].mxu0
      %v1773 = vadd.f32 0.0, %v1772
      %v1774 = vpop.f32.mrb[0].mxu0
      %1775 = vdwg.mxu0
      %v1776 = vadd.f32 %v1630, %v1746
      %v1777 = vadd.f32 %v1631, %v1749
      %v1778 = vadd.f32 %v1632, %v1754
      %v1779 = vadd.f32 %v1633, %v1757
      %v1780 = vadd.f32 %v1634, %v1762
      %v1781 = vadd.f32 %v1635, %v1765
      %v1782 = vadd.f32 %v1636, %v1770
      %v1783 = vadd.f32 %v1637, %v1773
      %v1784 = vpack.c.bf16 %v1777, %v1776
      %v1785 = vpack.c.bf16 %v1779, %v1778
      %v1786 = vpack.c.bf16 %v1781, %v1780
      %v1787 = vpack.c.bf16 %v1783, %v1782
      %v1792 = vunpack.c.l.b16 %v1784
      %v1793 = vunpack.c.h.b16 %v1784
      %v1794 = vunpack.c.l.b16 %v1785
      %v1795 = vunpack.c.h.b16 %v1785
      %v1796 = vunpack.c.l.b16 %v1786
      %v1797 = vunpack.c.h.b16 %v1786
      %v1798 = vunpack.c.l.b16 %v1787
      %v1799 = vunpack.c.h.b16 %v1787
      %v1800 = vpack.c.b16 %v1792, %v1792
      %v1801 = vpack.c.b16 %v1793, %v1793
      %v1802 = vpack.c.b16 %v1794, %v1794
      %v1803 = vpack.c.b16 %v1795, %v1795
      %v1804 = vpack.c.b16 %v1796, %v1796
      %v1805 = vpack.c.b16 %v1797, %v1797
      %v1806 = vpack.c.b16 %v1798, %v1798
      %v1807 = vpack.c.b16 %v1799, %v1799
      %1816 = vst [vmem:[%s242] sm:$0xf] %v1800
      %1817 = vst [vmem:[%s242 + $0x4] sm:$0xf] %v1801
      %1818 = vst [vmem:[%s242 + $0x8] sm:$0xf] %v1802
      %1819 = vst [vmem:[%s242 + $0xc] sm:$0xf] %v1803
      %1820 = vst [vmem:[%s242 + $0x10] sm:$0xf] %v1804
      %1821 = vst [vmem:[%s242 + $0x14] sm:$0xf] %v1805
      %1822 = vst [vmem:[%s242 + $0x18] sm:$0xf] %v1806
      %1823 = vst [vmem:[%s242 + $0x1c] sm:$0xf] %v1807
      %v1824 = vld [vmem:[%s237] sm:$0xf]
      %v1825 = vld [vmem:[%s237 + $0x4] sm:$0xf]
      %v1826 = vld [vmem:[%s237 + $0x8] sm:$0xf]
      %v1827 = vld [vmem:[%s237 + $0xc] sm:$0xf]
      %v1828 = vld [vmem:[%s237 + $0x10] sm:$0xf]
      %v1829 = vld [vmem:[%s237 + $0x14] sm:$0xf]
      %v1830 = vld [vmem:[%s237 + $0x18] sm:$0xf]
      %v1831 = vld [vmem:[%s237 + $0x1c] sm:$0xf]
      %v1832 = vld [vmem:[%s3] sm:$0xf]
      %v1833 = vld [vmem:[%s3 + $0x4] sm:$0xf]
      %v1834 = vld [vmem:[%s3 + $0x8] sm:$0xf]
      %v1835 = vld [vmem:[%s3 + $0xc] sm:$0xf]
      %v1836 = vld [vmem:[%s3 + $0x10] sm:$0xf]
      %v1837 = vld [vmem:[%s3 + $0x14] sm:$0xf]
      %v1838 = vld [vmem:[%s3 + $0x18] sm:$0xf]
      %v1839 = vld [vmem:[%s3 + $0x1c] sm:$0xf]
      %v1840 = vld [vmem:[%s3 + $0x20] sm:$0xf]
      %v1841 = vld [vmem:[%s3 + $0x24] sm:$0xf]
      %v1842 = vld [vmem:[%s3 + $0x28] sm:$0xf]
      %v1843 = vld [vmem:[%s3 + $0x2c] sm:$0xf]
      %v1844 = vld [vmem:[%s3 + $0x30] sm:$0xf]
      %v1845 = vld [vmem:[%s3 + $0x34] sm:$0xf]
      %v1846 = vld [vmem:[%s3 + $0x38] sm:$0xf]
      %v1847 = vld [vmem:[%s3 + $0x3c] sm:$0xf]
      %v1856 = vunpack.c.l.b16 %v1824
      %v1857 = vunpack.c.l.b16 %v1825
      %v1858 = vunpack.c.l.b16 %v1826
      %v1859 = vunpack.c.l.b16 %v1827
      %v1860 = vunpack.c.l.b16 %v1828
      %v1861 = vunpack.c.l.b16 %v1829
      %v1862 = vunpack.c.l.b16 %v1830
      %v1863 = vunpack.c.l.b16 %v1831
      %v1864 = vpack.c.b16 %v1857, %v1856
      %v1865 = vpack.c.b16 %v1859, %v1858
      %v1866 = vpack.c.b16 %v1861, %v1860
      %v1867 = vpack.c.b16 %v1863, %v1862
      %v1888 = vunpack.c.l.b16 %v1832
      %v1889 = vunpack.c.l.b16 %v1833
      %v1890 = vunpack.c.l.b16 %v1834
      %v1891 = vunpack.c.l.b16 %v1835
      %v1892 = vunpack.c.l.b16 %v1836
      %v1893 = vunpack.c.l.b16 %v1837
      %v1894 = vunpack.c.l.b16 %v1838
      %v1895 = vunpack.c.l.b16 %v1839
      %v1896 = vunpack.c.l.b16 %v1840
      %v1897 = vunpack.c.l.b16 %v1841
      %v1898 = vunpack.c.l.b16 %v1842
      %v1899 = vunpack.c.l.b16 %v1843
      %v1900 = vunpack.c.l.b16 %v1844
      %v1901 = vunpack.c.l.b16 %v1845
      %v1902 = vunpack.c.l.b16 %v1846
      %v1903 = vunpack.c.l.b16 %v1847
      %v1904 = vpack.c.b16 %v1889, %v1888
      %v1905 = vpack.c.b16 %v1891, %v1890
      %v1906 = vpack.c.b16 %v1893, %v1892
      %v1907 = vpack.c.b16 %v1895, %v1894
      %v1908 = vpack.c.b16 %v1897, %v1896
      %v1909 = vpack.c.b16 %v1899, %v1898
      %v1910 = vpack.c.b16 %v1901, %v1900
      %v1911 = vpack.c.b16 %v1903, %v1902
      %1920 = vmatprep.subr.bf16.mxu0 0
      %1921 = vmatpush1.bf16.msra.mxu0 %v1904
      %1922 = vmatprep.subr.bf16.mxu0 0
      %1923 = vmatpush1.bf16.msra.mxu0 %v1905
      %1924 = vmatprep.subr.bf16.mxu0 0
      %1925 = vmatpush1.bf16.msra.mxu0 %v1906
      %1926 = vmatprep.subr.bf16.mxu0 0
      %1927 = vmatpush1.bf16.msra.mxu0 %v1907
      %1928 = vmatprep.subr.bf16.mxu0 0
      %1929 = vmatpush1.bf16.msra.mxu0 %v1908
      %1930 = vmatprep.subr.bf16.mxu0 0
      %1931 = vmatpush1.bf16.msra.mxu0 %v1909
      %1932 = vmatprep.subr.bf16.mxu0 0
      %1933 = vmatpush1.bf16.msra.mxu0 %v1910
      %1934 = vmatprep.subr.bf16.mxu0 0
      %1935 = vmatpush1.bf16.msra.mxu0 %v1911
      %1936 = vmatprep.subr.bf16.mxu0 0
      %1937 = vmatpush1.bf16.msra.mxu0 0
      %1938 = vmatprep.subr.bf16.mxu0 0
      %1939 = vmatpush1.bf16.msra.mxu0 0
      %1940 = vmatprep.subr.bf16.mxu0 0
      %1941 = vmatpush1.bf16.msra.mxu0 0
      %1942 = vmatprep.subr.bf16.mxu0 0
      %1943 = vmatpush1.bf16.msra.mxu0 0
      %1944 = vmatprep.subr.bf16.mxu0 0
      %1945 = vmatpush1.bf16.msra.mxu0 0
      %1946 = vmatprep.subr.bf16.mxu0 0
      %1947 = vmatpush1.bf16.msra.mxu0 0
      %1948 = vmatprep.subr.bf16.mxu0 0
      %1949 = vmatpush1.bf16.msra.mxu0 0
      %1950 = vmatprep.subr.bf16.mxu0 0
      %1951 = vmatpush1.bf16.msra.mxu0 0
      %1952 = vmatprep.mubr.bf16.mxu0 0
      %1953 = vmatmul.mubr.bf16.gmra.mrb[0].mxu0 %v1864
      %v1954 = vpop.f32.mrb[0].mxu0
      %v1955 = vadd.f32 0.0, %v1954
      %v1956 = vpop.f32.mrb[0].mxu0
      %v1957 = vpop.f32.mrb[0].mxu0
      %v1958 = vadd.f32 0.0, %v1957
      %v1959 = vpop.f32.mrb[0].mxu0
      %1960 = vmatprep.mubr.bf16.mxu0 0
      %1961 = vmatmul.mubr.bf16.gmra.mrb[0].mxu0 %v1865
      %v1962 = vpop.f32.mrb[0].mxu0
      %v1963 = vadd.f32 0.0, %v1962
      %v1964 = vpop.f32.mrb[0].mxu0
      %v1965 = vpop.f32.mrb[0].mxu0
      %v1966 = vadd.f32 0.0, %v1965
      %v1967 = vpop.f32.mrb[0].mxu0
      %1968 = vmatprep.mubr.bf16.mxu0 0
      %1969 = vmatmul.mubr.bf16.gmra.mrb[0].mxu0 %v1866
      %v1970 = vpop.f32.mrb[0].mxu0
      %v1971 = vadd.f32 0.0, %v1970
      %v1972 = vpop.f32.mrb[0].mxu0
      %v1973 = vpop.f32.mrb[0].mxu0
      %v1974 = vadd.f32 0.0, %v1973
      %v1975 = vpop.f32.mrb[0].mxu0
      %1976 = vmatprep.mubr.bf16.mxu0 0
      %1977 = vmatmul.mubr.bf16.gmra.mrb[0].mxu0 %v1867
      %v1978 = vpop.f32.mrb[0].mxu0
      %v1979 = vadd.f32 0.0, %v1978
      %v1980 = vpop.f32.mrb[0].mxu0
      %v1981 = vpop.f32.mrb[0].mxu0
      %v1982 = vadd.f32 0.0, %v1981
      %v1983 = vpop.f32.mrb[0].mxu0
      %1984 = vdwg.mxu0
      %v1985 = vadd.f32 %v1776, %v1777
      %v1986 = vadd.f32 %v1985, %v1778
      %v1987 = vadd.f32 %v1986, %v1779
      %v1988 = vadd.f32 %v1987, %v1780
      %v1989 = vadd.f32 %v1988, %v1781
      %v1990 = vadd.f32 %v1989, %v1782
      %v1991 = vadd.f32 %v1990, %v1783
      %v1992 = vrot.slane %v1991, 4
      %v1993 = vadd.f32 %v1991, %v1992
      %v1994 = vrot.slane %v1993, 2
      %v1995 = vadd.f32 %v1993, %v1994
      %v1996 = vrot.slane %v1995, 1
      %v1997 = vadd.f32 %v1995, %v1996
      %v1998 = vmul.f32 %v1776, %v1776
      %v1999 = vmul.f32 %v1777, %v1777
      %v2000 = vmul.f32 %v1778, %v1778
      %v2001 = vmul.f32 %v1779, %v1779
      %v2002 = vmul.f32 %v1780, %v1780
      %v2003 = vmul.f32 %v1781, %v1781
      %v2004 = vmul.f32 %v1782, %v1782
      %v2005 = vmul.f32 %v1783, %v1783
      %v2006 = vadd.f32 %v1998, %v1999
      %v2007 = vadd.f32 %v2006, %v2000
      %v2008 = vadd.f32 %v2007, %v2001
      %v2009 = vadd.f32 %v2008, %v2002
      %v2010 = vadd.f32 %v2009, %v2003
      %v2011 = vadd.f32 %v2010, %v2004
      %v2012 = vadd.f32 %v2011, %v2005
      %v2013 = vrot.slane %v2012, 4
      %v2014 = vadd.f32 %v2012, %v2013
      %v2015 = vrot.slane %v2014, 2
      %v2016 = vadd.f32 %v2014, %v2015
      %v2017 = vrot.slane %v2016, 1
      %v2018 = vadd.f32 %v2016, %v2017
      %v2019 = vadd.f32 %v1955, %v1958
      %v2020 = vadd.f32 %v2019, %v1963
      %v2021 = vadd.f32 %v2020, %v1966
      %v2022 = vadd.f32 %v2021, %v1971
      %v2023 = vadd.f32 %v2022, %v1974
      %v2024 = vadd.f32 %v2023, %v1979
      %v2025 = vadd.f32 %v2024, %v1982
      %v2026 = vrot.slane %v2025, 4
      %v2027 = vadd.f32 %v2025, %v2026
      %v2028 = vrot.slane %v2027, 2
      %v2029 = vadd.f32 %v2027, %v2028
      %v2030 = vrot.slane %v2029, 1
      %v2031 = vadd.f32 %v2029, %v2030
      %v2032 = vmul.f32 %v1955, %v1955
      %v2033 = vmul.f32 %v1958, %v1958
      %v2034 = vmul.f32 %v1963, %v1963
      %v2035 = vmul.f32 %v1966, %v1966
      %v2036 = vmul.f32 %v1971, %v1971
      %v2037 = vmul.f32 %v1974, %v1974
      %v2038 = vmul.f32 %v1979, %v1979
      %v2039 = vmul.f32 %v1982, %v1982
      %v2040 = vadd.f32 %v2032, %v2033
      %v2041 = vadd.f32 %v2040, %v2034
      %v2042 = vadd.f32 %v2041, %v2035
      %v2043 = vadd.f32 %v2042, %v2036
      %v2044 = vadd.f32 %v2043, %v2037
      %v2045 = vadd.f32 %v2044, %v2038
      %v2046 = vadd.f32 %v2045, %v2039
      %v2047 = vrot.slane %v2046, 4
      %v2048 = vadd.f32 %v2046, %v2047
      %v2049 = vrot.slane %v2048, 2
      %v2050 = vadd.f32 %v2048, %v2049
      %v2051 = vrot.slane %v2050, 1
      %v2052 = vadd.f32 %v2050, %v2051
      %vm2053 = vcmask 1040384
      %v2054 = vsel %vm2053, %v1997, %v2018
      %vm2055 = vcmask 1041408
      %v2056 = vsel %vm2055, %v2054, %v2031
      %vm2057 = vcmask 1042432
      %v2058 = vsel %vm2057, %v2056, %v2052
      %vm2059 = vcmask 1043456
      %v2060 = vsel %vm2059, %v2058, 0.0
      %v2061 = vld [vmem:[%s5] sm:$0xff]
      %v2062 = vadd.f32 %v2061, %v2060
      %2063 = vst [vmem:[%s5] sm:$0xff] %v2062
      %p2064 = scmp.lt.s32.totalorder %s17, 1
      %s2065 = scalar_select %p2064, %s17, 1
      %s2066 = smul.addr %s2065, 8
      %s2067 = smul.addr %s2066, 4
      %s2068 = scalar_lea.vmem %s4, %s2067
      // Predicated region
      $region41: #{restnet_down_block.6} parent=35 // pred_check
        %p2069 = pneg %p129
      $region42: #{restnet_down_block.6} parent=35 // pred_check_branch
        %2071 = sbr.rel (%p2069) target = $region44
      $region43: #{restnet_down_block.6} parent=35 // pred_region
        _
      $region44: #{restnet_down_block.6} parent=35 // pred_fallthru
        _
      // Predicated region
      $region45: #{restnet_down_block.6} parent=35 // pred_check
        %p2072 = pneg %p150
      $region46: #{restnet_down_block.6} parent=35 // pred_check_branch
        %2074 = sbr.rel (%p2072) target = $region48
      $region47: #{restnet_down_block.6} parent=35 // pred_region
        _
      $region48: #{restnet_down_block.6} parent=35 // pred_fallthru
        _
      // Predicated region
      $region49: #{restnet_down_block.6} parent=35 // pred_check
        %p2075 = pneg %p150
      $region50: #{restnet_down_block.6} parent=35 // pred_check_branch
        %2077 = sbr.rel (%p2075) target = $region52
      $region51: #{restnet_down_block.6} parent=35 // pred_region
        _
      $region52: #{restnet_down_block.6} parent=35 // pred_fallthru
        _
    $region36: #{restnet_down_block.6} parent=5 // pred_fallthru
      _
    %p2078 = scmp.le.s32.totalorder 2, %s12
    // Predicated region
    $region53: #{restnet_down_block.6} parent=5 // pred_check
      %p2079 = pneg %p2078
    $region54: #{restnet_down_block.6} parent=5 // pred_check_branch
      %2081 = sbr.rel (%p2079) target = $region56
    $region55: #{restnet_down_block.6} parent=5 // pred_region
      %s2082 = ssub.s32 %s12, 2
      // Predicated region
      $region57: #{restnet_down_block.6} parent=55 // pred_check
        %p2083 = pneg %p135
      $region58: #{restnet_down_block.6} parent=55 // pred_check_branch
        %2085 = sbr.rel (%p2083) target = $region60
      $region59: #{restnet_down_block.6} parent=55 // pred_region
        %p2086 = scmp.lt.s32.totalorder %s18, 1
        %s2087 = scalar_select %p2086, %s18, 1
        %s2088 = smul.addr %s2087, 8
        %s2089 = smul.addr %s2088, 4
        %s2090 = scalar_lea.vmem %s4, %s2089
      $region60: #{restnet_down_block.6} parent=55 // pred_fallthru
        _
    $region56: #{restnet_down_block.6} parent=5 // pred_fallthru
      _
  $region6: #{restnet_down_block.6} parent=0 // loop_footer
    %s16 = sadd.s32 1, %s12
  $region7: #{restnet_down_block.6} parent=0 // loop_footer_branch
    %11 = sbr.rel target = $region3
  $region8: #{restnet_down_block.6} parent=0 // loop_exit
    _

</llo_original>
